<compile_context>
chip_gen: v6e
topology: v6e:2x2x1
jax: 0.10.0
libtpu: 0.0.40
codegen_flags: <defaults>
</compile_context>

<pallas_src>
import functools

import jax
import jax.numpy as jnp
from jax.experimental import pallas as pl
from jax.experimental.pallas import tpu as pltpu


# --------------------------- layout heuristics ------------------------------
def _pick_row_group(H, W):
    """How many image rows to fold into the lane axis (must divide H)."""
    best = 1
    for rg in range(1, H + 1):
        if H % rg:
            continue
        if (rg * W) % 128 == 0:
            return rg                    # smallest fold giving dense 128-lane tiles
        if rg * W <= 256:
            best = rg
    return best


def _pick_batch(N, per_sample_bytes, budget=6 * 1024 * 1024):
    """How many samples to stack into one grid step (must divide N)."""
    live = 16 * per_sample_bytes         # ~16 f32 volumes live at peak
    nb = max(1, min(N, budget // max(live, 1)))
    while nb > 1 and N % nb:
        nb -= 1
    return nb


def _bias_map(bA, wB, bB, H, W):
    """Constant (H, W) map added by the (1,3,3) conv when fed the per-f bias
    of the (3,1,1) conv (zero-pad boundary corrected), plus its own bias."""
    f32 = jnp.float32
    k2d = jnp.einsum('f,fij->ij', bA.astype(f32).reshape(-1),
                     wB.astype(f32).reshape(-1, 3, 3))
    ones = jnp.ones((1, 1, H, W), f32)
    m = jax.lax.conv_general_dilated(
        ones, k2d.reshape(1, 1, 3, 3), window_strides=(1, 1),
        padding=[(1, 1), (1, 1)],
        dimension_numbers=('NCHW', 'OIHW', 'NCHW'),
        precision=jax.lax.Precision.HIGHEST)
    return m[0, 0] + bB.astype(f32).reshape(())      # (H, W)


# --------------------------------- kernel -----------------------------------
def scrb_kernel(x_ref, bmap_ref, wA1, wB1, wA2, wB2, scal, out_ref,
                *, W, RG, HG, C, F):
    x = x_ref[...].astype(jnp.float32)   # (SB, L) slab: SB = Nb*C*HG, L = RG*W
    SB, L = x.shape
    PER = C * HG                         # sublanes per sample

    lane = jax.lax.broadcasted_iota(jnp.int32, (SB, L), 1)
    sub = jax.lax.broadcasted_iota(jnp.int32, (SB, L), 0)
    m_w0 = (lane % W) == 0                               # w == 0 columns
    m_wL = (lane % W) == W - 1                           # w == W-1 columns
    m_h0 = ((sub % HG) == 0) & (lane < W)                # h == 0 rows
    m_hL = ((sub % HG) == HG - 1) & (lane >= L - W)      # h == H-1 rows
    m_c0 = (sub % PER) < HG                              # channel 0
    m_cL = (sub % PER) >= PER - HG                       # channel C-1

    def shift_lanes(a, k):               # result[:, l] = a[:, l-k], zero fill
        if k > 0:
            return jnp.concatenate(
                [jnp.zeros((SB, k), jnp.float32), a[:, :L - k]], axis=1)
        if k < 0:
            return jnp.concatenate(
                [a[:, -k:], jnp.zeros((SB, -k), jnp.float32)], axis=1)
        return a

    def shift_subs(a, k):                # result[s, :] = a[s-k, :], zero fill
        if k > 0:
            return jnp.concatenate(
                [jnp.zeros((k, L), jnp.float32), a[:SB - k, :]], axis=0)
        if k < 0:
            return jnp.concatenate(
                [a[-k:, :], jnp.zeros((-k, L), jnp.float32)], axis=0)
        return a

    # ---- zero-padded neighbour taps on the folded slab ----
    def sw_m(a):                         # a[.., w-1]
        return jnp.where(m_w0, 0.0, shift_lanes(a, 1))

    def sw_p(a):                         # a[.., w+1]
        return jnp.where(m_wL, 0.0, shift_lanes(a, -1))

    def sh_m(a):                         # a[.., h-1, :]
        if RG == 1:                      # rows not folded: pure sublane shift
            return jnp.where(m_h0, 0.0, shift_subs(a, 1))
        part = shift_lanes(a, W)         # same-sublane part (zero where h-1 wraps)
        if HG == 1:                      # whole channel sits in one sublane row
            return part
        wrap = jnp.where(m_h0, 0.0, shift_lanes(shift_subs(a, 1), W - L))
        return part + wrap

    def sh_p(a):                         # a[.., h+1, :]
        if RG == 1:
            return jnp.where(m_hL, 0.0, shift_subs(a, -1))
        part = shift_lanes(a, -W)
        if HG == 1:
            return part
        wrap = jnp.where(m_hL, 0.0, shift_lanes(shift_subs(a, -1), L - W))
        return part + wrap

    def sc_m(a):                         # a[c-1, ..]  (depth / orig channel axis)
        return jnp.where(m_c0, 0.0, shift_subs(a, HG))

    def sc_p(a):                         # a[c+1, ..]
        return jnp.where(m_cL, 0.0, shift_subs(a, -HG))

    # ---- fused p3d block: Conv3d(cin,F,(3,1,1)) -> Conv3d(F,1,(1,3,3)) -> ReLU
    def p3d_block(taps, wA_ref, wB_ref, bmap):
        nt = len(taps)
        acc_t = acc_m = acc_b = None
        for f in range(F):
            mid = wA_ref[f * nt] * taps[0]
            for k in range(1, nt):
                mid = mid + wA_ref[f * nt + k] * taps[k]
            lft = sw_m(mid)
            rgt = sw_p(mid)
            b9 = f * 9
            ct = wB_ref[b9 + 0] * lft + wB_ref[b9 + 1] * mid + wB_ref[b9 + 2] * rgt
            cm = wB_ref[b9 + 3] * lft + wB_ref[b9 + 4] * mid + wB_ref[b9 + 5] * rgt
            cb = wB_ref[b9 + 6] * lft + wB_ref[b9 + 7] * mid + wB_ref[b9 + 8] * rgt
            if acc_t is None:
                acc_t, acc_m, acc_b = ct, cm, cb
            else:
                acc_t, acc_m, acc_b = acc_t + ct, acc_m + cm, acc_b + cb
        # h+-1 combine hoisted out of the F loop; biases folded into bmap.
        pre = acc_m + sh_m(acc_t) + sh_p(acc_b) + bmap
        return jnp.maximum(pre, 0.0)

    x_m, x_p = sc_m(x), sc_p(x)
    x1 = p3d_block([x_m, x, x_p], wA1, wB1, bmap_ref[0])
    x1_m, x1_p = sc_m(x1), sc_p(x1)
    x2 = p3d_block([x_m, x, x_p, x1_m, x1, x1_p], wA2, wB2, bmap_ref[1])

    # c1 (1x1x1 conv over [x, x1, x2]) with the +x residual folded into scal[0]
    x3 = scal[0] * x + scal[1] * x1 + scal[2] * x2 + scal[3]
    out_ref[...] = x3.astype(out_ref.dtype)


# -------------------------------- wrapper ------------------------------------
def scrb_forward(x, params):
    N, C, H, W = x.shape
    F = params['wA1'].shape[0]
    f32 = jnp.float32

    RG = _pick_row_group(H, W)           # rows folded into lanes
    HG = H // RG                         # sublanes per channel
    L = RG * W                           # lane width
    PER = C * HG                         # sublanes per sample

    Nb = _pick_batch(N, C * H * W * 4)
    if Nb < N and (Nb * PER) % 8 != 0:   # keep block sublane-aligned or whole array
        Nb = N
    SB = Nb * PER

    # Flat 1-D f32 weights for SMEM (scalar-indexed reads).
    wA1 = params['wA1'].reshape(F * 3).astype(f32)       # f*3 + k
    wB1 = params['wB1'].reshape(F * 9).astype(f32)       # f*9 + i*3 + j
    wA2 = params['wA2'].reshape(F * 6).astype(f32)       # f*6 + cin*3 + k
    wB2 = params['wB2'].reshape(F * 9).astype(f32)
    wc = params['wc'].reshape(3).astype(f32)
    # [wc0+1 (residual folded), wc1, wc2, bc]
    scal = jnp.stack([wc[0] + 1.0, wc[1], wc[2],
                      params['bc'].astype(f32).reshape(())])

    # Precomputed bias maps (bA through the 3x3 conv, plus bB), slab layout.
    bm1 = _bias_map(params['bA1'], params['wB1'], params['bB1'], H, W)
    bm2 = _bias_map(params['bA2'], params['wB2'], params['bB2'], H, W)
    bmaps = jnp.stack([jnp.tile(bm1.reshape(HG, L), (Nb * C, 1)),
                       jnp.tile(bm2.reshape(HG, L), (Nb * C, 1))])   # (2, SB, L)

    # Lane-dense slab: (N, C, H, W) -> (N*C*HG, RG*W), plain row-major reshape.
    x2d = x.reshape(N * PER, L)

    kern = functools.partial(scrb_kernel, W=W, RG=RG, HG=HG, C=C, F=F)
    smem = pl.BlockSpec(memory_space=pltpu.MemorySpace.SMEM)
    out2d = pl.pallas_call(
        kern,
        out_shape=jax.ShapeDtypeStruct((N * PER, L), x.dtype),
        grid=(N // Nb,),
        in_specs=[
            pl.BlockSpec((SB, L), lambda i: (i, 0)),
            pl.BlockSpec((2, SB, L), lambda i: (0, 0, 0)),
            smem, smem, smem, smem, smem,
        ],
        out_specs=pl.BlockSpec((SB, L), lambda i: (i, 0)),
        compiler_params=pltpu.CompilerParams(
            dimension_semantics=("parallel",),
            vmem_limit_bytes=64 * 1024 * 1024),
    )(x2d, bmaps, wA1, wB1, wA2, wB2, scal)
    return out2d.reshape(N, C, H, W)


# ---------------- pure-JAX reference (for correctness check) ----------------
def _conv3d_ref(x, w, b, pad):
    y = jax.lax.conv_general_dilated(
        x, w, window_strides=(1, 1, 1), padding=pad,
        dimension_numbers=('NCDHW', 'OIDHW', 'NCDHW'),
        precision=jax.lax.Precision.HIGHEST)
    return y + b.reshape(1, -1, 1, 1, 1)


def scrb_ref(x, p):
    xu = x[:, None]                                      # (N,1,C,H,W)
    padA = [(1, 1), (0, 0), (0, 0)]
    padB = [(0, 0), (1, 1), (1, 1)]
    t1 = _conv3d_ref(xu, p['wA1'], p['bA1'], padA)
    x1 = jax.nn.relu(_conv3d_ref(t1, p['wB1'], p['bB1'], padB))
    t2 = _conv3d_ref(jnp.concatenate([xu, x1], axis=1), p['wA2'], p['bA2'], padA)
    x2 = jax.nn.relu(_conv3d_ref(t2, p['wB2'], p['bB2'], padB))
    x3 = _conv3d_ref(jnp.concatenate([xu, x1, x2], axis=1),
                     p['wc'], p['bc'], [(0, 0), (0, 0), (0, 0)]) + xu
    return x3[:, 0]


if __name__ == "__main__":
    N, C, H, W, F = 2, 4, 16, 16, 8
    key = jax.random.PRNGKey(0)
    ks = jax.random.split(key, 11)
    x = jax.random.normal(ks[0], (N, C, H, W), jnp.float32)
    params = {
        'wA1': 0.3 * jax.random.normal(ks[1], (F, 1, 3, 1, 1), jnp.float32),
        'bA1': 0.1 * jax.random.normal(ks[2], (F,), jnp.float32),
        'wB1': 0.3 * jax.random.normal(ks[3], (1, F, 1, 3, 3), jnp.float32),
        'bB1': 0.1 * jax.random.normal(ks[4], (1,), jnp.float32),
        'wA2': 0.3 * jax.random.normal(ks[5], (F, 2, 3, 1, 1), jnp.float32),
        'bA2': 0.1 * jax.random.normal(ks[6], (F,), jnp.float32),
        'wB2': 0.3 * jax.random.normal(ks[7], (1, F, 1, 3, 3), jnp.float32),
        'bB2': 0.1 * jax.random.normal(ks[8], (1,), jnp.float32),
        'wc':  0.3 * jax.random.normal(ks[9], (1, 3, 1, 1, 1), jnp.float32),
        'bc':  0.1 * jax.random.normal(ks[10], (1,), jnp.float32),
    }

    out = scrb_forward(x, params)
    jax.block_until_ready(out)

    ref = scrb_ref(x, params)
    err = float(jnp.max(jnp.abs(out - ref)))
    assert out.shape == x.shape, (out.shape, x.shape)
    assert err < 2e-3, f"max abs err {err}"
    print("KERNEL_OK")
</pallas_src>

<mosaic_0001>
module attributes {stable_mosaic.version = 11 : i64} {
  func.func @scrb_kernel(%arg0: i32, %arg1: memref<16x128xf32, #tpu.memory_space<vmem>>, %arg2: memref<2x16x128xf32, #tpu.memory_space<vmem>>, %arg3: memref<24xf32, #tpu.memory_space<smem>>, %arg4: memref<72xf32, #tpu.memory_space<smem>>, %arg5: memref<48xf32, #tpu.memory_space<smem>>, %arg6: memref<72xf32, #tpu.memory_space<smem>>, %arg7: memref<4xf32, #tpu.memory_space<smem>>, %arg8: memref<16x128xf32, #tpu.memory_space<vmem>>) attributes {dimension_semantics = [#tpu.dimension_semantics<parallel>], iteration_bounds = array<i64: 1>, scalar_prefetch = 0 : i64, scratch_operands = 0 : i64, tpu.core_type = #tpu.core_type<tc>, window_params = [{transform_indices = @transform_0, window_bounds = array<i64: 16, 128>}, {pipeline_mode = #tpu.pipeline_mode<synchronous>, transform_indices = @transform_1, window_bounds = array<i64: 2, 16, 128>}, {transform_indices = @transform_2, window_bounds = array<i64: 24>}, {transform_indices = @transform_3, window_bounds = array<i64: 72>}, {transform_indices = @transform_4, window_bounds = array<i64: 48>}, {transform_indices = @transform_5, window_bounds = array<i64: 72>}, {transform_indices = @transform_6, window_bounds = array<i64: 4>}, {transform_indices = @transform_7, window_bounds = array<i64: 16, 128>}]} {
    %c0 = arith.constant 0 : index
    %c0_0 = arith.constant 0 : index
    %0 = vector.load %arg1[%c0, %c0_0] : memref<16x128xf32, #tpu.memory_space<vmem>>, vector<16x128xf32>
    %1 = tpu.iota {dimensions = array<i32: 1>} : vector<16x128xi32>
    %2 = tpu.iota {dimensions = array<i32: 0>} : vector<16x128xi32>
    %c16_i32 = arith.constant 16 : i32
    %c0_i32 = arith.constant 0 : i32
    %3 = arith.cmpi eq, %c16_i32, %c0_i32 : i32
    %c1_i32 = arith.constant 1 : i32
    %4 = arith.select %3, %c1_i32, %c16_i32 : i32
    %5 = vector.broadcast %4 : i32 to vector<16x128xi32>
    %6 = arith.remsi %1, %5 : vector<16x128xi32>
    %c0_i32_1 = arith.constant 0 : i32
    %7 = vector.broadcast %c0_i32_1 : i32 to vector<16x128xi32>
    %8 = arith.cmpi ne, %6, %7 : vector<16x128xi32>
    %c0_i32_2 = arith.constant 0 : i32
    %9 = vector.broadcast %c0_i32_2 : i32 to vector<16x128xi32>
    %10 = arith.cmpi slt, %6, %9 : vector<16x128xi32>
    %c0_i32_3 = arith.constant 0 : i32
    %11 = arith.cmpi slt, %4, %c0_i32_3 : i32
    %12 = vector.broadcast %11 : i1 to vector<16x128xi1>
    %13 = vector.broadcast %12 : vector<16x128xi1> to vector<16x128xi1>
    %14 = arith.xori %10, %13 : vector<16x128xi1>
    %15 = arith.andi %14, %8 : vector<16x128xi1>
    %16 = vector.broadcast %4 : i32 to vector<16x128xi32>
    %17 = arith.addi %6, %16 : vector<16x128xi32>
    %18 = arith.select %15, %17, %6 : vector<16x128xi1>, vector<16x128xi32>
    %c0_i32_4 = arith.constant 0 : i32
    %19 = vector.broadcast %c0_i32_4 : i32 to vector<16x128xi32>
    %20 = arith.cmpi eq, %18, %19 : vector<16x128xi32>
    %c16_i32_5 = arith.constant 16 : i32
    %c0_i32_6 = arith.constant 0 : i32
    %21 = arith.cmpi eq, %c16_i32_5, %c0_i32_6 : i32
    %c1_i32_7 = arith.constant 1 : i32
    %22 = arith.select %21, %c1_i32_7, %c16_i32_5 : i32
    %23 = vector.broadcast %22 : i32 to vector<16x128xi32>
    %24 = arith.remsi %1, %23 : vector<16x128xi32>
    %c0_i32_8 = arith.constant 0 : i32
    %25 = vector.broadcast %c0_i32_8 : i32 to vector<16x128xi32>
    %26 = arith.cmpi ne, %24, %25 : vector<16x128xi32>
    %c0_i32_9 = arith.constant 0 : i32
    %27 = vector.broadcast %c0_i32_9 : i32 to vector<16x128xi32>
    %28 = arith.cmpi slt, %24, %27 : vector<16x128xi32>
    %c0_i32_10 = arith.constant 0 : i32
    %29 = arith.cmpi slt, %22, %c0_i32_10 : i32
    %30 = vector.broadcast %29 : i1 to vector<16x128xi1>
    %31 = vector.broadcast %30 : vector<16x128xi1> to vector<16x128xi1>
    %32 = arith.xori %28, %31 : vector<16x128xi1>
    %33 = arith.andi %32, %26 : vector<16x128xi1>
    %34 = vector.broadcast %22 : i32 to vector<16x128xi32>
    %35 = arith.addi %24, %34 : vector<16x128xi32>
    %36 = arith.select %33, %35, %24 : vector<16x128xi1>, vector<16x128xi32>
    %c15_i32 = arith.constant 15 : i32
    %37 = vector.broadcast %c15_i32 : i32 to vector<16x128xi32>
    %38 = arith.cmpi eq, %36, %37 : vector<16x128xi32>
    %c2_i32 = arith.constant 2 : i32
    %c0_i32_11 = arith.constant 0 : i32
    %39 = arith.cmpi eq, %c2_i32, %c0_i32_11 : i32
    %c1_i32_12 = arith.constant 1 : i32
    %40 = arith.select %39, %c1_i32_12, %c2_i32 : i32
    %41 = vector.broadcast %40 : i32 to vector<16x128xi32>
    %42 = arith.remsi %2, %41 : vector<16x128xi32>
    %c0_i32_13 = arith.constant 0 : i32
    %43 = vector.broadcast %c0_i32_13 : i32 to vector<16x128xi32>
    %44 = arith.cmpi ne, %42, %43 : vector<16x128xi32>
    %c0_i32_14 = arith.constant 0 : i32
    %45 = vector.broadcast %c0_i32_14 : i32 to vector<16x128xi32>
    %46 = arith.cmpi slt, %42, %45 : vector<16x128xi32>
    %c0_i32_15 = arith.constant 0 : i32
    %47 = arith.cmpi slt, %40, %c0_i32_15 : i32
    %48 = vector.broadcast %47 : i1 to vector<16x128xi1>
    %49 = vector.broadcast %48 : vector<16x128xi1> to vector<16x128xi1>
    %50 = arith.xori %46, %49 : vector<16x128xi1>
    %51 = arith.andi %50, %44 : vector<16x128xi1>
    %52 = vector.broadcast %40 : i32 to vector<16x128xi32>
    %53 = arith.addi %42, %52 : vector<16x128xi32>
    %54 = arith.select %51, %53, %42 : vector<16x128xi1>, vector<16x128xi32>
    %c0_i32_16 = arith.constant 0 : i32
    %55 = vector.broadcast %c0_i32_16 : i32 to vector<16x128xi32>
    %56 = arith.cmpi eq, %54, %55 : vector<16x128xi32>
    %c16_i32_17 = arith.constant 16 : i32
    %57 = vector.broadcast %c16_i32_17 : i32 to vector<16x128xi32>
    %58 = arith.cmpi slt, %1, %57 : vector<16x128xi32>
    %59 = arith.andi %56, %58 : vector<16x128xi1>
    %c2_i32_18 = arith.constant 2 : i32
    %c0_i32_19 = arith.constant 0 : i32
    %60 = arith.cmpi eq, %c2_i32_18, %c0_i32_19 : i32
    %c1_i32_20 = arith.constant 1 : i32
    %61 = arith.select %60, %c1_i32_20, %c2_i32_18 : i32
    %62 = vector.broadcast %61 : i32 to vector<16x128xi32>
    %63 = arith.remsi %2, %62 : vector<16x128xi32>
    %c0_i32_21 = arith.constant 0 : i32
    %64 = vector.broadcast %c0_i32_21 : i32 to vector<16x128xi32>
    %65 = arith.cmpi ne, %63, %64 : vector<16x128xi32>
    %c0_i32_22 = arith.constant 0 : i32
    %66 = vector.broadcast %c0_i32_22 : i32 to vector<16x128xi32>
    %67 = arith.cmpi slt, %63, %66 : vector<16x128xi32>
    %c0_i32_23 = arith.constant 0 : i32
    %68 = arith.cmpi slt, %61, %c0_i32_23 : i32
    %69 = vector.broadcast %68 : i1 to vector<16x128xi1>
    %70 = vector.broadcast %69 : vector<16x128xi1> to vector<16x128xi1>
    %71 = arith.xori %67, %70 : vector<16x128xi1>
    %72 = arith.andi %71, %65 : vector<16x128xi1>
    %73 = vector.broadcast %61 : i32 to vector<16x128xi32>
    %74 = arith.addi %63, %73 : vector<16x128xi32>
    %75 = arith.select %72, %74, %63 : vector<16x128xi1>, vector<16x128xi32>
    %c1_i32_24 = arith.constant 1 : i32
    %76 = vector.broadcast %c1_i32_24 : i32 to vector<16x128xi32>
    %77 = arith.cmpi eq, %75, %76 : vector<16x128xi32>
    %c112_i32 = arith.constant 112 : i32
    %78 = vector.broadcast %c112_i32 : i32 to vector<16x128xi32>
    %79 = arith.cmpi sge, %1, %78 : vector<16x128xi32>
    %80 = arith.andi %77, %79 : vector<16x128xi1>
    %c8_i32 = arith.constant 8 : i32
    %c0_i32_25 = arith.constant 0 : i32
    %81 = arith.cmpi eq, %c8_i32, %c0_i32_25 : i32
    %c1_i32_26 = arith.constant 1 : i32
    %82 = arith.select %81, %c1_i32_26, %c8_i32 : i32
    %83 = vector.broadcast %82 : i32 to vector<16x128xi32>
    %84 = arith.remsi %2, %83 : vector<16x128xi32>
    %c0_i32_27 = arith.constant 0 : i32
    %85 = vector.broadcast %c0_i32_27 : i32 to vector<16x128xi32>
    %86 = arith.cmpi ne, %84, %85 : vector<16x128xi32>
    %c0_i32_28 = arith.constant 0 : i32
    %87 = vector.broadcast %c0_i32_28 : i32 to vector<16x128xi32>
    %88 = arith.cmpi slt, %84, %87 : vector<16x128xi32>
    %c0_i32_29 = arith.constant 0 : i32
    %89 = arith.cmpi slt, %82, %c0_i32_29 : i32
    %90 = vector.broadcast %89 : i1 to vector<16x128xi1>
    %91 = vector.broadcast %90 : vector<16x128xi1> to vector<16x128xi1>
    %92 = arith.xori %88, %91 : vector<16x128xi1>
    %93 = arith.andi %92, %86 : vector<16x128xi1>
    %94 = vector.broadcast %82 : i32 to vector<16x128xi32>
    %95 = arith.addi %84, %94 : vector<16x128xi32>
    %96 = arith.select %93, %95, %84 : vector<16x128xi1>, vector<16x128xi32>
    %c2_i32_30 = arith.constant 2 : i32
    %97 = vector.broadcast %c2_i32_30 : i32 to vector<16x128xi32>
    %98 = arith.cmpi slt, %96, %97 : vector<16x128xi32>
    %c8_i32_31 = arith.constant 8 : i32
    %c0_i32_32 = arith.constant 0 : i32
    %99 = arith.cmpi eq, %c8_i32_31, %c0_i32_32 : i32
    %c1_i32_33 = arith.constant 1 : i32
    %100 = arith.select %99, %c1_i32_33, %c8_i32_31 : i32
    %101 = vector.broadcast %100 : i32 to vector<16x128xi32>
    %102 = arith.remsi %2, %101 : vector<16x128xi32>
    %c0_i32_34 = arith.constant 0 : i32
    %103 = vector.broadcast %c0_i32_34 : i32 to vector<16x128xi32>
    %104 = arith.cmpi ne, %102, %103 : vector<16x128xi32>
    %c0_i32_35 = arith.constant 0 : i32
    %105 = vector.broadcast %c0_i32_35 : i32 to vector<16x128xi32>
    %106 = arith.cmpi slt, %102, %105 : vector<16x128xi32>
    %c0_i32_36 = arith.constant 0 : i32
    %107 = arith.cmpi slt, %100, %c0_i32_36 : i32
    %108 = vector.broadcast %107 : i1 to vector<16x128xi1>
    %109 = vector.broadcast %108 : vector<16x128xi1> to vector<16x128xi1>
    %110 = arith.xori %106, %109 : vector<16x128xi1>
    %111 = arith.andi %110, %104 : vector<16x128xi1>
    %112 = vector.broadcast %100 : i32 to vector<16x128xi32>
    %113 = arith.addi %102, %112 : vector<16x128xi32>
    %114 = arith.select %111, %113, %102 : vector<16x128xi1>, vector<16x128xi32>
    %c6_i32 = arith.constant 6 : i32
    %115 = vector.broadcast %c6_i32 : i32 to vector<16x128xi32>
    %116 = arith.cmpi sge, %114, %115 : vector<16x128xi32>
    %cst = arith.constant 0.000000e+00 : f32
    %117 = vector.broadcast %cst : f32 to vector<2x128xf32>
    %118 = vector.extract_strided_slice %0 {offsets = [0, 0], sizes = [14, 128], strides = [1, 1]} : vector<16x128xf32> to vector<14x128xf32>
    %119 = tpu.concatenate %117, %118 in 0 : vector<2x128xf32>, vector<14x128xf32> -> vector<16x128xf32>
    %cst_37 = arith.constant 0.000000e+00 : f32
    %120 = vector.broadcast %cst_37 : f32 to vector<16x128xf32>
    %121 = arith.select %98, %120, %119 : vector<16x128xi1>, vector<16x128xf32>
    %122 = vector.extract_strided_slice %0 {offsets = [2, 0], sizes = [14, 128], strides = [1, 1]} : vector<16x128xf32> to vector<14x128xf32>
    %cst_38 = arith.constant 0.000000e+00 : f32
    %123 = vector.broadcast %cst_38 : f32 to vector<2x128xf32>
    %124 = tpu.concatenate %122, %123 in 0 : vector<14x128xf32>, vector<2x128xf32> -> vector<16x128xf32>
    %cst_39 = arith.constant 0.000000e+00 : f32
    %125 = vector.broadcast %cst_39 : f32 to vector<16x128xf32>
    %126 = arith.select %116, %125, %124 : vector<16x128xi1>, vector<16x128xf32>
    %c0_40 = arith.constant 0 : index
    %c0_41 = arith.constant 0 : index
    %c0_42 = arith.constant 0 : index
    %127 = vector.load %arg2[%c0_40, %c0_41, %c0_42] : memref<2x16x128xf32, #tpu.memory_space<vmem>>, vector<1x16x128xf32>
    %128 = vector.shape_cast %127 : vector<1x16x128xf32> to vector<16x128xf32>
    %c0_43 = arith.constant 0 : index
    %129 = memref.load %arg3[%c0_43] : memref<24xf32, #tpu.memory_space<smem>>
    %130 = vector.broadcast %129 : f32 to vector<16x128xf32>
    %131 = arith.mulf %130, %121 : vector<16x128xf32>
    %c1 = arith.constant 1 : index
    %132 = memref.load %arg3[%c1] : memref<24xf32, #tpu.memory_space<smem>>
    %133 = vector.broadcast %132 : f32 to vector<16x128xf32>
    %134 = arith.mulf %133, %0 : vector<16x128xf32>
    %135 = arith.addf %131, %134 : vector<16x128xf32>
    %c2 = arith.constant 2 : index
    %136 = memref.load %arg3[%c2] : memref<24xf32, #tpu.memory_space<smem>>
    %137 = vector.broadcast %136 : f32 to vector<16x128xf32>
    %138 = arith.mulf %137, %126 : vector<16x128xf32>
    %139 = arith.addf %135, %138 : vector<16x128xf32>
    %cst_44 = arith.constant 0.000000e+00 : f32
    %140 = vector.broadcast %cst_44 : f32 to vector<16x1xf32>
    %141 = vector.extract_strided_slice %139 {offsets = [0, 0], sizes = [16, 127], strides = [1, 1]} : vector<16x128xf32> to vector<16x127xf32>
    %142 = tpu.concatenate %140, %141 in 1 : vector<16x1xf32>, vector<16x127xf32> -> vector<16x128xf32>
    %cst_45 = arith.constant 0.000000e+00 : f32
    %143 = vector.broadcast %cst_45 : f32 to vector<16x128xf32>
    %144 = arith.select %20, %143, %142 : vector<16x128xi1>, vector<16x128xf32>
    %145 = vector.extract_strided_slice %139 {offsets = [0, 1], sizes = [16, 127], strides = [1, 1]} : vector<16x128xf32> to vector<16x127xf32>
    %cst_46 = arith.constant 0.000000e+00 : f32
    %146 = vector.broadcast %cst_46 : f32 to vector<16x1xf32>
    %147 = tpu.concatenate %145, %146 in 1 : vector<16x127xf32>, vector<16x1xf32> -> vector<16x128xf32>
    %cst_47 = arith.constant 0.000000e+00 : f32
    %148 = vector.broadcast %cst_47 : f32 to vector<16x128xf32>
    %149 = arith.select %38, %148, %147 : vector<16x128xi1>, vector<16x128xf32>
    %c0_48 = arith.constant 0 : index
    %150 = memref.load %arg4[%c0_48] : memref<72xf32, #tpu.memory_space<smem>>
    %151 = vector.broadcast %150 : f32 to vector<16x128xf32>
    %152 = arith.mulf %151, %144 : vector<16x128xf32>
    %c1_49 = arith.constant 1 : index
    %153 = memref.load %arg4[%c1_49] : memref<72xf32, #tpu.memory_space<smem>>
    %154 = vector.broadcast %153 : f32 to vector<16x128xf32>
    %155 = arith.mulf %154, %139 : vector<16x128xf32>
    %156 = arith.addf %152, %155 : vector<16x128xf32>
    %c2_50 = arith.constant 2 : index
    %157 = memref.load %arg4[%c2_50] : memref<72xf32, #tpu.memory_space<smem>>
    %158 = vector.broadcast %157 : f32 to vector<16x128xf32>
    %159 = arith.mulf %158, %149 : vector<16x128xf32>
    %160 = arith.addf %156, %159 : vector<16x128xf32>
    %c3 = arith.constant 3 : index
    %161 = memref.load %arg4[%c3] : memref<72xf32, #tpu.memory_space<smem>>
    %162 = vector.broadcast %161 : f32 to vector<16x128xf32>
    %163 = arith.mulf %162, %144 : vector<16x128xf32>
    %c4 = arith.constant 4 : index
    %164 = memref.load %arg4[%c4] : memref<72xf32, #tpu.memory_space<smem>>
    %165 = vector.broadcast %164 : f32 to vector<16x128xf32>
    %166 = arith.mulf %165, %139 : vector<16x128xf32>
    %167 = arith.addf %163, %166 : vector<16x128xf32>
    %c5 = arith.constant 5 : index
    %168 = memref.load %arg4[%c5] : memref<72xf32, #tpu.memory_space<smem>>
    %169 = vector.broadcast %168 : f32 to vector<16x128xf32>
    %170 = arith.mulf %169, %149 : vector<16x128xf32>
    %171 = arith.addf %167, %170 : vector<16x128xf32>
    %c6 = arith.constant 6 : index
    %172 = memref.load %arg4[%c6] : memref<72xf32, #tpu.memory_space<smem>>
    %173 = vector.broadcast %172 : f32 to vector<16x128xf32>
    %174 = arith.mulf %173, %144 : vector<16x128xf32>
    %c7 = arith.constant 7 : index
    %175 = memref.load %arg4[%c7] : memref<72xf32, #tpu.memory_space<smem>>
    %176 = vector.broadcast %175 : f32 to vector<16x128xf32>
    %177 = arith.mulf %176, %139 : vector<16x128xf32>
    %178 = arith.addf %174, %177 : vector<16x128xf32>
    %c8 = arith.constant 8 : index
    %179 = memref.load %arg4[%c8] : memref<72xf32, #tpu.memory_space<smem>>
    %180 = vector.broadcast %179 : f32 to vector<16x128xf32>
    %181 = arith.mulf %180, %149 : vector<16x128xf32>
    %182 = arith.addf %178, %181 : vector<16x128xf32>
    %c3_51 = arith.constant 3 : index
    %183 = memref.load %arg3[%c3_51] : memref<24xf32, #tpu.memory_space<smem>>
    %184 = vector.broadcast %183 : f32 to vector<16x128xf32>
    %185 = arith.mulf %184, %121 : vector<16x128xf32>
    %c4_52 = arith.constant 4 : index
    %186 = memref.load %arg3[%c4_52] : memref<24xf32, #tpu.memory_space<smem>>
    %187 = vector.broadcast %186 : f32 to vector<16x128xf32>
    %188 = arith.mulf %187, %0 : vector<16x128xf32>
    %189 = arith.addf %185, %188 : vector<16x128xf32>
    %c5_53 = arith.constant 5 : index
    %190 = memref.load %arg3[%c5_53] : memref<24xf32, #tpu.memory_space<smem>>
    %191 = vector.broadcast %190 : f32 to vector<16x128xf32>
    %192 = arith.mulf %191, %126 : vector<16x128xf32>
    %193 = arith.addf %189, %192 : vector<16x128xf32>
    %cst_54 = arith.constant 0.000000e+00 : f32
    %194 = vector.broadcast %cst_54 : f32 to vector<16x1xf32>
    %195 = vector.extract_strided_slice %193 {offsets = [0, 0], sizes = [16, 127], strides = [1, 1]} : vector<16x128xf32> to vector<16x127xf32>
    %196 = tpu.concatenate %194, %195 in 1 : vector<16x1xf32>, vector<16x127xf32> -> vector<16x128xf32>
    %cst_55 = arith.constant 0.000000e+00 : f32
    %197 = vector.broadcast %cst_55 : f32 to vector<16x128xf32>
    %198 = arith.select %20, %197, %196 : vector<16x128xi1>, vector<16x128xf32>
    %199 = vector.extract_strided_slice %193 {offsets = [0, 1], sizes = [16, 127], strides = [1, 1]} : vector<16x128xf32> to vector<16x127xf32>
    %cst_56 = arith.constant 0.000000e+00 : f32
    %200 = vector.broadcast %cst_56 : f32 to vector<16x1xf32>
    %201 = tpu.concatenate %199, %200 in 1 : vector<16x127xf32>, vector<16x1xf32> -> vector<16x128xf32>
    %cst_57 = arith.constant 0.000000e+00 : f32
    %202 = vector.broadcast %cst_57 : f32 to vector<16x128xf32>
    %203 = arith.select %38, %202, %201 : vector<16x128xi1>, vector<16x128xf32>
    %c9 = arith.constant 9 : index
    %204 = memref.load %arg4[%c9] : memref<72xf32, #tpu.memory_space<smem>>
    %205 = vector.broadcast %204 : f32 to vector<16x128xf32>
    %206 = arith.mulf %205, %198 : vector<16x128xf32>
    %c10 = arith.constant 10 : index
    %207 = memref.load %arg4[%c10] : memref<72xf32, #tpu.memory_space<smem>>
    %208 = vector.broadcast %207 : f32 to vector<16x128xf32>
    %209 = arith.mulf %208, %193 : vector<16x128xf32>
    %210 = arith.addf %206, %209 : vector<16x128xf32>
    %c11 = arith.constant 11 : index
    %211 = memref.load %arg4[%c11] : memref<72xf32, #tpu.memory_space<smem>>
    %212 = vector.broadcast %211 : f32 to vector<16x128xf32>
    %213 = arith.mulf %212, %203 : vector<16x128xf32>
    %214 = arith.addf %210, %213 : vector<16x128xf32>
    %c12 = arith.constant 12 : index
    %215 = memref.load %arg4[%c12] : memref<72xf32, #tpu.memory_space<smem>>
    %216 = vector.broadcast %215 : f32 to vector<16x128xf32>
    %217 = arith.mulf %216, %198 : vector<16x128xf32>
    %c13 = arith.constant 13 : index
    %218 = memref.load %arg4[%c13] : memref<72xf32, #tpu.memory_space<smem>>
    %219 = vector.broadcast %218 : f32 to vector<16x128xf32>
    %220 = arith.mulf %219, %193 : vector<16x128xf32>
    %221 = arith.addf %217, %220 : vector<16x128xf32>
    %c14 = arith.constant 14 : index
    %222 = memref.load %arg4[%c14] : memref<72xf32, #tpu.memory_space<smem>>
    %223 = vector.broadcast %222 : f32 to vector<16x128xf32>
    %224 = arith.mulf %223, %203 : vector<16x128xf32>
    %225 = arith.addf %221, %224 : vector<16x128xf32>
    %c15 = arith.constant 15 : index
    %226 = memref.load %arg4[%c15] : memref<72xf32, #tpu.memory_space<smem>>
    %227 = vector.broadcast %226 : f32 to vector<16x128xf32>
    %228 = arith.mulf %227, %198 : vector<16x128xf32>
    %c16 = arith.constant 16 : index
    %229 = memref.load %arg4[%c16] : memref<72xf32, #tpu.memory_space<smem>>
    %230 = vector.broadcast %229 : f32 to vector<16x128xf32>
    %231 = arith.mulf %230, %193 : vector<16x128xf32>
    %232 = arith.addf %228, %231 : vector<16x128xf32>
    %c17 = arith.constant 17 : index
    %233 = memref.load %arg4[%c17] : memref<72xf32, #tpu.memory_space<smem>>
    %234 = vector.broadcast %233 : f32 to vector<16x128xf32>
    %235 = arith.mulf %234, %203 : vector<16x128xf32>
    %236 = arith.addf %232, %235 : vector<16x128xf32>
    %237 = arith.addf %160, %214 : vector<16x128xf32>
    %238 = arith.addf %171, %225 : vector<16x128xf32>
    %239 = arith.addf %182, %236 : vector<16x128xf32>
    %c6_58 = arith.constant 6 : index
    %240 = memref.load %arg3[%c6_58] : memref<24xf32, #tpu.memory_space<smem>>
    %241 = vector.broadcast %240 : f32 to vector<16x128xf32>
    %242 = arith.mulf %241, %121 : vector<16x128xf32>
    %c7_59 = arith.constant 7 : index
    %243 = memref.load %arg3[%c7_59] : memref<24xf32, #tpu.memory_space<smem>>
    %244 = vector.broadcast %243 : f32 to vector<16x128xf32>
    %245 = arith.mulf %244, %0 : vector<16x128xf32>
    %246 = arith.addf %242, %245 : vector<16x128xf32>
    %c8_60 = arith.constant 8 : index
    %247 = memref.load %arg3[%c8_60] : memref<24xf32, #tpu.memory_space<smem>>
    %248 = vector.broadcast %247 : f32 to vector<16x128xf32>
    %249 = arith.mulf %248, %126 : vector<16x128xf32>
    %250 = arith.addf %246, %249 : vector<16x128xf32>
    %cst_61 = arith.constant 0.000000e+00 : f32
    %251 = vector.broadcast %cst_61 : f32 to vector<16x1xf32>
    %252 = vector.extract_strided_slice %250 {offsets = [0, 0], sizes = [16, 127], strides = [1, 1]} : vector<16x128xf32> to vector<16x127xf32>
    %253 = tpu.concatenate %251, %252 in 1 : vector<16x1xf32>, vector<16x127xf32> -> vector<16x128xf32>
    %cst_62 = arith.constant 0.000000e+00 : f32
    %254 = vector.broadcast %cst_62 : f32 to vector<16x128xf32>
    %255 = arith.select %20, %254, %253 : vector<16x128xi1>, vector<16x128xf32>
    %256 = vector.extract_strided_slice %250 {offsets = [0, 1], sizes = [16, 127], strides = [1, 1]} : vector<16x128xf32> to vector<16x127xf32>
    %cst_63 = arith.constant 0.000000e+00 : f32
    %257 = vector.broadcast %cst_63 : f32 to vector<16x1xf32>
    %258 = tpu.concatenate %256, %257 in 1 : vector<16x127xf32>, vector<16x1xf32> -> vector<16x128xf32>
    %cst_64 = arith.constant 0.000000e+00 : f32
    %259 = vector.broadcast %cst_64 : f32 to vector<16x128xf32>
    %260 = arith.select %38, %259, %258 : vector<16x128xi1>, vector<16x128xf32>
    %c18 = arith.constant 18 : index
    %261 = memref.load %arg4[%c18] : memref<72xf32, #tpu.memory_space<smem>>
    %262 = vector.broadcast %261 : f32 to vector<16x128xf32>
    %263 = arith.mulf %262, %255 : vector<16x128xf32>
    %c19 = arith.constant 19 : index
    %264 = memref.load %arg4[%c19] : memref<72xf32, #tpu.memory_space<smem>>
    %265 = vector.broadcast %264 : f32 to vector<16x128xf32>
    %266 = arith.mulf %265, %250 : vector<16x128xf32>
    %267 = arith.addf %263, %266 : vector<16x128xf32>
    %c20 = arith.constant 20 : index
    %268 = memref.load %arg4[%c20] : memref<72xf32, #tpu.memory_space<smem>>
    %269 = vector.broadcast %268 : f32 to vector<16x128xf32>
    %270 = arith.mulf %269, %260 : vector<16x128xf32>
    %271 = arith.addf %267, %270 : vector<16x128xf32>
    %c21 = arith.constant 21 : index
    %272 = memref.load %arg4[%c21] : memref<72xf32, #tpu.memory_space<smem>>
    %273 = vector.broadcast %272 : f32 to vector<16x128xf32>
    %274 = arith.mulf %273, %255 : vector<16x128xf32>
    %c22 = arith.constant 22 : index
    %275 = memref.load %arg4[%c22] : memref<72xf32, #tpu.memory_space<smem>>
    %276 = vector.broadcast %275 : f32 to vector<16x128xf32>
    %277 = arith.mulf %276, %250 : vector<16x128xf32>
    %278 = arith.addf %274, %277 : vector<16x128xf32>
    %c23 = arith.constant 23 : index
    %279 = memref.load %arg4[%c23] : memref<72xf32, #tpu.memory_space<smem>>
    %280 = vector.broadcast %279 : f32 to vector<16x128xf32>
    %281 = arith.mulf %280, %260 : vector<16x128xf32>
    %282 = arith.addf %278, %281 : vector<16x128xf32>
    %c24 = arith.constant 24 : index
    %283 = memref.load %arg4[%c24] : memref<72xf32, #tpu.memory_space<smem>>
    %284 = vector.broadcast %283 : f32 to vector<16x128xf32>
    %285 = arith.mulf %284, %255 : vector<16x128xf32>
    %c25 = arith.constant 25 : index
    %286 = memref.load %arg4[%c25] : memref<72xf32, #tpu.memory_space<smem>>
    %287 = vector.broadcast %286 : f32 to vector<16x128xf32>
    %288 = arith.mulf %287, %250 : vector<16x128xf32>
    %289 = arith.addf %285, %288 : vector<16x128xf32>
    %c26 = arith.constant 26 : index
    %290 = memref.load %arg4[%c26] : memref<72xf32, #tpu.memory_space<smem>>
    %291 = vector.broadcast %290 : f32 to vector<16x128xf32>
    %292 = arith.mulf %291, %260 : vector<16x128xf32>
    %293 = arith.addf %289, %292 : vector<16x128xf32>
    %294 = arith.addf %237, %271 : vector<16x128xf32>
    %295 = arith.addf %238, %282 : vector<16x128xf32>
    %296 = arith.addf %239, %293 : vector<16x128xf32>
    %c9_65 = arith.constant 9 : index
    %297 = memref.load %arg3[%c9_65] : memref<24xf32, #tpu.memory_space<smem>>
    %298 = vector.broadcast %297 : f32 to vector<16x128xf32>
    %299 = arith.mulf %298, %121 : vector<16x128xf32>
    %c10_66 = arith.constant 10 : index
    %300 = memref.load %arg3[%c10_66] : memref<24xf32, #tpu.memory_space<smem>>
    %301 = vector.broadcast %300 : f32 to vector<16x128xf32>
    %302 = arith.mulf %301, %0 : vector<16x128xf32>
    %303 = arith.addf %299, %302 : vector<16x128xf32>
    %c11_67 = arith.constant 11 : index
    %304 = memref.load %arg3[%c11_67] : memref<24xf32, #tpu.memory_space<smem>>
    %305 = vector.broadcast %304 : f32 to vector<16x128xf32>
    %306 = arith.mulf %305, %126 : vector<16x128xf32>
    %307 = arith.addf %303, %306 : vector<16x128xf32>
    %cst_68 = arith.constant 0.000000e+00 : f32
    %308 = vector.broadcast %cst_68 : f32 to vector<16x1xf32>
    %309 = vector.extract_strided_slice %307 {offsets = [0, 0], sizes = [16, 127], strides = [1, 1]} : vector<16x128xf32> to vector<16x127xf32>
    %310 = tpu.concatenate %308, %309 in 1 : vector<16x1xf32>, vector<16x127xf32> -> vector<16x128xf32>
    %cst_69 = arith.constant 0.000000e+00 : f32
    %311 = vector.broadcast %cst_69 : f32 to vector<16x128xf32>
    %312 = arith.select %20, %311, %310 : vector<16x128xi1>, vector<16x128xf32>
    %313 = vector.extract_strided_slice %307 {offsets = [0, 1], sizes = [16, 127], strides = [1, 1]} : vector<16x128xf32> to vector<16x127xf32>
    %cst_70 = arith.constant 0.000000e+00 : f32
    %314 = vector.broadcast %cst_70 : f32 to vector<16x1xf32>
    %315 = tpu.concatenate %313, %314 in 1 : vector<16x127xf32>, vector<16x1xf32> -> vector<16x128xf32>
    %cst_71 = arith.constant 0.000000e+00 : f32
    %316 = vector.broadcast %cst_71 : f32 to vector<16x128xf32>
    %317 = arith.select %38, %316, %315 : vector<16x128xi1>, vector<16x128xf32>
    %c27 = arith.constant 27 : index
    %318 = memref.load %arg4[%c27] : memref<72xf32, #tpu.memory_space<smem>>
    %319 = vector.broadcast %318 : f32 to vector<16x128xf32>
    %320 = arith.mulf %319, %312 : vector<16x128xf32>
    %c28 = arith.constant 28 : index
    %321 = memref.load %arg4[%c28] : memref<72xf32, #tpu.memory_space<smem>>
    %322 = vector.broadcast %321 : f32 to vector<16x128xf32>
    %323 = arith.mulf %322, %307 : vector<16x128xf32>
    %324 = arith.addf %320, %323 : vector<16x128xf32>
    %c29 = arith.constant 29 : index
    %325 = memref.load %arg4[%c29] : memref<72xf32, #tpu.memory_space<smem>>
    %326 = vector.broadcast %325 : f32 to vector<16x128xf32>
    %327 = arith.mulf %326, %317 : vector<16x128xf32>
    %328 = arith.addf %324, %327 : vector<16x128xf32>
    %c30 = arith.constant 30 : index
    %329 = memref.load %arg4[%c30] : memref<72xf32, #tpu.memory_space<smem>>
    %330 = vector.broadcast %329 : f32 to vector<16x128xf32>
    %331 = arith.mulf %330, %312 : vector<16x128xf32>
    %c31 = arith.constant 31 : index
    %332 = memref.load %arg4[%c31] : memref<72xf32, #tpu.memory_space<smem>>
    %333 = vector.broadcast %332 : f32 to vector<16x128xf32>
    %334 = arith.mulf %333, %307 : vector<16x128xf32>
    %335 = arith.addf %331, %334 : vector<16x128xf32>
    %c32 = arith.constant 32 : index
    %336 = memref.load %arg4[%c32] : memref<72xf32, #tpu.memory_space<smem>>
    %337 = vector.broadcast %336 : f32 to vector<16x128xf32>
    %338 = arith.mulf %337, %317 : vector<16x128xf32>
    %339 = arith.addf %335, %338 : vector<16x128xf32>
    %c33 = arith.constant 33 : index
    %340 = memref.load %arg4[%c33] : memref<72xf32, #tpu.memory_space<smem>>
    %341 = vector.broadcast %340 : f32 to vector<16x128xf32>
    %342 = arith.mulf %341, %312 : vector<16x128xf32>
    %c34 = arith.constant 34 : index
    %343 = memref.load %arg4[%c34] : memref<72xf32, #tpu.memory_space<smem>>
    %344 = vector.broadcast %343 : f32 to vector<16x128xf32>
    %345 = arith.mulf %344, %307 : vector<16x128xf32>
    %346 = arith.addf %342, %345 : vector<16x128xf32>
    %c35 = arith.constant 35 : index
    %347 = memref.load %arg4[%c35] : memref<72xf32, #tpu.memory_space<smem>>
    %348 = vector.broadcast %347 : f32 to vector<16x128xf32>
    %349 = arith.mulf %348, %317 : vector<16x128xf32>
    %350 = arith.addf %346, %349 : vector<16x128xf32>
    %351 = arith.addf %294, %328 : vector<16x128xf32>
    %352 = arith.addf %295, %339 : vector<16x128xf32>
    %353 = arith.addf %296, %350 : vector<16x128xf32>
    %c12_72 = arith.constant 12 : index
    %354 = memref.load %arg3[%c12_72] : memref<24xf32, #tpu.memory_space<smem>>
    %355 = vector.broadcast %354 : f32 to vector<16x128xf32>
    %356 = arith.mulf %355, %121 : vector<16x128xf32>
    %c13_73 = arith.constant 13 : index
    %357 = memref.load %arg3[%c13_73] : memref<24xf32, #tpu.memory_space<smem>>
    %358 = vector.broadcast %357 : f32 to vector<16x128xf32>
    %359 = arith.mulf %358, %0 : vector<16x128xf32>
    %360 = arith.addf %356, %359 : vector<16x128xf32>
    %c14_74 = arith.constant 14 : index
    %361 = memref.load %arg3[%c14_74] : memref<24xf32, #tpu.memory_space<smem>>
    %362 = vector.broadcast %361 : f32 to vector<16x128xf32>
    %363 = arith.mulf %362, %126 : vector<16x128xf32>
    %364 = arith.addf %360, %363 : vector<16x128xf32>
    %cst_75 = arith.constant 0.000000e+00 : f32
    %365 = vector.broadcast %cst_75 : f32 to vector<16x1xf32>
    %366 = vector.extract_strided_slice %364 {offsets = [0, 0], sizes = [16, 127], strides = [1, 1]} : vector<16x128xf32> to vector<16x127xf32>
    %367 = tpu.concatenate %365, %366 in 1 : vector<16x1xf32>, vector<16x127xf32> -> vector<16x128xf32>
    %cst_76 = arith.constant 0.000000e+00 : f32
    %368 = vector.broadcast %cst_76 : f32 to vector<16x128xf32>
    %369 = arith.select %20, %368, %367 : vector<16x128xi1>, vector<16x128xf32>
    %370 = vector.extract_strided_slice %364 {offsets = [0, 1], sizes = [16, 127], strides = [1, 1]} : vector<16x128xf32> to vector<16x127xf32>
    %cst_77 = arith.constant 0.000000e+00 : f32
    %371 = vector.broadcast %cst_77 : f32 to vector<16x1xf32>
    %372 = tpu.concatenate %370, %371 in 1 : vector<16x127xf32>, vector<16x1xf32> -> vector<16x128xf32>
    %cst_78 = arith.constant 0.000000e+00 : f32
    %373 = vector.broadcast %cst_78 : f32 to vector<16x128xf32>
    %374 = arith.select %38, %373, %372 : vector<16x128xi1>, vector<16x128xf32>
    %c36 = arith.constant 36 : index
    %375 = memref.load %arg4[%c36] : memref<72xf32, #tpu.memory_space<smem>>
    %376 = vector.broadcast %375 : f32 to vector<16x128xf32>
    %377 = arith.mulf %376, %369 : vector<16x128xf32>
    %c37 = arith.constant 37 : index
    %378 = memref.load %arg4[%c37] : memref<72xf32, #tpu.memory_space<smem>>
    %379 = vector.broadcast %378 : f32 to vector<16x128xf32>
    %380 = arith.mulf %379, %364 : vector<16x128xf32>
    %381 = arith.addf %377, %380 : vector<16x128xf32>
    %c38 = arith.constant 38 : index
    %382 = memref.load %arg4[%c38] : memref<72xf32, #tpu.memory_space<smem>>
    %383 = vector.broadcast %382 : f32 to vector<16x128xf32>
    %384 = arith.mulf %383, %374 : vector<16x128xf32>
    %385 = arith.addf %381, %384 : vector<16x128xf32>
    %c39 = arith.constant 39 : index
    %386 = memref.load %arg4[%c39] : memref<72xf32, #tpu.memory_space<smem>>
    %387 = vector.broadcast %386 : f32 to vector<16x128xf32>
    %388 = arith.mulf %387, %369 : vector<16x128xf32>
    %c40 = arith.constant 40 : index
    %389 = memref.load %arg4[%c40] : memref<72xf32, #tpu.memory_space<smem>>
    %390 = vector.broadcast %389 : f32 to vector<16x128xf32>
    %391 = arith.mulf %390, %364 : vector<16x128xf32>
    %392 = arith.addf %388, %391 : vector<16x128xf32>
    %c41 = arith.constant 41 : index
    %393 = memref.load %arg4[%c41] : memref<72xf32, #tpu.memory_space<smem>>
    %394 = vector.broadcast %393 : f32 to vector<16x128xf32>
    %395 = arith.mulf %394, %374 : vector<16x128xf32>
    %396 = arith.addf %392, %395 : vector<16x128xf32>
    %c42 = arith.constant 42 : index
    %397 = memref.load %arg4[%c42] : memref<72xf32, #tpu.memory_space<smem>>
    %398 = vector.broadcast %397 : f32 to vector<16x128xf32>
    %399 = arith.mulf %398, %369 : vector<16x128xf32>
    %c43 = arith.constant 43 : index
    %400 = memref.load %arg4[%c43] : memref<72xf32, #tpu.memory_space<smem>>
    %401 = vector.broadcast %400 : f32 to vector<16x128xf32>
    %402 = arith.mulf %401, %364 : vector<16x128xf32>
    %403 = arith.addf %399, %402 : vector<16x128xf32>
    %c44 = arith.constant 44 : index
    %404 = memref.load %arg4[%c44] : memref<72xf32, #tpu.memory_space<smem>>
    %405 = vector.broadcast %404 : f32 to vector<16x128xf32>
    %406 = arith.mulf %405, %374 : vector<16x128xf32>
    %407 = arith.addf %403, %406 : vector<16x128xf32>
    %408 = arith.addf %351, %385 : vector<16x128xf32>
    %409 = arith.addf %352, %396 : vector<16x128xf32>
    %410 = arith.addf %353, %407 : vector<16x128xf32>
    %c15_79 = arith.constant 15 : index
    %411 = memref.load %arg3[%c15_79] : memref<24xf32, #tpu.memory_space<smem>>
    %412 = vector.broadcast %411 : f32 to vector<16x128xf32>
    %413 = arith.mulf %412, %121 : vector<16x128xf32>
    %c16_80 = arith.constant 16 : index
    %414 = memref.load %arg3[%c16_80] : memref<24xf32, #tpu.memory_space<smem>>
    %415 = vector.broadcast %414 : f32 to vector<16x128xf32>
    %416 = arith.mulf %415, %0 : vector<16x128xf32>
    %417 = arith.addf %413, %416 : vector<16x128xf32>
    %c17_81 = arith.constant 17 : index
    %418 = memref.load %arg3[%c17_81] : memref<24xf32, #tpu.memory_space<smem>>
    %419 = vector.broadcast %418 : f32 to vector<16x128xf32>
    %420 = arith.mulf %419, %126 : vector<16x128xf32>
    %421 = arith.addf %417, %420 : vector<16x128xf32>
    %cst_82 = arith.constant 0.000000e+00 : f32
    %422 = vector.broadcast %cst_82 : f32 to vector<16x1xf32>
    %423 = vector.extract_strided_slice %421 {offsets = [0, 0], sizes = [16, 127], strides = [1, 1]} : vector<16x128xf32> to vector<16x127xf32>
    %424 = tpu.concatenate %422, %423 in 1 : vector<16x1xf32>, vector<16x127xf32> -> vector<16x128xf32>
    %cst_83 = arith.constant 0.000000e+00 : f32
    %425 = vector.broadcast %cst_83 : f32 to vector<16x128xf32>
    %426 = arith.select %20, %425, %424 : vector<16x128xi1>, vector<16x128xf32>
    %427 = vector.extract_strided_slice %421 {offsets = [0, 1], sizes = [16, 127], strides = [1, 1]} : vector<16x128xf32> to vector<16x127xf32>
    %cst_84 = arith.constant 0.000000e+00 : f32
    %428 = vector.broadcast %cst_84 : f32 to vector<16x1xf32>
    %429 = tpu.concatenate %427, %428 in 1 : vector<16x127xf32>, vector<16x1xf32> -> vector<16x128xf32>
    %cst_85 = arith.constant 0.000000e+00 : f32
    %430 = vector.broadcast %cst_85 : f32 to vector<16x128xf32>
    %431 = arith.select %38, %430, %429 : vector<16x128xi1>, vector<16x128xf32>
    %c45 = arith.constant 45 : index
    %432 = memref.load %arg4[%c45] : memref<72xf32, #tpu.memory_space<smem>>
    %433 = vector.broadcast %432 : f32 to vector<16x128xf32>
    %434 = arith.mulf %433, %426 : vector<16x128xf32>
    %c46 = arith.constant 46 : index
    %435 = memref.load %arg4[%c46] : memref<72xf32, #tpu.memory_space<smem>>
    %436 = vector.broadcast %435 : f32 to vector<16x128xf32>
    %437 = arith.mulf %436, %421 : vector<16x128xf32>
    %438 = arith.addf %434, %437 : vector<16x128xf32>
    %c47 = arith.constant 47 : index
    %439 = memref.load %arg4[%c47] : memref<72xf32, #tpu.memory_space<smem>>
    %440 = vector.broadcast %439 : f32 to vector<16x128xf32>
    %441 = arith.mulf %440, %431 : vector<16x128xf32>
    %442 = arith.addf %438, %441 : vector<16x128xf32>
    %c48 = arith.constant 48 : index
    %443 = memref.load %arg4[%c48] : memref<72xf32, #tpu.memory_space<smem>>
    %444 = vector.broadcast %443 : f32 to vector<16x128xf32>
    %445 = arith.mulf %444, %426 : vector<16x128xf32>
    %c49 = arith.constant 49 : index
    %446 = memref.load %arg4[%c49] : memref<72xf32, #tpu.memory_space<smem>>
    %447 = vector.broadcast %446 : f32 to vector<16x128xf32>
    %448 = arith.mulf %447, %421 : vector<16x128xf32>
    %449 = arith.addf %445, %448 : vector<16x128xf32>
    %c50 = arith.constant 50 : index
    %450 = memref.load %arg4[%c50] : memref<72xf32, #tpu.memory_space<smem>>
    %451 = vector.broadcast %450 : f32 to vector<16x128xf32>
    %452 = arith.mulf %451, %431 : vector<16x128xf32>
    %453 = arith.addf %449, %452 : vector<16x128xf32>
    %c51 = arith.constant 51 : index
    %454 = memref.load %arg4[%c51] : memref<72xf32, #tpu.memory_space<smem>>
    %455 = vector.broadcast %454 : f32 to vector<16x128xf32>
    %456 = arith.mulf %455, %426 : vector<16x128xf32>
    %c52 = arith.constant 52 : index
    %457 = memref.load %arg4[%c52] : memref<72xf32, #tpu.memory_space<smem>>
    %458 = vector.broadcast %457 : f32 to vector<16x128xf32>
    %459 = arith.mulf %458, %421 : vector<16x128xf32>
    %460 = arith.addf %456, %459 : vector<16x128xf32>
    %c53 = arith.constant 53 : index
    %461 = memref.load %arg4[%c53] : memref<72xf32, #tpu.memory_space<smem>>
    %462 = vector.broadcast %461 : f32 to vector<16x128xf32>
    %463 = arith.mulf %462, %431 : vector<16x128xf32>
    %464 = arith.addf %460, %463 : vector<16x128xf32>
    %465 = arith.addf %408, %442 : vector<16x128xf32>
    %466 = arith.addf %409, %453 : vector<16x128xf32>
    %467 = arith.addf %410, %464 : vector<16x128xf32>
    %c18_86 = arith.constant 18 : index
    %468 = memref.load %arg3[%c18_86] : memref<24xf32, #tpu.memory_space<smem>>
    %469 = vector.broadcast %468 : f32 to vector<16x128xf32>
    %470 = arith.mulf %469, %121 : vector<16x128xf32>
    %c19_87 = arith.constant 19 : index
    %471 = memref.load %arg3[%c19_87] : memref<24xf32, #tpu.memory_space<smem>>
    %472 = vector.broadcast %471 : f32 to vector<16x128xf32>
    %473 = arith.mulf %472, %0 : vector<16x128xf32>
    %474 = arith.addf %470, %473 : vector<16x128xf32>
    %c20_88 = arith.constant 20 : index
    %475 = memref.load %arg3[%c20_88] : memref<24xf32, #tpu.memory_space<smem>>
    %476 = vector.broadcast %475 : f32 to vector<16x128xf32>
    %477 = arith.mulf %476, %126 : vector<16x128xf32>
    %478 = arith.addf %474, %477 : vector<16x128xf32>
    %cst_89 = arith.constant 0.000000e+00 : f32
    %479 = vector.broadcast %cst_89 : f32 to vector<16x1xf32>
    %480 = vector.extract_strided_slice %478 {offsets = [0, 0], sizes = [16, 127], strides = [1, 1]} : vector<16x128xf32> to vector<16x127xf32>
    %481 = tpu.concatenate %479, %480 in 1 : vector<16x1xf32>, vector<16x127xf32> -> vector<16x128xf32>
    %cst_90 = arith.constant 0.000000e+00 : f32
    %482 = vector.broadcast %cst_90 : f32 to vector<16x128xf32>
    %483 = arith.select %20, %482, %481 : vector<16x128xi1>, vector<16x128xf32>
    %484 = vector.extract_strided_slice %478 {offsets = [0, 1], sizes = [16, 127], strides = [1, 1]} : vector<16x128xf32> to vector<16x127xf32>
    %cst_91 = arith.constant 0.000000e+00 : f32
    %485 = vector.broadcast %cst_91 : f32 to vector<16x1xf32>
    %486 = tpu.concatenate %484, %485 in 1 : vector<16x127xf32>, vector<16x1xf32> -> vector<16x128xf32>
    %cst_92 = arith.constant 0.000000e+00 : f32
    %487 = vector.broadcast %cst_92 : f32 to vector<16x128xf32>
    %488 = arith.select %38, %487, %486 : vector<16x128xi1>, vector<16x128xf32>
    %c54 = arith.constant 54 : index
    %489 = memref.load %arg4[%c54] : memref<72xf32, #tpu.memory_space<smem>>
    %490 = vector.broadcast %489 : f32 to vector<16x128xf32>
    %491 = arith.mulf %490, %483 : vector<16x128xf32>
    %c55 = arith.constant 55 : index
    %492 = memref.load %arg4[%c55] : memref<72xf32, #tpu.memory_space<smem>>
    %493 = vector.broadcast %492 : f32 to vector<16x128xf32>
    %494 = arith.mulf %493, %478 : vector<16x128xf32>
    %495 = arith.addf %491, %494 : vector<16x128xf32>
    %c56 = arith.constant 56 : index
    %496 = memref.load %arg4[%c56] : memref<72xf32, #tpu.memory_space<smem>>
    %497 = vector.broadcast %496 : f32 to vector<16x128xf32>
    %498 = arith.mulf %497, %488 : vector<16x128xf32>
    %499 = arith.addf %495, %498 : vector<16x128xf32>
    %c57 = arith.constant 57 : index
    %500 = memref.load %arg4[%c57] : memref<72xf32, #tpu.memory_space<smem>>
    %501 = vector.broadcast %500 : f32 to vector<16x128xf32>
    %502 = arith.mulf %501, %483 : vector<16x128xf32>
    %c58 = arith.constant 58 : index
    %503 = memref.load %arg4[%c58] : memref<72xf32, #tpu.memory_space<smem>>
    %504 = vector.broadcast %503 : f32 to vector<16x128xf32>
    %505 = arith.mulf %504, %478 : vector<16x128xf32>
    %506 = arith.addf %502, %505 : vector<16x128xf32>
    %c59 = arith.constant 59 : index
    %507 = memref.load %arg4[%c59] : memref<72xf32, #tpu.memory_space<smem>>
    %508 = vector.broadcast %507 : f32 to vector<16x128xf32>
    %509 = arith.mulf %508, %488 : vector<16x128xf32>
    %510 = arith.addf %506, %509 : vector<16x128xf32>
    %c60 = arith.constant 60 : index
    %511 = memref.load %arg4[%c60] : memref<72xf32, #tpu.memory_space<smem>>
    %512 = vector.broadcast %511 : f32 to vector<16x128xf32>
    %513 = arith.mulf %512, %483 : vector<16x128xf32>
    %c61 = arith.constant 61 : index
    %514 = memref.load %arg4[%c61] : memref<72xf32, #tpu.memory_space<smem>>
    %515 = vector.broadcast %514 : f32 to vector<16x128xf32>
    %516 = arith.mulf %515, %478 : vector<16x128xf32>
    %517 = arith.addf %513, %516 : vector<16x128xf32>
    %c62 = arith.constant 62 : index
    %518 = memref.load %arg4[%c62] : memref<72xf32, #tpu.memory_space<smem>>
    %519 = vector.broadcast %518 : f32 to vector<16x128xf32>
    %520 = arith.mulf %519, %488 : vector<16x128xf32>
    %521 = arith.addf %517, %520 : vector<16x128xf32>
    %522 = arith.addf %465, %499 : vector<16x128xf32>
    %523 = arith.addf %466, %510 : vector<16x128xf32>
    %524 = arith.addf %467, %521 : vector<16x128xf32>
    %c21_93 = arith.constant 21 : index
    %525 = memref.load %arg3[%c21_93] : memref<24xf32, #tpu.memory_space<smem>>
    %526 = vector.broadcast %525 : f32 to vector<16x128xf32>
    %527 = arith.mulf %526, %121 : vector<16x128xf32>
    %c22_94 = arith.constant 22 : index
    %528 = memref.load %arg3[%c22_94] : memref<24xf32, #tpu.memory_space<smem>>
    %529 = vector.broadcast %528 : f32 to vector<16x128xf32>
    %530 = arith.mulf %529, %0 : vector<16x128xf32>
    %531 = arith.addf %527, %530 : vector<16x128xf32>
    %c23_95 = arith.constant 23 : index
    %532 = memref.load %arg3[%c23_95] : memref<24xf32, #tpu.memory_space<smem>>
    %533 = vector.broadcast %532 : f32 to vector<16x128xf32>
    %534 = arith.mulf %533, %126 : vector<16x128xf32>
    %535 = arith.addf %531, %534 : vector<16x128xf32>
    %cst_96 = arith.constant 0.000000e+00 : f32
    %536 = vector.broadcast %cst_96 : f32 to vector<16x1xf32>
    %537 = vector.extract_strided_slice %535 {offsets = [0, 0], sizes = [16, 127], strides = [1, 1]} : vector<16x128xf32> to vector<16x127xf32>
    %538 = tpu.concatenate %536, %537 in 1 : vector<16x1xf32>, vector<16x127xf32> -> vector<16x128xf32>
    %cst_97 = arith.constant 0.000000e+00 : f32
    %539 = vector.broadcast %cst_97 : f32 to vector<16x128xf32>
    %540 = arith.select %20, %539, %538 : vector<16x128xi1>, vector<16x128xf32>
    %541 = vector.extract_strided_slice %535 {offsets = [0, 1], sizes = [16, 127], strides = [1, 1]} : vector<16x128xf32> to vector<16x127xf32>
    %cst_98 = arith.constant 0.000000e+00 : f32
    %542 = vector.broadcast %cst_98 : f32 to vector<16x1xf32>
    %543 = tpu.concatenate %541, %542 in 1 : vector<16x127xf32>, vector<16x1xf32> -> vector<16x128xf32>
    %cst_99 = arith.constant 0.000000e+00 : f32
    %544 = vector.broadcast %cst_99 : f32 to vector<16x128xf32>
    %545 = arith.select %38, %544, %543 : vector<16x128xi1>, vector<16x128xf32>
    %c63 = arith.constant 63 : index
    %546 = memref.load %arg4[%c63] : memref<72xf32, #tpu.memory_space<smem>>
    %547 = vector.broadcast %546 : f32 to vector<16x128xf32>
    %548 = arith.mulf %547, %540 : vector<16x128xf32>
    %c64 = arith.constant 64 : index
    %549 = memref.load %arg4[%c64] : memref<72xf32, #tpu.memory_space<smem>>
    %550 = vector.broadcast %549 : f32 to vector<16x128xf32>
    %551 = arith.mulf %550, %535 : vector<16x128xf32>
    %552 = arith.addf %548, %551 : vector<16x128xf32>
    %c65 = arith.constant 65 : index
    %553 = memref.load %arg4[%c65] : memref<72xf32, #tpu.memory_space<smem>>
    %554 = vector.broadcast %553 : f32 to vector<16x128xf32>
    %555 = arith.mulf %554, %545 : vector<16x128xf32>
    %556 = arith.addf %552, %555 : vector<16x128xf32>
    %c66 = arith.constant 66 : index
    %557 = memref.load %arg4[%c66] : memref<72xf32, #tpu.memory_space<smem>>
    %558 = vector.broadcast %557 : f32 to vector<16x128xf32>
    %559 = arith.mulf %558, %540 : vector<16x128xf32>
    %c67 = arith.constant 67 : index
    %560 = memref.load %arg4[%c67] : memref<72xf32, #tpu.memory_space<smem>>
    %561 = vector.broadcast %560 : f32 to vector<16x128xf32>
    %562 = arith.mulf %561, %535 : vector<16x128xf32>
    %563 = arith.addf %559, %562 : vector<16x128xf32>
    %c68 = arith.constant 68 : index
    %564 = memref.load %arg4[%c68] : memref<72xf32, #tpu.memory_space<smem>>
    %565 = vector.broadcast %564 : f32 to vector<16x128xf32>
    %566 = arith.mulf %565, %545 : vector<16x128xf32>
    %567 = arith.addf %563, %566 : vector<16x128xf32>
    %c69 = arith.constant 69 : index
    %568 = memref.load %arg4[%c69] : memref<72xf32, #tpu.memory_space<smem>>
    %569 = vector.broadcast %568 : f32 to vector<16x128xf32>
    %570 = arith.mulf %569, %540 : vector<16x128xf32>
    %c70 = arith.constant 70 : index
    %571 = memref.load %arg4[%c70] : memref<72xf32, #tpu.memory_space<smem>>
    %572 = vector.broadcast %571 : f32 to vector<16x128xf32>
    %573 = arith.mulf %572, %535 : vector<16x128xf32>
    %574 = arith.addf %570, %573 : vector<16x128xf32>
    %c71 = arith.constant 71 : index
    %575 = memref.load %arg4[%c71] : memref<72xf32, #tpu.memory_space<smem>>
    %576 = vector.broadcast %575 : f32 to vector<16x128xf32>
    %577 = arith.mulf %576, %545 : vector<16x128xf32>
    %578 = arith.addf %574, %577 : vector<16x128xf32>
    %579 = arith.addf %522, %556 : vector<16x128xf32>
    %580 = arith.addf %523, %567 : vector<16x128xf32>
    %581 = arith.addf %524, %578 : vector<16x128xf32>
    %cst_100 = arith.constant 0.000000e+00 : f32
    %582 = vector.broadcast %cst_100 : f32 to vector<16x16xf32>
    %583 = vector.extract_strided_slice %579 {offsets = [0, 0], sizes = [16, 112], strides = [1, 1]} : vector<16x128xf32> to vector<16x112xf32>
    %584 = tpu.concatenate %582, %583 in 1 : vector<16x16xf32>, vector<16x112xf32> -> vector<16x128xf32>
    %cst_101 = arith.constant 0.000000e+00 : f32
    %585 = vector.broadcast %cst_101 : f32 to vector<1x128xf32>
    %586 = vector.extract_strided_slice %579 {offsets = [0, 0], sizes = [15, 128], strides = [1, 1]} : vector<16x128xf32> to vector<15x128xf32>
    %587 = tpu.concatenate %585, %586 in 0 : vector<1x128xf32>, vector<15x128xf32> -> vector<16x128xf32>
    %588 = vector.extract_strided_slice %587 {offsets = [0, 112], sizes = [16, 16], strides = [1, 1]} : vector<16x128xf32> to vector<16x16xf32>
    %cst_102 = arith.constant 0.000000e+00 : f32
    %589 = vector.broadcast %cst_102 : f32 to vector<16x112xf32>
    %590 = tpu.concatenate %588, %589 in 1 : vector<16x16xf32>, vector<16x112xf32> -> vector<16x128xf32>
    %cst_103 = arith.constant 0.000000e+00 : f32
    %591 = vector.broadcast %cst_103 : f32 to vector<16x128xf32>
    %592 = arith.select %59, %591, %590 : vector<16x128xi1>, vector<16x128xf32>
    %593 = arith.addf %584, %592 : vector<16x128xf32>
    %594 = arith.addf %580, %593 : vector<16x128xf32>
    %595 = vector.extract_strided_slice %581 {offsets = [0, 16], sizes = [16, 112], strides = [1, 1]} : vector<16x128xf32> to vector<16x112xf32>
    %cst_104 = arith.constant 0.000000e+00 : f32
    %596 = vector.broadcast %cst_104 : f32 to vector<16x16xf32>
    %597 = tpu.concatenate %595, %596 in 1 : vector<16x112xf32>, vector<16x16xf32> -> vector<16x128xf32>
    %598 = vector.extract_strided_slice %581 {offsets = [1, 0], sizes = [15, 128], strides = [1, 1]} : vector<16x128xf32> to vector<15x128xf32>
    %cst_105 = arith.constant 0.000000e+00 : f32
    %599 = vector.broadcast %cst_105 : f32 to vector<1x128xf32>
    %600 = tpu.concatenate %598, %599 in 0 : vector<15x128xf32>, vector<1x128xf32> -> vector<16x128xf32>
    %cst_106 = arith.constant 0.000000e+00 : f32
    %601 = vector.broadcast %cst_106 : f32 to vector<16x112xf32>
    %602 = vector.extract_strided_slice %600 {offsets = [0, 0], sizes = [16, 16], strides = [1, 1]} : vector<16x128xf32> to vector<16x16xf32>
    %603 = tpu.concatenate %601, %602 in 1 : vector<16x112xf32>, vector<16x16xf32> -> vector<16x128xf32>
    %cst_107 = arith.constant 0.000000e+00 : f32
    %604 = vector.broadcast %cst_107 : f32 to vector<16x128xf32>
    %605 = arith.select %80, %604, %603 : vector<16x128xi1>, vector<16x128xf32>
    %606 = arith.addf %597, %605 : vector<16x128xf32>
    %607 = arith.addf %594, %606 : vector<16x128xf32>
    %608 = arith.addf %607, %128 : vector<16x128xf32>
    %cst_108 = arith.constant 0.000000e+00 : f32
    %609 = vector.broadcast %cst_108 : f32 to vector<16x128xf32>
    %610 = arith.maximumf %608, %609 : vector<16x128xf32>
    %cst_109 = arith.constant 0.000000e+00 : f32
    %611 = vector.broadcast %cst_109 : f32 to vector<2x128xf32>
    %612 = vector.extract_strided_slice %610 {offsets = [0, 0], sizes = [14, 128], strides = [1, 1]} : vector<16x128xf32> to vector<14x128xf32>
    %613 = tpu.concatenate %611, %612 in 0 : vector<2x128xf32>, vector<14x128xf32> -> vector<16x128xf32>
    %cst_110 = arith.constant 0.000000e+00 : f32
    %614 = vector.broadcast %cst_110 : f32 to vector<16x128xf32>
    %615 = arith.select %98, %614, %613 : vector<16x128xi1>, vector<16x128xf32>
    %616 = vector.extract_strided_slice %610 {offsets = [2, 0], sizes = [14, 128], strides = [1, 1]} : vector<16x128xf32> to vector<14x128xf32>
    %cst_111 = arith.constant 0.000000e+00 : f32
    %617 = vector.broadcast %cst_111 : f32 to vector<2x128xf32>
    %618 = tpu.concatenate %616, %617 in 0 : vector<14x128xf32>, vector<2x128xf32> -> vector<16x128xf32>
    %cst_112 = arith.constant 0.000000e+00 : f32
    %619 = vector.broadcast %cst_112 : f32 to vector<16x128xf32>
    %620 = arith.select %116, %619, %618 : vector<16x128xi1>, vector<16x128xf32>
    %c1_113 = arith.constant 1 : index
    %c0_114 = arith.constant 0 : index
    %c0_115 = arith.constant 0 : index
    %621 = vector.load %arg2[%c1_113, %c0_114, %c0_115] : memref<2x16x128xf32, #tpu.memory_space<vmem>>, vector<1x16x128xf32>
    %622 = vector.shape_cast %621 : vector<1x16x128xf32> to vector<16x128xf32>
    %c0_116 = arith.constant 0 : index
    %623 = memref.load %arg5[%c0_116] : memref<48xf32, #tpu.memory_space<smem>>
    %624 = vector.broadcast %623 : f32 to vector<16x128xf32>
    %625 = arith.mulf %624, %121 : vector<16x128xf32>
    %c1_117 = arith.constant 1 : index
    %626 = memref.load %arg5[%c1_117] : memref<48xf32, #tpu.memory_space<smem>>
    %627 = vector.broadcast %626 : f32 to vector<16x128xf32>
    %628 = arith.mulf %627, %0 : vector<16x128xf32>
    %629 = arith.addf %625, %628 : vector<16x128xf32>
    %c2_118 = arith.constant 2 : index
    %630 = memref.load %arg5[%c2_118] : memref<48xf32, #tpu.memory_space<smem>>
    %631 = vector.broadcast %630 : f32 to vector<16x128xf32>
    %632 = arith.mulf %631, %126 : vector<16x128xf32>
    %633 = arith.addf %629, %632 : vector<16x128xf32>
    %c3_119 = arith.constant 3 : index
    %634 = memref.load %arg5[%c3_119] : memref<48xf32, #tpu.memory_space<smem>>
    %635 = vector.broadcast %634 : f32 to vector<16x128xf32>
    %636 = arith.mulf %635, %615 : vector<16x128xf32>
    %637 = arith.addf %633, %636 : vector<16x128xf32>
    %c4_120 = arith.constant 4 : index
    %638 = memref.load %arg5[%c4_120] : memref<48xf32, #tpu.memory_space<smem>>
    %639 = vector.broadcast %638 : f32 to vector<16x128xf32>
    %640 = arith.mulf %639, %610 : vector<16x128xf32>
    %641 = arith.addf %637, %640 : vector<16x128xf32>
    %c5_121 = arith.constant 5 : index
    %642 = memref.load %arg5[%c5_121] : memref<48xf32, #tpu.memory_space<smem>>
    %643 = vector.broadcast %642 : f32 to vector<16x128xf32>
    %644 = arith.mulf %643, %620 : vector<16x128xf32>
    %645 = arith.addf %641, %644 : vector<16x128xf32>
    %cst_122 = arith.constant 0.000000e+00 : f32
    %646 = vector.broadcast %cst_122 : f32 to vector<16x1xf32>
    %647 = vector.extract_strided_slice %645 {offsets = [0, 0], sizes = [16, 127], strides = [1, 1]} : vector<16x128xf32> to vector<16x127xf32>
    %648 = tpu.concatenate %646, %647 in 1 : vector<16x1xf32>, vector<16x127xf32> -> vector<16x128xf32>
    %cst_123 = arith.constant 0.000000e+00 : f32
    %649 = vector.broadcast %cst_123 : f32 to vector<16x128xf32>
    %650 = arith.select %20, %649, %648 : vector<16x128xi1>, vector<16x128xf32>
    %651 = vector.extract_strided_slice %645 {offsets = [0, 1], sizes = [16, 127], strides = [1, 1]} : vector<16x128xf32> to vector<16x127xf32>
    %cst_124 = arith.constant 0.000000e+00 : f32
    %652 = vector.broadcast %cst_124 : f32 to vector<16x1xf32>
    %653 = tpu.concatenate %651, %652 in 1 : vector<16x127xf32>, vector<16x1xf32> -> vector<16x128xf32>
    %cst_125 = arith.constant 0.000000e+00 : f32
    %654 = vector.broadcast %cst_125 : f32 to vector<16x128xf32>
    %655 = arith.select %38, %654, %653 : vector<16x128xi1>, vector<16x128xf32>
    %c0_126 = arith.constant 0 : index
    %656 = memref.load %arg6[%c0_126] : memref<72xf32, #tpu.memory_space<smem>>
    %657 = vector.broadcast %656 : f32 to vector<16x128xf32>
    %658 = arith.mulf %657, %650 : vector<16x128xf32>
    %c1_127 = arith.constant 1 : index
    %659 = memref.load %arg6[%c1_127] : memref<72xf32, #tpu.memory_space<smem>>
    %660 = vector.broadcast %659 : f32 to vector<16x128xf32>
    %661 = arith.mulf %660, %645 : vector<16x128xf32>
    %662 = arith.addf %658, %661 : vector<16x128xf32>
    %c2_128 = arith.constant 2 : index
    %663 = memref.load %arg6[%c2_128] : memref<72xf32, #tpu.memory_space<smem>>
    %664 = vector.broadcast %663 : f32 to vector<16x128xf32>
    %665 = arith.mulf %664, %655 : vector<16x128xf32>
    %666 = arith.addf %662, %665 : vector<16x128xf32>
    %c3_129 = arith.constant 3 : index
    %667 = memref.load %arg6[%c3_129] : memref<72xf32, #tpu.memory_space<smem>>
    %668 = vector.broadcast %667 : f32 to vector<16x128xf32>
    %669 = arith.mulf %668, %650 : vector<16x128xf32>
    %c4_130 = arith.constant 4 : index
    %670 = memref.load %arg6[%c4_130] : memref<72xf32, #tpu.memory_space<smem>>
    %671 = vector.broadcast %670 : f32 to vector<16x128xf32>
    %672 = arith.mulf %671, %645 : vector<16x128xf32>
    %673 = arith.addf %669, %672 : vector<16x128xf32>
    %c5_131 = arith.constant 5 : index
    %674 = memref.load %arg6[%c5_131] : memref<72xf32, #tpu.memory_space<smem>>
    %675 = vector.broadcast %674 : f32 to vector<16x128xf32>
    %676 = arith.mulf %675, %655 : vector<16x128xf32>
    %677 = arith.addf %673, %676 : vector<16x128xf32>
    %c6_132 = arith.constant 6 : index
    %678 = memref.load %arg6[%c6_132] : memref<72xf32, #tpu.memory_space<smem>>
    %679 = vector.broadcast %678 : f32 to vector<16x128xf32>
    %680 = arith.mulf %679, %650 : vector<16x128xf32>
    %c7_133 = arith.constant 7 : index
    %681 = memref.load %arg6[%c7_133] : memref<72xf32, #tpu.memory_space<smem>>
    %682 = vector.broadcast %681 : f32 to vector<16x128xf32>
    %683 = arith.mulf %682, %645 : vector<16x128xf32>
    %684 = arith.addf %680, %683 : vector<16x128xf32>
    %c8_134 = arith.constant 8 : index
    %685 = memref.load %arg6[%c8_134] : memref<72xf32, #tpu.memory_space<smem>>
    %686 = vector.broadcast %685 : f32 to vector<16x128xf32>
    %687 = arith.mulf %686, %655 : vector<16x128xf32>
    %688 = arith.addf %684, %687 : vector<16x128xf32>
    %c6_135 = arith.constant 6 : index
    %689 = memref.load %arg5[%c6_135] : memref<48xf32, #tpu.memory_space<smem>>
    %690 = vector.broadcast %689 : f32 to vector<16x128xf32>
    %691 = arith.mulf %690, %121 : vector<16x128xf32>
    %c7_136 = arith.constant 7 : index
    %692 = memref.load %arg5[%c7_136] : memref<48xf32, #tpu.memory_space<smem>>
    %693 = vector.broadcast %692 : f32 to vector<16x128xf32>
    %694 = arith.mulf %693, %0 : vector<16x128xf32>
    %695 = arith.addf %691, %694 : vector<16x128xf32>
    %c8_137 = arith.constant 8 : index
    %696 = memref.load %arg5[%c8_137] : memref<48xf32, #tpu.memory_space<smem>>
    %697 = vector.broadcast %696 : f32 to vector<16x128xf32>
    %698 = arith.mulf %697, %126 : vector<16x128xf32>
    %699 = arith.addf %695, %698 : vector<16x128xf32>
    %c9_138 = arith.constant 9 : index
    %700 = memref.load %arg5[%c9_138] : memref<48xf32, #tpu.memory_space<smem>>
    %701 = vector.broadcast %700 : f32 to vector<16x128xf32>
    %702 = arith.mulf %701, %615 : vector<16x128xf32>
    %703 = arith.addf %699, %702 : vector<16x128xf32>
    %c10_139 = arith.constant 10 : index
    %704 = memref.load %arg5[%c10_139] : memref<48xf32, #tpu.memory_space<smem>>
    %705 = vector.broadcast %704 : f32 to vector<16x128xf32>
    %706 = arith.mulf %705, %610 : vector<16x128xf32>
    %707 = arith.addf %703, %706 : vector<16x128xf32>
    %c11_140 = arith.constant 11 : index
    %708 = memref.load %arg5[%c11_140] : memref<48xf32, #tpu.memory_space<smem>>
    %709 = vector.broadcast %708 : f32 to vector<16x128xf32>
    %710 = arith.mulf %709, %620 : vector<16x128xf32>
    %711 = arith.addf %707, %710 : vector<16x128xf32>
    %cst_141 = arith.constant 0.000000e+00 : f32
    %712 = vector.broadcast %cst_141 : f32 to vector<16x1xf32>
    %713 = vector.extract_strided_slice %711 {offsets = [0, 0], sizes = [16, 127], strides = [1, 1]} : vector<16x128xf32> to vector<16x127xf32>
    %714 = tpu.concatenate %712, %713 in 1 : vector<16x1xf32>, vector<16x127xf32> -> vector<16x128xf32>
    %cst_142 = arith.constant 0.000000e+00 : f32
    %715 = vector.broadcast %cst_142 : f32 to vector<16x128xf32>
    %716 = arith.select %20, %715, %714 : vector<16x128xi1>, vector<16x128xf32>
    %717 = vector.extract_strided_slice %711 {offsets = [0, 1], sizes = [16, 127], strides = [1, 1]} : vector<16x128xf32> to vector<16x127xf32>
    %cst_143 = arith.constant 0.000000e+00 : f32
    %718 = vector.broadcast %cst_143 : f32 to vector<16x1xf32>
    %719 = tpu.concatenate %717, %718 in 1 : vector<16x127xf32>, vector<16x1xf32> -> vector<16x128xf32>
    %cst_144 = arith.constant 0.000000e+00 : f32
    %720 = vector.broadcast %cst_144 : f32 to vector<16x128xf32>
    %721 = arith.select %38, %720, %719 : vector<16x128xi1>, vector<16x128xf32>
    %c9_145 = arith.constant 9 : index
    %722 = memref.load %arg6[%c9_145] : memref<72xf32, #tpu.memory_space<smem>>
    %723 = vector.broadcast %722 : f32 to vector<16x128xf32>
    %724 = arith.mulf %723, %716 : vector<16x128xf32>
    %c10_146 = arith.constant 10 : index
    %725 = memref.load %arg6[%c10_146] : memref<72xf32, #tpu.memory_space<smem>>
    %726 = vector.broadcast %725 : f32 to vector<16x128xf32>
    %727 = arith.mulf %726, %711 : vector<16x128xf32>
    %728 = arith.addf %724, %727 : vector<16x128xf32>
    %c11_147 = arith.constant 11 : index
    %729 = memref.load %arg6[%c11_147] : memref<72xf32, #tpu.memory_space<smem>>
    %730 = vector.broadcast %729 : f32 to vector<16x128xf32>
    %731 = arith.mulf %730, %721 : vector<16x128xf32>
    %732 = arith.addf %728, %731 : vector<16x128xf32>
    %c12_148 = arith.constant 12 : index
    %733 = memref.load %arg6[%c12_148] : memref<72xf32, #tpu.memory_space<smem>>
    %734 = vector.broadcast %733 : f32 to vector<16x128xf32>
    %735 = arith.mulf %734, %716 : vector<16x128xf32>
    %c13_149 = arith.constant 13 : index
    %736 = memref.load %arg6[%c13_149] : memref<72xf32, #tpu.memory_space<smem>>
    %737 = vector.broadcast %736 : f32 to vector<16x128xf32>
    %738 = arith.mulf %737, %711 : vector<16x128xf32>
    %739 = arith.addf %735, %738 : vector<16x128xf32>
    %c14_150 = arith.constant 14 : index
    %740 = memref.load %arg6[%c14_150] : memref<72xf32, #tpu.memory_space<smem>>
    %741 = vector.broadcast %740 : f32 to vector<16x128xf32>
    %742 = arith.mulf %741, %721 : vector<16x128xf32>
    %743 = arith.addf %739, %742 : vector<16x128xf32>
    %c15_151 = arith.constant 15 : index
    %744 = memref.load %arg6[%c15_151] : memref<72xf32, #tpu.memory_space<smem>>
    %745 = vector.broadcast %744 : f32 to vector<16x128xf32>
    %746 = arith.mulf %745, %716 : vector<16x128xf32>
    %c16_152 = arith.constant 16 : index
    %747 = memref.load %arg6[%c16_152] : memref<72xf32, #tpu.memory_space<smem>>
    %748 = vector.broadcast %747 : f32 to vector<16x128xf32>
    %749 = arith.mulf %748, %711 : vector<16x128xf32>
    %750 = arith.addf %746, %749 : vector<16x128xf32>
    %c17_153 = arith.constant 17 : index
    %751 = memref.load %arg6[%c17_153] : memref<72xf32, #tpu.memory_space<smem>>
    %752 = vector.broadcast %751 : f32 to vector<16x128xf32>
    %753 = arith.mulf %752, %721 : vector<16x128xf32>
    %754 = arith.addf %750, %753 : vector<16x128xf32>
    %755 = arith.addf %666, %732 : vector<16x128xf32>
    %756 = arith.addf %677, %743 : vector<16x128xf32>
    %757 = arith.addf %688, %754 : vector<16x128xf32>
    %c12_154 = arith.constant 12 : index
    %758 = memref.load %arg5[%c12_154] : memref<48xf32, #tpu.memory_space<smem>>
    %759 = vector.broadcast %758 : f32 to vector<16x128xf32>
    %760 = arith.mulf %759, %121 : vector<16x128xf32>
    %c13_155 = arith.constant 13 : index
    %761 = memref.load %arg5[%c13_155] : memref<48xf32, #tpu.memory_space<smem>>
    %762 = vector.broadcast %761 : f32 to vector<16x128xf32>
    %763 = arith.mulf %762, %0 : vector<16x128xf32>
    %764 = arith.addf %760, %763 : vector<16x128xf32>
    %c14_156 = arith.constant 14 : index
    %765 = memref.load %arg5[%c14_156] : memref<48xf32, #tpu.memory_space<smem>>
    %766 = vector.broadcast %765 : f32 to vector<16x128xf32>
    %767 = arith.mulf %766, %126 : vector<16x128xf32>
    %768 = arith.addf %764, %767 : vector<16x128xf32>
    %c15_157 = arith.constant 15 : index
    %769 = memref.load %arg5[%c15_157] : memref<48xf32, #tpu.memory_space<smem>>
    %770 = vector.broadcast %769 : f32 to vector<16x128xf32>
    %771 = arith.mulf %770, %615 : vector<16x128xf32>
    %772 = arith.addf %768, %771 : vector<16x128xf32>
    %c16_158 = arith.constant 16 : index
    %773 = memref.load %arg5[%c16_158] : memref<48xf32, #tpu.memory_space<smem>>
    %774 = vector.broadcast %773 : f32 to vector<16x128xf32>
    %775 = arith.mulf %774, %610 : vector<16x128xf32>
    %776 = arith.addf %772, %775 : vector<16x128xf32>
    %c17_159 = arith.constant 17 : index
    %777 = memref.load %arg5[%c17_159] : memref<48xf32, #tpu.memory_space<smem>>
    %778 = vector.broadcast %777 : f32 to vector<16x128xf32>
    %779 = arith.mulf %778, %620 : vector<16x128xf32>
    %780 = arith.addf %776, %779 : vector<16x128xf32>
    %cst_160 = arith.constant 0.000000e+00 : f32
    %781 = vector.broadcast %cst_160 : f32 to vector<16x1xf32>
    %782 = vector.extract_strided_slice %780 {offsets = [0, 0], sizes = [16, 127], strides = [1, 1]} : vector<16x128xf32> to vector<16x127xf32>
    %783 = tpu.concatenate %781, %782 in 1 : vector<16x1xf32>, vector<16x127xf32> -> vector<16x128xf32>
    %cst_161 = arith.constant 0.000000e+00 : f32
    %784 = vector.broadcast %cst_161 : f32 to vector<16x128xf32>
    %785 = arith.select %20, %784, %783 : vector<16x128xi1>, vector<16x128xf32>
    %786 = vector.extract_strided_slice %780 {offsets = [0, 1], sizes = [16, 127], strides = [1, 1]} : vector<16x128xf32> to vector<16x127xf32>
    %cst_162 = arith.constant 0.000000e+00 : f32
    %787 = vector.broadcast %cst_162 : f32 to vector<16x1xf32>
    %788 = tpu.concatenate %786, %787 in 1 : vector<16x127xf32>, vector<16x1xf32> -> vector<16x128xf32>
    %cst_163 = arith.constant 0.000000e+00 : f32
    %789 = vector.broadcast %cst_163 : f32 to vector<16x128xf32>
    %790 = arith.select %38, %789, %788 : vector<16x128xi1>, vector<16x128xf32>
    %c18_164 = arith.constant 18 : index
    %791 = memref.load %arg6[%c18_164] : memref<72xf32, #tpu.memory_space<smem>>
    %792 = vector.broadcast %791 : f32 to vector<16x128xf32>
    %793 = arith.mulf %792, %785 : vector<16x128xf32>
    %c19_165 = arith.constant 19 : index
    %794 = memref.load %arg6[%c19_165] : memref<72xf32, #tpu.memory_space<smem>>
    %795 = vector.broadcast %794 : f32 to vector<16x128xf32>
    %796 = arith.mulf %795, %780 : vector<16x128xf32>
    %797 = arith.addf %793, %796 : vector<16x128xf32>
    %c20_166 = arith.constant 20 : index
    %798 = memref.load %arg6[%c20_166] : memref<72xf32, #tpu.memory_space<smem>>
    %799 = vector.broadcast %798 : f32 to vector<16x128xf32>
    %800 = arith.mulf %799, %790 : vector<16x128xf32>
    %801 = arith.addf %797, %800 : vector<16x128xf32>
    %c21_167 = arith.constant 21 : index
    %802 = memref.load %arg6[%c21_167] : memref<72xf32, #tpu.memory_space<smem>>
    %803 = vector.broadcast %802 : f32 to vector<16x128xf32>
    %804 = arith.mulf %803, %785 : vector<16x128xf32>
    %c22_168 = arith.constant 22 : index
    %805 = memref.load %arg6[%c22_168] : memref<72xf32, #tpu.memory_space<smem>>
    %806 = vector.broadcast %805 : f32 to vector<16x128xf32>
    %807 = arith.mulf %806, %780 : vector<16x128xf32>
    %808 = arith.addf %804, %807 : vector<16x128xf32>
    %c23_169 = arith.constant 23 : index
    %809 = memref.load %arg6[%c23_169] : memref<72xf32, #tpu.memory_space<smem>>
    %810 = vector.broadcast %809 : f32 to vector<16x128xf32>
    %811 = arith.mulf %810, %790 : vector<16x128xf32>
    %812 = arith.addf %808, %811 : vector<16x128xf32>
    %c24_170 = arith.constant 24 : index
    %813 = memref.load %arg6[%c24_170] : memref<72xf32, #tpu.memory_space<smem>>
    %814 = vector.broadcast %813 : f32 to vector<16x128xf32>
    %815 = arith.mulf %814, %785 : vector<16x128xf32>
    %c25_171 = arith.constant 25 : index
    %816 = memref.load %arg6[%c25_171] : memref<72xf32, #tpu.memory_space<smem>>
    %817 = vector.broadcast %816 : f32 to vector<16x128xf32>
    %818 = arith.mulf %817, %780 : vector<16x128xf32>
    %819 = arith.addf %815, %818 : vector<16x128xf32>
    %c26_172 = arith.constant 26 : index
    %820 = memref.load %arg6[%c26_172] : memref<72xf32, #tpu.memory_space<smem>>
    %821 = vector.broadcast %820 : f32 to vector<16x128xf32>
    %822 = arith.mulf %821, %790 : vector<16x128xf32>
    %823 = arith.addf %819, %822 : vector<16x128xf32>
    %824 = arith.addf %755, %801 : vector<16x128xf32>
    %825 = arith.addf %756, %812 : vector<16x128xf32>
    %826 = arith.addf %757, %823 : vector<16x128xf32>
    %c18_173 = arith.constant 18 : index
    %827 = memref.load %arg5[%c18_173] : memref<48xf32, #tpu.memory_space<smem>>
    %828 = vector.broadcast %827 : f32 to vector<16x128xf32>
    %829 = arith.mulf %828, %121 : vector<16x128xf32>
    %c19_174 = arith.constant 19 : index
    %830 = memref.load %arg5[%c19_174] : memref<48xf32, #tpu.memory_space<smem>>
    %831 = vector.broadcast %830 : f32 to vector<16x128xf32>
    %832 = arith.mulf %831, %0 : vector<16x128xf32>
    %833 = arith.addf %829, %832 : vector<16x128xf32>
    %c20_175 = arith.constant 20 : index
    %834 = memref.load %arg5[%c20_175] : memref<48xf32, #tpu.memory_space<smem>>
    %835 = vector.broadcast %834 : f32 to vector<16x128xf32>
    %836 = arith.mulf %835, %126 : vector<16x128xf32>
    %837 = arith.addf %833, %836 : vector<16x128xf32>
    %c21_176 = arith.constant 21 : index
    %838 = memref.load %arg5[%c21_176] : memref<48xf32, #tpu.memory_space<smem>>
    %839 = vector.broadcast %838 : f32 to vector<16x128xf32>
    %840 = arith.mulf %839, %615 : vector<16x128xf32>
    %841 = arith.addf %837, %840 : vector<16x128xf32>
    %c22_177 = arith.constant 22 : index
    %842 = memref.load %arg5[%c22_177] : memref<48xf32, #tpu.memory_space<smem>>
    %843 = vector.broadcast %842 : f32 to vector<16x128xf32>
    %844 = arith.mulf %843, %610 : vector<16x128xf32>
    %845 = arith.addf %841, %844 : vector<16x128xf32>
    %c23_178 = arith.constant 23 : index
    %846 = memref.load %arg5[%c23_178] : memref<48xf32, #tpu.memory_space<smem>>
    %847 = vector.broadcast %846 : f32 to vector<16x128xf32>
    %848 = arith.mulf %847, %620 : vector<16x128xf32>
    %849 = arith.addf %845, %848 : vector<16x128xf32>
    %cst_179 = arith.constant 0.000000e+00 : f32
    %850 = vector.broadcast %cst_179 : f32 to vector<16x1xf32>
    %851 = vector.extract_strided_slice %849 {offsets = [0, 0], sizes = [16, 127], strides = [1, 1]} : vector<16x128xf32> to vector<16x127xf32>
    %852 = tpu.concatenate %850, %851 in 1 : vector<16x1xf32>, vector<16x127xf32> -> vector<16x128xf32>
    %cst_180 = arith.constant 0.000000e+00 : f32
    %853 = vector.broadcast %cst_180 : f32 to vector<16x128xf32>
    %854 = arith.select %20, %853, %852 : vector<16x128xi1>, vector<16x128xf32>
    %855 = vector.extract_strided_slice %849 {offsets = [0, 1], sizes = [16, 127], strides = [1, 1]} : vector<16x128xf32> to vector<16x127xf32>
    %cst_181 = arith.constant 0.000000e+00 : f32
    %856 = vector.broadcast %cst_181 : f32 to vector<16x1xf32>
    %857 = tpu.concatenate %855, %856 in 1 : vector<16x127xf32>, vector<16x1xf32> -> vector<16x128xf32>
    %cst_182 = arith.constant 0.000000e+00 : f32
    %858 = vector.broadcast %cst_182 : f32 to vector<16x128xf32>
    %859 = arith.select %38, %858, %857 : vector<16x128xi1>, vector<16x128xf32>
    %c27_183 = arith.constant 27 : index
    %860 = memref.load %arg6[%c27_183] : memref<72xf32, #tpu.memory_space<smem>>
    %861 = vector.broadcast %860 : f32 to vector<16x128xf32>
    %862 = arith.mulf %861, %854 : vector<16x128xf32>
    %c28_184 = arith.constant 28 : index
    %863 = memref.load %arg6[%c28_184] : memref<72xf32, #tpu.memory_space<smem>>
    %864 = vector.broadcast %863 : f32 to vector<16x128xf32>
    %865 = arith.mulf %864, %849 : vector<16x128xf32>
    %866 = arith.addf %862, %865 : vector<16x128xf32>
    %c29_185 = arith.constant 29 : index
    %867 = memref.load %arg6[%c29_185] : memref<72xf32, #tpu.memory_space<smem>>
    %868 = vector.broadcast %867 : f32 to vector<16x128xf32>
    %869 = arith.mulf %868, %859 : vector<16x128xf32>
    %870 = arith.addf %866, %869 : vector<16x128xf32>
    %c30_186 = arith.constant 30 : index
    %871 = memref.load %arg6[%c30_186] : memref<72xf32, #tpu.memory_space<smem>>
    %872 = vector.broadcast %871 : f32 to vector<16x128xf32>
    %873 = arith.mulf %872, %854 : vector<16x128xf32>
    %c31_187 = arith.constant 31 : index
    %874 = memref.load %arg6[%c31_187] : memref<72xf32, #tpu.memory_space<smem>>
    %875 = vector.broadcast %874 : f32 to vector<16x128xf32>
    %876 = arith.mulf %875, %849 : vector<16x128xf32>
    %877 = arith.addf %873, %876 : vector<16x128xf32>
    %c32_188 = arith.constant 32 : index
    %878 = memref.load %arg6[%c32_188] : memref<72xf32, #tpu.memory_space<smem>>
    %879 = vector.broadcast %878 : f32 to vector<16x128xf32>
    %880 = arith.mulf %879, %859 : vector<16x128xf32>
    %881 = arith.addf %877, %880 : vector<16x128xf32>
    %c33_189 = arith.constant 33 : index
    %882 = memref.load %arg6[%c33_189] : memref<72xf32, #tpu.memory_space<smem>>
    %883 = vector.broadcast %882 : f32 to vector<16x128xf32>
    %884 = arith.mulf %883, %854 : vector<16x128xf32>
    %c34_190 = arith.constant 34 : index
    %885 = memref.load %arg6[%c34_190] : memref<72xf32, #tpu.memory_space<smem>>
    %886 = vector.broadcast %885 : f32 to vector<16x128xf32>
    %887 = arith.mulf %886, %849 : vector<16x128xf32>
    %888 = arith.addf %884, %887 : vector<16x128xf32>
    %c35_191 = arith.constant 35 : index
    %889 = memref.load %arg6[%c35_191] : memref<72xf32, #tpu.memory_space<smem>>
    %890 = vector.broadcast %889 : f32 to vector<16x128xf32>
    %891 = arith.mulf %890, %859 : vector<16x128xf32>
    %892 = arith.addf %888, %891 : vector<16x128xf32>
    %893 = arith.addf %824, %870 : vector<16x128xf32>
    %894 = arith.addf %825, %881 : vector<16x128xf32>
    %895 = arith.addf %826, %892 : vector<16x128xf32>
    %c24_192 = arith.constant 24 : index
    %896 = memref.load %arg5[%c24_192] : memref<48xf32, #tpu.memory_space<smem>>
    %897 = vector.broadcast %896 : f32 to vector<16x128xf32>
    %898 = arith.mulf %897, %121 : vector<16x128xf32>
    %c25_193 = arith.constant 25 : index
    %899 = memref.load %arg5[%c25_193] : memref<48xf32, #tpu.memory_space<smem>>
    %900 = vector.broadcast %899 : f32 to vector<16x128xf32>
    %901 = arith.mulf %900, %0 : vector<16x128xf32>
    %902 = arith.addf %898, %901 : vector<16x128xf32>
    %c26_194 = arith.constant 26 : index
    %903 = memref.load %arg5[%c26_194] : memref<48xf32, #tpu.memory_space<smem>>
    %904 = vector.broadcast %903 : f32 to vector<16x128xf32>
    %905 = arith.mulf %904, %126 : vector<16x128xf32>
    %906 = arith.addf %902, %905 : vector<16x128xf32>
    %c27_195 = arith.constant 27 : index
    %907 = memref.load %arg5[%c27_195] : memref<48xf32, #tpu.memory_space<smem>>
    %908 = vector.broadcast %907 : f32 to vector<16x128xf32>
    %909 = arith.mulf %908, %615 : vector<16x128xf32>
    %910 = arith.addf %906, %909 : vector<16x128xf32>
    %c28_196 = arith.constant 28 : index
    %911 = memref.load %arg5[%c28_196] : memref<48xf32, #tpu.memory_space<smem>>
    %912 = vector.broadcast %911 : f32 to vector<16x128xf32>
    %913 = arith.mulf %912, %610 : vector<16x128xf32>
    %914 = arith.addf %910, %913 : vector<16x128xf32>
    %c29_197 = arith.constant 29 : index
    %915 = memref.load %arg5[%c29_197] : memref<48xf32, #tpu.memory_space<smem>>
    %916 = vector.broadcast %915 : f32 to vector<16x128xf32>
    %917 = arith.mulf %916, %620 : vector<16x128xf32>
    %918 = arith.addf %914, %917 : vector<16x128xf32>
    %cst_198 = arith.constant 0.000000e+00 : f32
    %919 = vector.broadcast %cst_198 : f32 to vector<16x1xf32>
    %920 = vector.extract_strided_slice %918 {offsets = [0, 0], sizes = [16, 127], strides = [1, 1]} : vector<16x128xf32> to vector<16x127xf32>
    %921 = tpu.concatenate %919, %920 in 1 : vector<16x1xf32>, vector<16x127xf32> -> vector<16x128xf32>
    %cst_199 = arith.constant 0.000000e+00 : f32
    %922 = vector.broadcast %cst_199 : f32 to vector<16x128xf32>
    %923 = arith.select %20, %922, %921 : vector<16x128xi1>, vector<16x128xf32>
    %924 = vector.extract_strided_slice %918 {offsets = [0, 1], sizes = [16, 127], strides = [1, 1]} : vector<16x128xf32> to vector<16x127xf32>
    %cst_200 = arith.constant 0.000000e+00 : f32
    %925 = vector.broadcast %cst_200 : f32 to vector<16x1xf32>
    %926 = tpu.concatenate %924, %925 in 1 : vector<16x127xf32>, vector<16x1xf32> -> vector<16x128xf32>
    %cst_201 = arith.constant 0.000000e+00 : f32
    %927 = vector.broadcast %cst_201 : f32 to vector<16x128xf32>
    %928 = arith.select %38, %927, %926 : vector<16x128xi1>, vector<16x128xf32>
    %c36_202 = arith.constant 36 : index
    %929 = memref.load %arg6[%c36_202] : memref<72xf32, #tpu.memory_space<smem>>
    %930 = vector.broadcast %929 : f32 to vector<16x128xf32>
    %931 = arith.mulf %930, %923 : vector<16x128xf32>
    %c37_203 = arith.constant 37 : index
    %932 = memref.load %arg6[%c37_203] : memref<72xf32, #tpu.memory_space<smem>>
    %933 = vector.broadcast %932 : f32 to vector<16x128xf32>
    %934 = arith.mulf %933, %918 : vector<16x128xf32>
    %935 = arith.addf %931, %934 : vector<16x128xf32>
    %c38_204 = arith.constant 38 : index
    %936 = memref.load %arg6[%c38_204] : memref<72xf32, #tpu.memory_space<smem>>
    %937 = vector.broadcast %936 : f32 to vector<16x128xf32>
    %938 = arith.mulf %937, %928 : vector<16x128xf32>
    %939 = arith.addf %935, %938 : vector<16x128xf32>
    %c39_205 = arith.constant 39 : index
    %940 = memref.load %arg6[%c39_205] : memref<72xf32, #tpu.memory_space<smem>>
    %941 = vector.broadcast %940 : f32 to vector<16x128xf32>
    %942 = arith.mulf %941, %923 : vector<16x128xf32>
    %c40_206 = arith.constant 40 : index
    %943 = memref.load %arg6[%c40_206] : memref<72xf32, #tpu.memory_space<smem>>
    %944 = vector.broadcast %943 : f32 to vector<16x128xf32>
    %945 = arith.mulf %944, %918 : vector<16x128xf32>
    %946 = arith.addf %942, %945 : vector<16x128xf32>
    %c41_207 = arith.constant 41 : index
    %947 = memref.load %arg6[%c41_207] : memref<72xf32, #tpu.memory_space<smem>>
    %948 = vector.broadcast %947 : f32 to vector<16x128xf32>
    %949 = arith.mulf %948, %928 : vector<16x128xf32>
    %950 = arith.addf %946, %949 : vector<16x128xf32>
    %c42_208 = arith.constant 42 : index
    %951 = memref.load %arg6[%c42_208] : memref<72xf32, #tpu.memory_space<smem>>
    %952 = vector.broadcast %951 : f32 to vector<16x128xf32>
    %953 = arith.mulf %952, %923 : vector<16x128xf32>
    %c43_209 = arith.constant 43 : index
    %954 = memref.load %arg6[%c43_209] : memref<72xf32, #tpu.memory_space<smem>>
    %955 = vector.broadcast %954 : f32 to vector<16x128xf32>
    %956 = arith.mulf %955, %918 : vector<16x128xf32>
    %957 = arith.addf %953, %956 : vector<16x128xf32>
    %c44_210 = arith.constant 44 : index
    %958 = memref.load %arg6[%c44_210] : memref<72xf32, #tpu.memory_space<smem>>
    %959 = vector.broadcast %958 : f32 to vector<16x128xf32>
    %960 = arith.mulf %959, %928 : vector<16x128xf32>
    %961 = arith.addf %957, %960 : vector<16x128xf32>
    %962 = arith.addf %893, %939 : vector<16x128xf32>
    %963 = arith.addf %894, %950 : vector<16x128xf32>
    %964 = arith.addf %895, %961 : vector<16x128xf32>
    %c30_211 = arith.constant 30 : index
    %965 = memref.load %arg5[%c30_211] : memref<48xf32, #tpu.memory_space<smem>>
    %966 = vector.broadcast %965 : f32 to vector<16x128xf32>
    %967 = arith.mulf %966, %121 : vector<16x128xf32>
    %c31_212 = arith.constant 31 : index
    %968 = memref.load %arg5[%c31_212] : memref<48xf32, #tpu.memory_space<smem>>
    %969 = vector.broadcast %968 : f32 to vector<16x128xf32>
    %970 = arith.mulf %969, %0 : vector<16x128xf32>
    %971 = arith.addf %967, %970 : vector<16x128xf32>
    %c32_213 = arith.constant 32 : index
    %972 = memref.load %arg5[%c32_213] : memref<48xf32, #tpu.memory_space<smem>>
    %973 = vector.broadcast %972 : f32 to vector<16x128xf32>
    %974 = arith.mulf %973, %126 : vector<16x128xf32>
    %975 = arith.addf %971, %974 : vector<16x128xf32>
    %c33_214 = arith.constant 33 : index
    %976 = memref.load %arg5[%c33_214] : memref<48xf32, #tpu.memory_space<smem>>
    %977 = vector.broadcast %976 : f32 to vector<16x128xf32>
    %978 = arith.mulf %977, %615 : vector<16x128xf32>
    %979 = arith.addf %975, %978 : vector<16x128xf32>
    %c34_215 = arith.constant 34 : index
    %980 = memref.load %arg5[%c34_215] : memref<48xf32, #tpu.memory_space<smem>>
    %981 = vector.broadcast %980 : f32 to vector<16x128xf32>
    %982 = arith.mulf %981, %610 : vector<16x128xf32>
    %983 = arith.addf %979, %982 : vector<16x128xf32>
    %c35_216 = arith.constant 35 : index
    %984 = memref.load %arg5[%c35_216] : memref<48xf32, #tpu.memory_space<smem>>
    %985 = vector.broadcast %984 : f32 to vector<16x128xf32>
    %986 = arith.mulf %985, %620 : vector<16x128xf32>
    %987 = arith.addf %983, %986 : vector<16x128xf32>
    %cst_217 = arith.constant 0.000000e+00 : f32
    %988 = vector.broadcast %cst_217 : f32 to vector<16x1xf32>
    %989 = vector.extract_strided_slice %987 {offsets = [0, 0], sizes = [16, 127], strides = [1, 1]} : vector<16x128xf32> to vector<16x127xf32>
    %990 = tpu.concatenate %988, %989 in 1 : vector<16x1xf32>, vector<16x127xf32> -> vector<16x128xf32>
    %cst_218 = arith.constant 0.000000e+00 : f32
    %991 = vector.broadcast %cst_218 : f32 to vector<16x128xf32>
    %992 = arith.select %20, %991, %990 : vector<16x128xi1>, vector<16x128xf32>
    %993 = vector.extract_strided_slice %987 {offsets = [0, 1], sizes = [16, 127], strides = [1, 1]} : vector<16x128xf32> to vector<16x127xf32>
    %cst_219 = arith.constant 0.000000e+00 : f32
    %994 = vector.broadcast %cst_219 : f32 to vector<16x1xf32>
    %995 = tpu.concatenate %993, %994 in 1 : vector<16x127xf32>, vector<16x1xf32> -> vector<16x128xf32>
    %cst_220 = arith.constant 0.000000e+00 : f32
    %996 = vector.broadcast %cst_220 : f32 to vector<16x128xf32>
    %997 = arith.select %38, %996, %995 : vector<16x128xi1>, vector<16x128xf32>
    %c45_221 = arith.constant 45 : index
    %998 = memref.load %arg6[%c45_221] : memref<72xf32, #tpu.memory_space<smem>>
    %999 = vector.broadcast %998 : f32 to vector<16x128xf32>
    %1000 = arith.mulf %999, %992 : vector<16x128xf32>
    %c46_222 = arith.constant 46 : index
    %1001 = memref.load %arg6[%c46_222] : memref<72xf32, #tpu.memory_space<smem>>
    %1002 = vector.broadcast %1001 : f32 to vector<16x128xf32>
    %1003 = arith.mulf %1002, %987 : vector<16x128xf32>
    %1004 = arith.addf %1000, %1003 : vector<16x128xf32>
    %c47_223 = arith.constant 47 : index
    %1005 = memref.load %arg6[%c47_223] : memref<72xf32, #tpu.memory_space<smem>>
    %1006 = vector.broadcast %1005 : f32 to vector<16x128xf32>
    %1007 = arith.mulf %1006, %997 : vector<16x128xf32>
    %1008 = arith.addf %1004, %1007 : vector<16x128xf32>
    %c48_224 = arith.constant 48 : index
    %1009 = memref.load %arg6[%c48_224] : memref<72xf32, #tpu.memory_space<smem>>
    %1010 = vector.broadcast %1009 : f32 to vector<16x128xf32>
    %1011 = arith.mulf %1010, %992 : vector<16x128xf32>
    %c49_225 = arith.constant 49 : index
    %1012 = memref.load %arg6[%c49_225] : memref<72xf32, #tpu.memory_space<smem>>
    %1013 = vector.broadcast %1012 : f32 to vector<16x128xf32>
    %1014 = arith.mulf %1013, %987 : vector<16x128xf32>
    %1015 = arith.addf %1011, %1014 : vector<16x128xf32>
    %c50_226 = arith.constant 50 : index
    %1016 = memref.load %arg6[%c50_226] : memref<72xf32, #tpu.memory_space<smem>>
    %1017 = vector.broadcast %1016 : f32 to vector<16x128xf32>
    %1018 = arith.mulf %1017, %997 : vector<16x128xf32>
    %1019 = arith.addf %1015, %1018 : vector<16x128xf32>
    %c51_227 = arith.constant 51 : index
    %1020 = memref.load %arg6[%c51_227] : memref<72xf32, #tpu.memory_space<smem>>
    %1021 = vector.broadcast %1020 : f32 to vector<16x128xf32>
    %1022 = arith.mulf %1021, %992 : vector<16x128xf32>
    %c52_228 = arith.constant 52 : index
    %1023 = memref.load %arg6[%c52_228] : memref<72xf32, #tpu.memory_space<smem>>
    %1024 = vector.broadcast %1023 : f32 to vector<16x128xf32>
    %1025 = arith.mulf %1024, %987 : vector<16x128xf32>
    %1026 = arith.addf %1022, %1025 : vector<16x128xf32>
    %c53_229 = arith.constant 53 : index
    %1027 = memref.load %arg6[%c53_229] : memref<72xf32, #tpu.memory_space<smem>>
    %1028 = vector.broadcast %1027 : f32 to vector<16x128xf32>
    %1029 = arith.mulf %1028, %997 : vector<16x128xf32>
    %1030 = arith.addf %1026, %1029 : vector<16x128xf32>
    %1031 = arith.addf %962, %1008 : vector<16x128xf32>
    %1032 = arith.addf %963, %1019 : vector<16x128xf32>
    %1033 = arith.addf %964, %1030 : vector<16x128xf32>
    %c36_230 = arith.constant 36 : index
    %1034 = memref.load %arg5[%c36_230] : memref<48xf32, #tpu.memory_space<smem>>
    %1035 = vector.broadcast %1034 : f32 to vector<16x128xf32>
    %1036 = arith.mulf %1035, %121 : vector<16x128xf32>
    %c37_231 = arith.constant 37 : index
    %1037 = memref.load %arg5[%c37_231] : memref<48xf32, #tpu.memory_space<smem>>
    %1038 = vector.broadcast %1037 : f32 to vector<16x128xf32>
    %1039 = arith.mulf %1038, %0 : vector<16x128xf32>
    %1040 = arith.addf %1036, %1039 : vector<16x128xf32>
    %c38_232 = arith.constant 38 : index
    %1041 = memref.load %arg5[%c38_232] : memref<48xf32, #tpu.memory_space<smem>>
    %1042 = vector.broadcast %1041 : f32 to vector<16x128xf32>
    %1043 = arith.mulf %1042, %126 : vector<16x128xf32>
    %1044 = arith.addf %1040, %1043 : vector<16x128xf32>
    %c39_233 = arith.constant 39 : index
    %1045 = memref.load %arg5[%c39_233] : memref<48xf32, #tpu.memory_space<smem>>
    %1046 = vector.broadcast %1045 : f32 to vector<16x128xf32>
    %1047 = arith.mulf %1046, %615 : vector<16x128xf32>
    %1048 = arith.addf %1044, %1047 : vector<16x128xf32>
    %c40_234 = arith.constant 40 : index
    %1049 = memref.load %arg5[%c40_234] : memref<48xf32, #tpu.memory_space<smem>>
    %1050 = vector.broadcast %1049 : f32 to vector<16x128xf32>
    %1051 = arith.mulf %1050, %610 : vector<16x128xf32>
    %1052 = arith.addf %1048, %1051 : vector<16x128xf32>
    %c41_235 = arith.constant 41 : index
    %1053 = memref.load %arg5[%c41_235] : memref<48xf32, #tpu.memory_space<smem>>
    %1054 = vector.broadcast %1053 : f32 to vector<16x128xf32>
    %1055 = arith.mulf %1054, %620 : vector<16x128xf32>
    %1056 = arith.addf %1052, %1055 : vector<16x128xf32>
    %cst_236 = arith.constant 0.000000e+00 : f32
    %1057 = vector.broadcast %cst_236 : f32 to vector<16x1xf32>
    %1058 = vector.extract_strided_slice %1056 {offsets = [0, 0], sizes = [16, 127], strides = [1, 1]} : vector<16x128xf32> to vector<16x127xf32>
    %1059 = tpu.concatenate %1057, %1058 in 1 : vector<16x1xf32>, vector<16x127xf32> -> vector<16x128xf32>
    %cst_237 = arith.constant 0.000000e+00 : f32
    %1060 = vector.broadcast %cst_237 : f32 to vector<16x128xf32>
    %1061 = arith.select %20, %1060, %1059 : vector<16x128xi1>, vector<16x128xf32>
    %1062 = vector.extract_strided_slice %1056 {offsets = [0, 1], sizes = [16, 127], strides = [1, 1]} : vector<16x128xf32> to vector<16x127xf32>
    %cst_238 = arith.constant 0.000000e+00 : f32
    %1063 = vector.broadcast %cst_238 : f32 to vector<16x1xf32>
    %1064 = tpu.concatenate %1062, %1063 in 1 : vector<16x127xf32>, vector<16x1xf32> -> vector<16x128xf32>
    %cst_239 = arith.constant 0.000000e+00 : f32
    %1065 = vector.broadcast %cst_239 : f32 to vector<16x128xf32>
    %1066 = arith.select %38, %1065, %1064 : vector<16x128xi1>, vector<16x128xf32>
    %c54_240 = arith.constant 54 : index
    %1067 = memref.load %arg6[%c54_240] : memref<72xf32, #tpu.memory_space<smem>>
    %1068 = vector.broadcast %1067 : f32 to vector<16x128xf32>
    %1069 = arith.mulf %1068, %1061 : vector<16x128xf32>
    %c55_241 = arith.constant 55 : index
    %1070 = memref.load %arg6[%c55_241] : memref<72xf32, #tpu.memory_space<smem>>
    %1071 = vector.broadcast %1070 : f32 to vector<16x128xf32>
    %1072 = arith.mulf %1071, %1056 : vector<16x128xf32>
    %1073 = arith.addf %1069, %1072 : vector<16x128xf32>
    %c56_242 = arith.constant 56 : index
    %1074 = memref.load %arg6[%c56_242] : memref<72xf32, #tpu.memory_space<smem>>
    %1075 = vector.broadcast %1074 : f32 to vector<16x128xf32>
    %1076 = arith.mulf %1075, %1066 : vector<16x128xf32>
    %1077 = arith.addf %1073, %1076 : vector<16x128xf32>
    %c57_243 = arith.constant 57 : index
    %1078 = memref.load %arg6[%c57_243] : memref<72xf32, #tpu.memory_space<smem>>
    %1079 = vector.broadcast %1078 : f32 to vector<16x128xf32>
    %1080 = arith.mulf %1079, %1061 : vector<16x128xf32>
    %c58_244 = arith.constant 58 : index
    %1081 = memref.load %arg6[%c58_244] : memref<72xf32, #tpu.memory_space<smem>>
    %1082 = vector.broadcast %1081 : f32 to vector<16x128xf32>
    %1083 = arith.mulf %1082, %1056 : vector<16x128xf32>
    %1084 = arith.addf %1080, %1083 : vector<16x128xf32>
    %c59_245 = arith.constant 59 : index
    %1085 = memref.load %arg6[%c59_245] : memref<72xf32, #tpu.memory_space<smem>>
    %1086 = vector.broadcast %1085 : f32 to vector<16x128xf32>
    %1087 = arith.mulf %1086, %1066 : vector<16x128xf32>
    %1088 = arith.addf %1084, %1087 : vector<16x128xf32>
    %c60_246 = arith.constant 60 : index
    %1089 = memref.load %arg6[%c60_246] : memref<72xf32, #tpu.memory_space<smem>>
    %1090 = vector.broadcast %1089 : f32 to vector<16x128xf32>
    %1091 = arith.mulf %1090, %1061 : vector<16x128xf32>
    %c61_247 = arith.constant 61 : index
    %1092 = memref.load %arg6[%c61_247] : memref<72xf32, #tpu.memory_space<smem>>
    %1093 = vector.broadcast %1092 : f32 to vector<16x128xf32>
    %1094 = arith.mulf %1093, %1056 : vector<16x128xf32>
    %1095 = arith.addf %1091, %1094 : vector<16x128xf32>
    %c62_248 = arith.constant 62 : index
    %1096 = memref.load %arg6[%c62_248] : memref<72xf32, #tpu.memory_space<smem>>
    %1097 = vector.broadcast %1096 : f32 to vector<16x128xf32>
    %1098 = arith.mulf %1097, %1066 : vector<16x128xf32>
    %1099 = arith.addf %1095, %1098 : vector<16x128xf32>
    %1100 = arith.addf %1031, %1077 : vector<16x128xf32>
    %1101 = arith.addf %1032, %1088 : vector<16x128xf32>
    %1102 = arith.addf %1033, %1099 : vector<16x128xf32>
    %c42_249 = arith.constant 42 : index
    %1103 = memref.load %arg5[%c42_249] : memref<48xf32, #tpu.memory_space<smem>>
    %1104 = vector.broadcast %1103 : f32 to vector<16x128xf32>
    %1105 = arith.mulf %1104, %121 : vector<16x128xf32>
    %c43_250 = arith.constant 43 : index
    %1106 = memref.load %arg5[%c43_250] : memref<48xf32, #tpu.memory_space<smem>>
    %1107 = vector.broadcast %1106 : f32 to vector<16x128xf32>
    %1108 = arith.mulf %1107, %0 : vector<16x128xf32>
    %1109 = arith.addf %1105, %1108 : vector<16x128xf32>
    %c44_251 = arith.constant 44 : index
    %1110 = memref.load %arg5[%c44_251] : memref<48xf32, #tpu.memory_space<smem>>
    %1111 = vector.broadcast %1110 : f32 to vector<16x128xf32>
    %1112 = arith.mulf %1111, %126 : vector<16x128xf32>
    %1113 = arith.addf %1109, %1112 : vector<16x128xf32>
    %c45_252 = arith.constant 45 : index
    %1114 = memref.load %arg5[%c45_252] : memref<48xf32, #tpu.memory_space<smem>>
    %1115 = vector.broadcast %1114 : f32 to vector<16x128xf32>
    %1116 = arith.mulf %1115, %615 : vector<16x128xf32>
    %1117 = arith.addf %1113, %1116 : vector<16x128xf32>
    %c46_253 = arith.constant 46 : index
    %1118 = memref.load %arg5[%c46_253] : memref<48xf32, #tpu.memory_space<smem>>
    %1119 = vector.broadcast %1118 : f32 to vector<16x128xf32>
    %1120 = arith.mulf %1119, %610 : vector<16x128xf32>
    %1121 = arith.addf %1117, %1120 : vector<16x128xf32>
    %c47_254 = arith.constant 47 : index
    %1122 = memref.load %arg5[%c47_254] : memref<48xf32, #tpu.memory_space<smem>>
    %1123 = vector.broadcast %1122 : f32 to vector<16x128xf32>
    %1124 = arith.mulf %1123, %620 : vector<16x128xf32>
    %1125 = arith.addf %1121, %1124 : vector<16x128xf32>
    %cst_255 = arith.constant 0.000000e+00 : f32
    %1126 = vector.broadcast %cst_255 : f32 to vector<16x1xf32>
    %1127 = vector.extract_strided_slice %1125 {offsets = [0, 0], sizes = [16, 127], strides = [1, 1]} : vector<16x128xf32> to vector<16x127xf32>
    %1128 = tpu.concatenate %1126, %1127 in 1 : vector<16x1xf32>, vector<16x127xf32> -> vector<16x128xf32>
    %cst_256 = arith.constant 0.000000e+00 : f32
    %1129 = vector.broadcast %cst_256 : f32 to vector<16x128xf32>
    %1130 = arith.select %20, %1129, %1128 : vector<16x128xi1>, vector<16x128xf32>
    %1131 = vector.extract_strided_slice %1125 {offsets = [0, 1], sizes = [16, 127], strides = [1, 1]} : vector<16x128xf32> to vector<16x127xf32>
    %cst_257 = arith.constant 0.000000e+00 : f32
    %1132 = vector.broadcast %cst_257 : f32 to vector<16x1xf32>
    %1133 = tpu.concatenate %1131, %1132 in 1 : vector<16x127xf32>, vector<16x1xf32> -> vector<16x128xf32>
    %cst_258 = arith.constant 0.000000e+00 : f32
    %1134 = vector.broadcast %cst_258 : f32 to vector<16x128xf32>
    %1135 = arith.select %38, %1134, %1133 : vector<16x128xi1>, vector<16x128xf32>
    %c63_259 = arith.constant 63 : index
    %1136 = memref.load %arg6[%c63_259] : memref<72xf32, #tpu.memory_space<smem>>
    %1137 = vector.broadcast %1136 : f32 to vector<16x128xf32>
    %1138 = arith.mulf %1137, %1130 : vector<16x128xf32>
    %c64_260 = arith.constant 64 : index
    %1139 = memref.load %arg6[%c64_260] : memref<72xf32, #tpu.memory_space<smem>>
    %1140 = vector.broadcast %1139 : f32 to vector<16x128xf32>
    %1141 = arith.mulf %1140, %1125 : vector<16x128xf32>
    %1142 = arith.addf %1138, %1141 : vector<16x128xf32>
    %c65_261 = arith.constant 65 : index
    %1143 = memref.load %arg6[%c65_261] : memref<72xf32, #tpu.memory_space<smem>>
    %1144 = vector.broadcast %1143 : f32 to vector<16x128xf32>
    %1145 = arith.mulf %1144, %1135 : vector<16x128xf32>
    %1146 = arith.addf %1142, %1145 : vector<16x128xf32>
    %c66_262 = arith.constant 66 : index
    %1147 = memref.load %arg6[%c66_262] : memref<72xf32, #tpu.memory_space<smem>>
    %1148 = vector.broadcast %1147 : f32 to vector<16x128xf32>
    %1149 = arith.mulf %1148, %1130 : vector<16x128xf32>
    %c67_263 = arith.constant 67 : index
    %1150 = memref.load %arg6[%c67_263] : memref<72xf32, #tpu.memory_space<smem>>
    %1151 = vector.broadcast %1150 : f32 to vector<16x128xf32>
    %1152 = arith.mulf %1151, %1125 : vector<16x128xf32>
    %1153 = arith.addf %1149, %1152 : vector<16x128xf32>
    %c68_264 = arith.constant 68 : index
    %1154 = memref.load %arg6[%c68_264] : memref<72xf32, #tpu.memory_space<smem>>
    %1155 = vector.broadcast %1154 : f32 to vector<16x128xf32>
    %1156 = arith.mulf %1155, %1135 : vector<16x128xf32>
    %1157 = arith.addf %1153, %1156 : vector<16x128xf32>
    %c69_265 = arith.constant 69 : index
    %1158 = memref.load %arg6[%c69_265] : memref<72xf32, #tpu.memory_space<smem>>
    %1159 = vector.broadcast %1158 : f32 to vector<16x128xf32>
    %1160 = arith.mulf %1159, %1130 : vector<16x128xf32>
    %c70_266 = arith.constant 70 : index
    %1161 = memref.load %arg6[%c70_266] : memref<72xf32, #tpu.memory_space<smem>>
    %1162 = vector.broadcast %1161 : f32 to vector<16x128xf32>
    %1163 = arith.mulf %1162, %1125 : vector<16x128xf32>
    %1164 = arith.addf %1160, %1163 : vector<16x128xf32>
    %c71_267 = arith.constant 71 : index
    %1165 = memref.load %arg6[%c71_267] : memref<72xf32, #tpu.memory_space<smem>>
    %1166 = vector.broadcast %1165 : f32 to vector<16x128xf32>
    %1167 = arith.mulf %1166, %1135 : vector<16x128xf32>
    %1168 = arith.addf %1164, %1167 : vector<16x128xf32>
    %1169 = arith.addf %1100, %1146 : vector<16x128xf32>
    %1170 = arith.addf %1101, %1157 : vector<16x128xf32>
    %1171 = arith.addf %1102, %1168 : vector<16x128xf32>
    %cst_268 = arith.constant 0.000000e+00 : f32
    %1172 = vector.broadcast %cst_268 : f32 to vector<16x16xf32>
    %1173 = vector.extract_strided_slice %1169 {offsets = [0, 0], sizes = [16, 112], strides = [1, 1]} : vector<16x128xf32> to vector<16x112xf32>
    %1174 = tpu.concatenate %1172, %1173 in 1 : vector<16x16xf32>, vector<16x112xf32> -> vector<16x128xf32>
    %cst_269 = arith.constant 0.000000e+00 : f32
    %1175 = vector.broadcast %cst_269 : f32 to vector<1x128xf32>
    %1176 = vector.extract_strided_slice %1169 {offsets = [0, 0], sizes = [15, 128], strides = [1, 1]} : vector<16x128xf32> to vector<15x128xf32>
    %1177 = tpu.concatenate %1175, %1176 in 0 : vector<1x128xf32>, vector<15x128xf32> -> vector<16x128xf32>
    %1178 = vector.extract_strided_slice %1177 {offsets = [0, 112], sizes = [16, 16], strides = [1, 1]} : vector<16x128xf32> to vector<16x16xf32>
    %cst_270 = arith.constant 0.000000e+00 : f32
    %1179 = vector.broadcast %cst_270 : f32 to vector<16x112xf32>
    %1180 = tpu.concatenate %1178, %1179 in 1 : vector<16x16xf32>, vector<16x112xf32> -> vector<16x128xf32>
    %cst_271 = arith.constant 0.000000e+00 : f32
    %1181 = vector.broadcast %cst_271 : f32 to vector<16x128xf32>
    %1182 = arith.select %59, %1181, %1180 : vector<16x128xi1>, vector<16x128xf32>
    %1183 = arith.addf %1174, %1182 : vector<16x128xf32>
    %1184 = arith.addf %1170, %1183 : vector<16x128xf32>
    %1185 = vector.extract_strided_slice %1171 {offsets = [0, 16], sizes = [16, 112], strides = [1, 1]} : vector<16x128xf32> to vector<16x112xf32>
    %cst_272 = arith.constant 0.000000e+00 : f32
    %1186 = vector.broadcast %cst_272 : f32 to vector<16x16xf32>
    %1187 = tpu.concatenate %1185, %1186 in 1 : vector<16x112xf32>, vector<16x16xf32> -> vector<16x128xf32>
    %1188 = vector.extract_strided_slice %1171 {offsets = [1, 0], sizes = [15, 128], strides = [1, 1]} : vector<16x128xf32> to vector<15x128xf32>
    %cst_273 = arith.constant 0.000000e+00 : f32
    %1189 = vector.broadcast %cst_273 : f32 to vector<1x128xf32>
    %1190 = tpu.concatenate %1188, %1189 in 0 : vector<15x128xf32>, vector<1x128xf32> -> vector<16x128xf32>
    %cst_274 = arith.constant 0.000000e+00 : f32
    %1191 = vector.broadcast %cst_274 : f32 to vector<16x112xf32>
    %1192 = vector.extract_strided_slice %1190 {offsets = [0, 0], sizes = [16, 16], strides = [1, 1]} : vector<16x128xf32> to vector<16x16xf32>
    %1193 = tpu.concatenate %1191, %1192 in 1 : vector<16x112xf32>, vector<16x16xf32> -> vector<16x128xf32>
    %cst_275 = arith.constant 0.000000e+00 : f32
    %1194 = vector.broadcast %cst_275 : f32 to vector<16x128xf32>
    %1195 = arith.select %80, %1194, %1193 : vector<16x128xi1>, vector<16x128xf32>
    %1196 = arith.addf %1187, %1195 : vector<16x128xf32>
    %1197 = arith.addf %1184, %1196 : vector<16x128xf32>
    %1198 = arith.addf %1197, %622 : vector<16x128xf32>
    %cst_276 = arith.constant 0.000000e+00 : f32
    %1199 = vector.broadcast %cst_276 : f32 to vector<16x128xf32>
    %1200 = arith.maximumf %1198, %1199 : vector<16x128xf32>
    %c0_277 = arith.constant 0 : index
    %1201 = memref.load %arg7[%c0_277] : memref<4xf32, #tpu.memory_space<smem>>
    %1202 = vector.broadcast %1201 : f32 to vector<16x128xf32>
    %1203 = arith.mulf %1202, %0 : vector<16x128xf32>
    %c1_278 = arith.constant 1 : index
    %1204 = memref.load %arg7[%c1_278] : memref<4xf32, #tpu.memory_space<smem>>
    %1205 = vector.broadcast %1204 : f32 to vector<16x128xf32>
    %1206 = arith.mulf %1205, %610 : vector<16x128xf32>
    %1207 = arith.addf %1203, %1206 : vector<16x128xf32>
    %c2_279 = arith.constant 2 : index
    %1208 = memref.load %arg7[%c2_279] : memref<4xf32, #tpu.memory_space<smem>>
    %1209 = vector.broadcast %1208 : f32 to vector<16x128xf32>
    %1210 = arith.mulf %1209, %1200 : vector<16x128xf32>
    %1211 = arith.addf %1207, %1210 : vector<16x128xf32>
    %c3_280 = arith.constant 3 : index
    %1212 = memref.load %arg7[%c3_280] : memref<4xf32, #tpu.memory_space<smem>>
    %1213 = vector.broadcast %1212 : f32 to vector<16x128xf32>
    %1214 = arith.addf %1211, %1213 : vector<16x128xf32>
    %c0_281 = arith.constant 0 : index
    %c0_282 = arith.constant 0 : index
    %1215 = vector.load %arg8[%c0_281, %c0_282] : memref<16x128xf32, #tpu.memory_space<vmem>>, vector<16x128xf32>
    tpu.vector_store %arg8[%c0_281, %c0_282], %1214 {strides = array<i32>} : memref<16x128xf32, #tpu.memory_space<vmem>>, vector<16x128xf32>,
    return
  }
  func.func @transform_0(%arg0: i32) -> (i32, i32) {
    %c0_i32 = arith.constant 0 : i32
    %c0_i32_0 = arith.constant 0 : i32
    return %arg0, %c0_i32 : i32, i32
  }
  func.func @transform_1(%arg0: i32) -> (i32, i32, i32) {
    %c0_i32 = arith.constant 0 : i32
    %c0_i32_0 = arith.constant 0 : i32
    %c0_i32_1 = arith.constant 0 : i32
    %c0_i32_2 = arith.constant 0 : i32
    return %c0_i32, %c0_i32_0, %c0_i32_1 : i32, i32, i32
  }
  func.func @transform_2(%arg0: i32) -> i32 {
    %c0_i32 = arith.constant 0 : i32
    %c0_i32_0 = arith.constant 0 : i32
    return %c0_i32 : i32
  }
  func.func @transform_3(%arg0: i32) -> i32 {
    %c0_i32 = arith.constant 0 : i32
    %c0_i32_0 = arith.constant 0 : i32
    return %c0_i32 : i32
  }
  func.func @transform_4(%arg0: i32) -> i32 {
    %c0_i32 = arith.constant 0 : i32
    %c0_i32_0 = arith.constant 0 : i32
    return %c0_i32 : i32
  }
  func.func @transform_5(%arg0: i32) -> i32 {
    %c0_i32 = arith.constant 0 : i32
    %c0_i32_0 = arith.constant 0 : i32
    return %c0_i32 : i32
  }
  func.func @transform_6(%arg0: i32) -> i32 {
    %c0_i32 = arith.constant 0 : i32
    %c0_i32_0 = arith.constant 0 : i32
    return %c0_i32 : i32
  }
  func.func @transform_7(%arg0: i32) -> (i32, i32) {
    %c0_i32 = arith.constant 0 : i32
    %c0_i32_0 = arith.constant 0 : i32
    return %arg0, %c0_i32 : i32, i32
  }
}

</mosaic_0001>

<llo_original>
// kernel: tpu_custom_call.1
$region0: #{tpu_custom_call.1}
  #allocation0 [shape = 'u32[]', space=smem, size = 0x4, offset = 0x4, fixed_abs, tag = 'smem constant byte address 0x4 - core index']
  #allocation1 [shape = 'u32[144,128]{1,0:T(1,128)}', space=vmem, size = 0x12000, scoped, tag = 'internal scratch']
  %s0 = inlined_call_operand.hbm [shape: f32[16,128], index: 0, kind: input, shape index: {}]
  %s1 = inlined_call_operand.hbm [shape: f32[2,16,128], index: 1, kind: input, shape index: {}]
  %s2 = inlined_call_operand.vmem [shape: f32[24], index: 2, kind: input, shape index: {}]
  %s3 = inlined_call_operand.vmem [shape: f32[72], index: 3, kind: input, shape index: {}]
  %s4 = inlined_call_operand.vmem [shape: f32[48], index: 4, kind: input, shape index: {}]
  %s5 = inlined_call_operand.vmem [shape: f32[72], index: 5, kind: input, shape index: {}]
  %s6 = inlined_call_operand.vmem [shape: f32[4], index: 6, kind: input, shape index: {}]
  %s7 = inlined_call_operand.hbm [shape: f32[16,128], index: 7, kind: output, shape index: {}]
  %s8 = sld [smem:[#allocation0]]
  $region66: #{tpu_custom_call.1} parent=0
    _
  %s10 = ssub.s32 1, %s8
  %s11 = scalar_select 0, %s10, %s8
  $region1: #{tpu_custom_call.1} parent=0
    #allocation2 [shape = 'u8[8192]{0}', space=vmem, size = 0x2000, scoped, tag = 'input window, operand 0, single buffered']
    #allocation3 [shape = 's32[1]{0}', space=sflag, size = 0x4, scoped, tag = 'scoped memory for tpu_custom_call.1']
    #allocation4 [shape = 's32[1]{0}', space=sflag, size = 0x4, scoped, tag = 'scoped memory for tpu_custom_call.1']
    #allocation5 [shape = 's32[1]{0}', space=sflag, size = 0x4, scoped, tag = 'scoped memory for tpu_custom_call.1']
    #allocation6 [shape = 'u8[16384]{0}', space=vmem, size = 0x4000, scoped, tag = 'input window, operand 1, single buffered']
    #allocation7 [shape = 's32[1]{0}', space=sflag, size = 0x4, scoped, tag = 'scoped memory for tpu_custom_call.1']
    #allocation8 [shape = 'u8[512]{0}', space=smem, size = 0x200, scoped, tag = 'input window, operand 2, single buffered']
    #allocation9 [shape = 'u8[512]{0}', space=smem, size = 0x200, scoped, tag = 'input window, operand 3, single buffered']
    #allocation10 [shape = 's32[1]{0}', space=sflag, size = 0x4, scoped, tag = 'scoped memory for tpu_custom_call.1']
    #allocation11 [shape = 'u8[512]{0}', space=smem, size = 0x200, scoped, tag = 'input window, operand 4, single buffered']
    #allocation12 [shape = 'u8[512]{0}', space=smem, size = 0x200, scoped, tag = 'input window, operand 5, single buffered']
    #allocation13 [shape = 's32[1]{0}', space=sflag, size = 0x4, scoped, tag = 'scoped memory for tpu_custom_call.1']
    #allocation14 [shape = 'u8[512]{0}', space=smem, size = 0x200, scoped, tag = 'input window, operand 6, single buffered']
    #allocation15 [shape = 'u8[8192]{0}', space=vmem, size = 0x2000, scoped, tag = 'output window, operand 0, single buffered']
    %12 = vsyncpa [#allocation3], 0
    %13 = vsyncpa [#allocation7], 0
    %14 = vsyncpa [#allocation5], 0
    %15 = vsyncpa [#allocation10], 0
    %16 = vsyncpa [#allocation13], 0
    %17 = vsyncpa [#allocation4], 0
    // Predicated region
    $region2: #{tpu_custom_call.1} parent=1 // pred_check
      _
    $region3: #{tpu_custom_call.1} parent=1 // pred_check_branch
      %19 = sbr.rel (0) target = $region5
    $region4: #{tpu_custom_call.1} parent=1 // pred_region
      %s21 = ssub.s32 256, 256
      %22 = vsyncadd [#allocation3], %s21
      %s23 = sshll.u32 [#allocation2], 4
      %s24 = int_to_ptr.vmem [resolvable:$true] %s23
      %29 = dma.hbm_to_vmem [thread:$0]  %s0, 256, %s24, [#allocation3], 128, 128, 8
    $region5: #{tpu_custom_call.1} parent=1 // pred_fallthru
      _
    // Predicated region
    $region6: #{tpu_custom_call.1} parent=1 // pred_check
      _
    $region7: #{tpu_custom_call.1} parent=1 // pred_check_branch
      %31 = sbr.rel (0) target = $region9
    $region8: #{tpu_custom_call.1} parent=1 // pred_region
      %s33 = ssub.s32 512, 512
      %34 = vsyncadd [#allocation7], %s33
      %s35 = sshll.u32 [#allocation6], 4
      %s36 = int_to_ptr.vmem [resolvable:$true] %s35
      %41 = dma.hbm_to_vmem [thread:$0]  %s1, 512, %s36, [#allocation7], 128, 128, 8
    $region9: #{tpu_custom_call.1} parent=1 // pred_fallthru
      _
    // Predicated region
    $region10: #{tpu_custom_call.1} parent=1 // pred_check
      _
    $region11: #{tpu_custom_call.1} parent=1 // pred_check_branch
      %43 = sbr.rel (0) target = $region13
    $region12: #{tpu_custom_call.1} parent=1 // pred_region
      %s45 = ssub.s32 16, 16
      %46 = vsyncadd [#allocation5], %s45
      %s48 = sshll.u32 %s2, 4
      %s49 = int_to_ptr.vmem [resolvable:$true] %s48
      %51 = dma.vmem_to_smem %s49, 16, [#allocation8], [#allocation5]
    $region13: #{tpu_custom_call.1} parent=1 // pred_fallthru
      _
    // Predicated region
    $region14: #{tpu_custom_call.1} parent=1 // pred_check
      _
    $region15: #{tpu_custom_call.1} parent=1 // pred_check_branch
      %53 = sbr.rel (0) target = $region17
    $region16: #{tpu_custom_call.1} parent=1 // pred_region
      %s55 = ssub.s32 16, 16
      %56 = vsyncadd [#allocation10], %s55
      %s58 = sshll.u32 %s3, 4
      %s59 = int_to_ptr.vmem [resolvable:$true] %s58
      %61 = dma.vmem_to_smem %s59, 16, [#allocation9], [#allocation10]
    $region17: #{tpu_custom_call.1} parent=1 // pred_fallthru
      _
    // Predicated region
    $region18: #{tpu_custom_call.1} parent=1 // pred_check
      _
    $region19: #{tpu_custom_call.1} parent=1 // pred_check_branch
      %63 = sbr.rel (0) target = $region21
    $region20: #{tpu_custom_call.1} parent=1 // pred_region
      %s65 = ssub.s32 16, 16
      %66 = vsyncadd [#allocation10], %s65
      %s68 = sshll.u32 %s4, 4
      %s69 = int_to_ptr.vmem [resolvable:$true] %s68
      %71 = dma.vmem_to_smem %s69, 16, [#allocation11], [#allocation10]
    $region21: #{tpu_custom_call.1} parent=1 // pred_fallthru
      _
    // Predicated region
    $region22: #{tpu_custom_call.1} parent=1 // pred_check
      _
    $region23: #{tpu_custom_call.1} parent=1 // pred_check_branch
      %73 = sbr.rel (0) target = $region25
    $region24: #{tpu_custom_call.1} parent=1 // pred_region
      %s75 = ssub.s32 16, 16
      %76 = vsyncadd [#allocation13], %s75
      %s78 = sshll.u32 %s5, 4
      %s79 = int_to_ptr.vmem [resolvable:$true] %s78
      %81 = dma.vmem_to_smem %s79, 16, [#allocation12], [#allocation13]
    $region25: #{tpu_custom_call.1} parent=1 // pred_fallthru
      _
    // Predicated region
    $region26: #{tpu_custom_call.1} parent=1 // pred_check
      _
    $region27: #{tpu_custom_call.1} parent=1 // pred_check_branch
      %83 = sbr.rel (0) target = $region29
    $region28: #{tpu_custom_call.1} parent=1 // pred_region
      %s85 = ssub.s32 16, 16
      %86 = vsyncadd [#allocation13], %s85
      %s88 = sshll.u32 %s6, 4
      %s89 = int_to_ptr.vmem [resolvable:$true] %s88
      %91 = dma.vmem_to_smem %s89, 16, [#allocation14], [#allocation13]
    $region29: #{tpu_custom_call.1} parent=1 // pred_fallthru
      _
    // Predicated region
    $region30: #{tpu_custom_call.1} parent=1 // pred_check
      _
    $region31: #{tpu_custom_call.1} parent=1 // pred_check_branch
      %93 = sbr.rel (0) target = $region33
    $region32: #{tpu_custom_call.1} parent=1 // pred_region
      %94 = dma.done [#allocation3], 256
    $region33: #{tpu_custom_call.1} parent=1 // pred_fallthru
      _
    // Predicated region
    $region34: #{tpu_custom_call.1} parent=1 // pred_check
      _
    $region35: #{tpu_custom_call.1} parent=1 // pred_check_branch
      %96 = sbr.rel (0) target = $region37
    $region36: #{tpu_custom_call.1} parent=1 // pred_region
      %97 = dma.done [#allocation7], 512
    $region37: #{tpu_custom_call.1} parent=1 // pred_fallthru
      _
    // Predicated region
    $region38: #{tpu_custom_call.1} parent=1 // pred_check
      _
    $region39: #{tpu_custom_call.1} parent=1 // pred_check_branch
      %99 = sbr.rel (0) target = $region41
    $region40: #{tpu_custom_call.1} parent=1 // pred_region
      %100 = dma.done [#allocation5], 16
    $region41: #{tpu_custom_call.1} parent=1 // pred_fallthru
      _
    // Predicated region
    $region42: #{tpu_custom_call.1} parent=1 // pred_check
      _
    $region43: #{tpu_custom_call.1} parent=1 // pred_check_branch
      %102 = sbr.rel (0) target = $region45
    $region44: #{tpu_custom_call.1} parent=1 // pred_region
      %103 = dma.done [#allocation10], 16
    $region45: #{tpu_custom_call.1} parent=1 // pred_fallthru
      _
    // Predicated region
    $region46: #{tpu_custom_call.1} parent=1 // pred_check
      _
    $region47: #{tpu_custom_call.1} parent=1 // pred_check_branch
      %105 = sbr.rel (0) target = $region49
    $region48: #{tpu_custom_call.1} parent=1 // pred_region
      %106 = dma.done [#allocation10], 16
    $region49: #{tpu_custom_call.1} parent=1 // pred_fallthru
      _
    // Predicated region
    $region50: #{tpu_custom_call.1} parent=1 // pred_check
      _
    $region51: #{tpu_custom_call.1} parent=1 // pred_check_branch
      %108 = sbr.rel (0) target = $region53
    $region52: #{tpu_custom_call.1} parent=1 // pred_region
      %109 = dma.done [#allocation13], 16
    $region53: #{tpu_custom_call.1} parent=1 // pred_fallthru
      _
    // Predicated region
    $region54: #{tpu_custom_call.1} parent=1 // pred_check
      _
    $region55: #{tpu_custom_call.1} parent=1 // pred_check_branch
      %111 = sbr.rel (0) target = $region57
    $region56: #{tpu_custom_call.1} parent=1 // pred_region
      %112 = dma.done [#allocation13], 16
    $region57: #{tpu_custom_call.1} parent=1 // pred_fallthru
      _
    %113 = sfence
    %v114 = vld [vmem:[#allocation2] sm:$0xff]
    %v115 = vld [vmem:[#allocation2 + $0x8] sm:$0xff]
    %v116 = vlaneseq
    %v117 = vand.u32 %v116, 127
    %v118 = vlaneseq
    %v119 = vshrl.u32 %v118, 7
    %v120 = vadd.s32 %v119, 8
    %vm121 = vcmp.lt.s32.totalorder %v117, 0
    %v122 = vsub.s32 0, %v117
    %v123 = vsel %vm121, %v122, %v117
    %v124 = vshrl.u32 %v123, 4
    %v125 = vand.u32 %v123, 15
    %v126 = vsub.s32 0, %v125
    %v127 = vsel %vm121, %v126, %v125
    %vm128 = vcmp.ne.s32.totalorder %v127, 0
    %vm129 = vcmp.lt.s32.totalorder %v127, 0
    %vm130 = vmand %vm129, %vm128
    %v131 = vadd.s32 %v127, 16
    %v132 = vsel %vm130, %v131, %v127
    %vm133 = vcmp.eq.s32.totalorder %v132, 0
    %vm134 = vcmp.eq.s32.totalorder %v132, 15
    %vm135 = vcmp.lt.s32.totalorder %v119, 0
    %v136 = vsub.s32 0, %v119
    %v137 = vsel %vm135, %v136, %v119
    %v138 = vshrl.u32 %v137, 1
    %v139 = vand.u32 %v137, 1
    %v140 = vsub.s32 0, %v139
    %v141 = vsel %vm135, %v140, %v139
    %vm142 = vcmp.lt.s32.totalorder %v120, 0
    %v143 = vsub.s32 0, %v120
    %v144 = vsel %vm142, %v143, %v120
    %v145 = vshrl.u32 %v144, 1
    %v146 = vand.u32 %v144, 1
    %v147 = vsub.s32 0, %v146
    %v148 = vsel %vm142, %v147, %v146
    %vm149 = vcmp.ne.s32.totalorder %v141, 0
    %vm150 = vcmp.ne.s32.totalorder %v148, 0
    %vm151 = vcmp.lt.s32.totalorder %v141, 0
    %vm152 = vcmp.lt.s32.totalorder %v148, 0
    %vm153 = vmand %vm151, %vm149
    %vm154 = vmand %vm152, %vm150
    %v155 = vadd.s32 %v141, 2
    %v156 = vadd.s32 %v148, 2
    %v157 = vsel %vm153, %v155, %v141
    %v158 = vsel %vm154, %v156, %v148
    %vm159 = vcmp.eq.s32.totalorder %v157, 0
    %vm160 = vcmp.eq.s32.totalorder %v158, 0
    %vm161 = vcmp.lt.s32.totalorder %v117, 16
    %vm162 = vmand %vm159, %vm161
    %vm163 = vmand %vm160, %vm161
    %vm164 = vcmp.eq.s32.totalorder %v157, 1
    %vm165 = vcmp.eq.s32.totalorder %v158, 1
    %vm166 = vcmp.ge.s32.totalorder %v117, 112
    %vm167 = vmand %vm164, %vm166
    %vm168 = vmand %vm165, %vm166
    %vm169 = vcmp.lt.s32.totalorder %v119, 0
    %v170 = vsub.s32 0, %v119
    %v171 = vsel %vm169, %v170, %v119
    %v172 = vshrl.u32 %v171, 3
    %v173 = vand.u32 %v171, 7
    %v174 = vsub.s32 0, %v173
    %v175 = vsel %vm169, %v174, %v173
    %vm176 = vcmp.lt.s32.totalorder %v120, 0
    %v177 = vsub.s32 0, %v120
    %v178 = vsel %vm176, %v177, %v120
    %v179 = vshrl.u32 %v178, 3
    %v180 = vand.u32 %v178, 7
    %v181 = vsub.s32 0, %v180
    %v182 = vsel %vm176, %v181, %v180
    %vm183 = vcmp.ne.s32.totalorder %v175, 0
    %vm184 = vcmp.ne.s32.totalorder %v182, 0
    %vm185 = vcmp.lt.s32.totalorder %v175, 0
    %vm186 = vcmp.lt.s32.totalorder %v182, 0
    %vm187 = vmand %vm185, %vm183
    %vm188 = vmand %vm186, %vm184
    %v189 = vadd.s32 %v175, 8
    %v190 = vadd.s32 %v182, 8
    %v191 = vsel %vm187, %v189, %v175
    %v192 = vsel %vm188, %v190, %v182
    %vm193 = vcmp.lt.s32.totalorder %v191, 2
    %vm194 = vcmp.lt.s32.totalorder %v192, 2
    %vm195 = vcmp.ge.s32.totalorder %v191, 6
    %vm196 = vcmp.ge.s32.totalorder %v192, 6
    %vm199 = vcmask 1041408
    %v200 = vrot.slane %v114, 6
    %v201 = vrot.slane %v115, 6
    %v202 = vsel %vm199, %v200, %v201
    %v205 = vsel %vm199, 0.0, %v200
    %v206 = vsel %vm193, 0.0, %v205
    %v207 = vsel %vm194, 0.0, %v202
    %vm208 = vcmask 1045504
    %v209 = vrot.slane %v114, 2
    %v210 = vrot.slane %v115, 2
    %v211 = vsel %vm208, %v209, %v210
    %v214 = vsel %vm208, %v210, 0.0
    %v215 = vsel %vm195, 0.0, %v211
    %v216 = vsel %vm196, 0.0, %v214
    %v217 = vld [vmem:[#allocation6] sm:$0xff]
    %v218 = vld [vmem:[#allocation6 + $0x8] sm:$0xff]
    %s219 = sld [smem:[#allocation8]]
    %v220 = vstv %s219
    %v221 = vmul.f32 %v220, %v206
    %v222 = vmul.f32 %v220, %v207
    %s223 = sld [smem:[#allocation8 + $0x1]]
    %v224 = vstv %s223
    %v225 = vmul.f32 %v224, %v114
    %v226 = vmul.f32 %v224, %v115
    %v227 = vadd.f32 %v221, %v225
    %v228 = vadd.f32 %v222, %v226
    %s229 = sld [smem:[#allocation8 + $0x2]]
    %v230 = vstv %s229
    %v231 = vmul.f32 %v230, %v215
    %v232 = vmul.f32 %v230, %v216
    %v233 = vadd.f32 %v227, %v231
    %v234 = vadd.f32 %v228, %v232
    %237 = vrot.lane.b32.xlu0 %v233, 1
    %v238 = vpop.permute.xlu0 %237
    %239 = vrot.lane.b32.xlu0 %v234, 1
    %v240 = vpop.permute.xlu0 %239
    %vm243 = vcmask 7168
    %v244 = vsel %vm243, 0.0, %v238
    %v245 = vsel %vm243, 0.0, %v240
    %v246 = vsel %vm133, 0.0, %v244
    %v247 = vsel %vm133, 0.0, %v245
    %248 = vrot.lane.b32.xlu0 %v233, 127
    %v249 = vpop.permute.xlu0 %248
    %250 = vrot.lane.b32.xlu0 %v234, 127
    %v251 = vpop.permute.xlu0 %250
    %vm254 = vcmask 1039360
    %v255 = vsel %vm254, %v249, 0.0
    %v256 = vsel %vm254, %v251, 0.0
    %v257 = vsel %vm134, 0.0, %v255
    %v258 = vsel %vm134, 0.0, %v256
    %s259 = sld [smem:[#allocation9]]
    %v260 = vstv %s259
    %v261 = vmul.f32 %v260, %v246
    %v262 = vmul.f32 %v260, %v247
    %s263 = sld [smem:[#allocation9 + $0x1]]
    %v264 = vstv %s263
    %v265 = vmul.f32 %v264, %v233
    %v266 = vmul.f32 %v264, %v234
    %v267 = vadd.f32 %v261, %v265
    %v268 = vadd.f32 %v262, %v266
    %s269 = sld [smem:[#allocation9 + $0x2]]
    %v270 = vstv %s269
    %v271 = vmul.f32 %v270, %v257
    %v272 = vmul.f32 %v270, %v258
    %v273 = vadd.f32 %v267, %v271
    %v274 = vadd.f32 %v268, %v272
    %s275 = sld [smem:[#allocation9 + $0x3]]
    %v276 = vstv %s275
    %v277 = vmul.f32 %v276, %v246
    %v278 = vmul.f32 %v276, %v247
    %s279 = sld [smem:[#allocation9 + $0x4]]
    %v280 = vstv %s279
    %v281 = vmul.f32 %v280, %v233
    %v282 = vmul.f32 %v280, %v234
    %v283 = vadd.f32 %v277, %v281
    %v284 = vadd.f32 %v278, %v282
    %s285 = sld [smem:[#allocation9 + $0x5]]
    %v286 = vstv %s285
    %v287 = vmul.f32 %v286, %v257
    %v288 = vmul.f32 %v286, %v258
    %v289 = vadd.f32 %v283, %v287
    %v290 = vadd.f32 %v284, %v288
    %s291 = sld [smem:[#allocation9 + $0x6]]
    %v292 = vstv %s291
    %v293 = vmul.f32 %v292, %v246
    %v294 = vmul.f32 %v292, %v247
    %s295 = sld [smem:[#allocation9 + $0x7]]
    %v296 = vstv %s295
    %v297 = vmul.f32 %v296, %v233
    %v298 = vmul.f32 %v296, %v234
    %v299 = vadd.f32 %v293, %v297
    %v300 = vadd.f32 %v294, %v298
    %s301 = sld [smem:[#allocation9 + $0x8]]
    %v302 = vstv %s301
    %v303 = vmul.f32 %v302, %v257
    %v304 = vmul.f32 %v302, %v258
    %v305 = vadd.f32 %v299, %v303
    %v306 = vadd.f32 %v300, %v304
    %s307 = sld [smem:[#allocation8 + $0x3]]
    %v308 = vstv %s307
    %v309 = vmul.f32 %v308, %v206
    %v310 = vmul.f32 %v308, %v207
    %s311 = sld [smem:[#allocation8 + $0x4]]
    %v312 = vstv %s311
    %v313 = vmul.f32 %v312, %v114
    %v314 = vmul.f32 %v312, %v115
    %v315 = vadd.f32 %v309, %v313
    %v316 = vadd.f32 %v310, %v314
    %s317 = sld [smem:[#allocation8 + $0x5]]
    %v318 = vstv %s317
    %v319 = vmul.f32 %v318, %v215
    %v320 = vmul.f32 %v318, %v216
    %v321 = vadd.f32 %v315, %v319
    %v322 = vadd.f32 %v316, %v320
    %325 = vrot.lane.b32.xlu0 %v321, 1
    %v326 = vpop.permute.xlu0 %325
    %327 = vrot.lane.b32.xlu0 %v322, 1
    %v328 = vpop.permute.xlu0 %327
    %v331 = vsel %vm243, 0.0, %v326
    %v332 = vsel %vm243, 0.0, %v328
    %v333 = vsel %vm133, 0.0, %v331
    %v334 = vsel %vm133, 0.0, %v332
    %335 = vrot.lane.b32.xlu0 %v321, 127
    %v336 = vpop.permute.xlu0 %335
    %337 = vrot.lane.b32.xlu0 %v322, 127
    %v338 = vpop.permute.xlu0 %337
    %v341 = vsel %vm254, %v336, 0.0
    %v342 = vsel %vm254, %v338, 0.0
    %v343 = vsel %vm134, 0.0, %v341
    %v344 = vsel %vm134, 0.0, %v342
    %s345 = sld [smem:[#allocation9 + $0x9]]
    %v346 = vstv %s345
    %v347 = vmul.f32 %v346, %v333
    %v348 = vmul.f32 %v346, %v334
    %s349 = sld [smem:[#allocation9 + $0xa]]
    %v350 = vstv %s349
    %v351 = vmul.f32 %v350, %v321
    %v352 = vmul.f32 %v350, %v322
    %v353 = vadd.f32 %v347, %v351
    %v354 = vadd.f32 %v348, %v352
    %s355 = sld [smem:[#allocation9 + $0xb]]
    %v356 = vstv %s355
    %v357 = vmul.f32 %v356, %v343
    %v358 = vmul.f32 %v356, %v344
    %v359 = vadd.f32 %v353, %v357
    %v360 = vadd.f32 %v354, %v358
    %s361 = sld [smem:[#allocation9 + $0xc]]
    %v362 = vstv %s361
    %v363 = vmul.f32 %v362, %v333
    %v364 = vmul.f32 %v362, %v334
    %s365 = sld [smem:[#allocation9 + $0xd]]
    %v366 = vstv %s365
    %v367 = vmul.f32 %v366, %v321
    %v368 = vmul.f32 %v366, %v322
    %v369 = vadd.f32 %v363, %v367
    %v370 = vadd.f32 %v364, %v368
    %s371 = sld [smem:[#allocation9 + $0xe]]
    %v372 = vstv %s371
    %v373 = vmul.f32 %v372, %v343
    %v374 = vmul.f32 %v372, %v344
    %v375 = vadd.f32 %v369, %v373
    %v376 = vadd.f32 %v370, %v374
    %s377 = sld [smem:[#allocation9 + $0xf]]
    %v378 = vstv %s377
    %v379 = vmul.f32 %v378, %v333
    %v380 = vmul.f32 %v378, %v334
    %s381 = sld [smem:[#allocation9 + $0x10]]
    %v382 = vstv %s381
    %v383 = vmul.f32 %v382, %v321
    %v384 = vmul.f32 %v382, %v322
    %v385 = vadd.f32 %v379, %v383
    %v386 = vadd.f32 %v380, %v384
    %s387 = sld [smem:[#allocation9 + $0x11]]
    %v388 = vstv %s387
    %v389 = vmul.f32 %v388, %v343
    %v390 = vmul.f32 %v388, %v344
    %v391 = vadd.f32 %v385, %v389
    %v392 = vadd.f32 %v386, %v390
    %v393 = vadd.f32 %v273, %v359
    %v394 = vadd.f32 %v274, %v360
    %v395 = vadd.f32 %v289, %v375
    %v396 = vadd.f32 %v290, %v376
    %v397 = vadd.f32 %v305, %v391
    %v398 = vadd.f32 %v306, %v392
    %s399 = sld [smem:[#allocation8 + $0x6]]
    %v400 = vstv %s399
    %v401 = vmul.f32 %v400, %v206
    %v402 = vmul.f32 %v400, %v207
    %s403 = sld [smem:[#allocation8 + $0x7]]
    %v404 = vstv %s403
    %v405 = vmul.f32 %v404, %v114
    %v406 = vmul.f32 %v404, %v115
    %v407 = vadd.f32 %v401, %v405
    %v408 = vadd.f32 %v402, %v406
    %s409 = sld [smem:[#allocation8 + $0x8]]
    %v410 = vstv %s409
    %v411 = vmul.f32 %v410, %v215
    %v412 = vmul.f32 %v410, %v216
    %v413 = vadd.f32 %v407, %v411
    %v414 = vadd.f32 %v408, %v412
    %417 = vrot.lane.b32.xlu0 %v413, 1
    %v418 = vpop.permute.xlu0 %417
    %419 = vrot.lane.b32.xlu0 %v414, 1
    %v420 = vpop.permute.xlu0 %419
    %v423 = vsel %vm243, 0.0, %v418
    %v424 = vsel %vm243, 0.0, %v420
    %v425 = vsel %vm133, 0.0, %v423
    %v426 = vsel %vm133, 0.0, %v424
    %427 = vrot.lane.b32.xlu0 %v413, 127
    %v428 = vpop.permute.xlu0 %427
    %429 = vrot.lane.b32.xlu0 %v414, 127
    %v430 = vpop.permute.xlu0 %429
    %v433 = vsel %vm254, %v428, 0.0
    %v434 = vsel %vm254, %v430, 0.0
    %v435 = vsel %vm134, 0.0, %v433
    %v436 = vsel %vm134, 0.0, %v434
    %s437 = sld [smem:[#allocation9 + $0x12]]
    %v438 = vstv %s437
    %v439 = vmul.f32 %v438, %v425
    %v440 = vmul.f32 %v438, %v426
    %s441 = sld [smem:[#allocation9 + $0x13]]
    %v442 = vstv %s441
    %v443 = vmul.f32 %v442, %v413
    %v444 = vmul.f32 %v442, %v414
    %v445 = vadd.f32 %v439, %v443
    %v446 = vadd.f32 %v440, %v444
    %s447 = sld [smem:[#allocation9 + $0x14]]
    %v448 = vstv %s447
    %v449 = vmul.f32 %v448, %v435
    %v450 = vmul.f32 %v448, %v436
    %v451 = vadd.f32 %v445, %v449
    %v452 = vadd.f32 %v446, %v450
    %s453 = sld [smem:[#allocation9 + $0x15]]
    %v454 = vstv %s453
    %v455 = vmul.f32 %v454, %v425
    %v456 = vmul.f32 %v454, %v426
    %s457 = sld [smem:[#allocation9 + $0x16]]
    %v458 = vstv %s457
    %v459 = vmul.f32 %v458, %v413
    %v460 = vmul.f32 %v458, %v414
    %v461 = vadd.f32 %v455, %v459
    %v462 = vadd.f32 %v456, %v460
    %s463 = sld [smem:[#allocation9 + $0x17]]
    %v464 = vstv %s463
    %v465 = vmul.f32 %v464, %v435
    %v466 = vmul.f32 %v464, %v436
    %v467 = vadd.f32 %v461, %v465
    %v468 = vadd.f32 %v462, %v466
    %s469 = sld [smem:[#allocation9 + $0x18]]
    %v470 = vstv %s469
    %v471 = vmul.f32 %v470, %v425
    %v472 = vmul.f32 %v470, %v426
    %s473 = sld [smem:[#allocation9 + $0x19]]
    %v474 = vstv %s473
    %v475 = vmul.f32 %v474, %v413
    %v476 = vmul.f32 %v474, %v414
    %v477 = vadd.f32 %v471, %v475
    %v478 = vadd.f32 %v472, %v476
    %s479 = sld [smem:[#allocation9 + $0x1a]]
    %v480 = vstv %s479
    %v481 = vmul.f32 %v480, %v435
    %v482 = vmul.f32 %v480, %v436
    %v483 = vadd.f32 %v477, %v481
    %v484 = vadd.f32 %v478, %v482
    %v485 = vadd.f32 %v393, %v451
    %v486 = vadd.f32 %v394, %v452
    %v487 = vadd.f32 %v395, %v467
    %v488 = vadd.f32 %v396, %v468
    %v489 = vadd.f32 %v397, %v483
    %v490 = vadd.f32 %v398, %v484
    %s491 = sld [smem:[#allocation8 + $0x9]]
    %v492 = vstv %s491
    %v493 = vmul.f32 %v492, %v206
    %v494 = vmul.f32 %v492, %v207
    %s495 = sld [smem:[#allocation8 + $0xa]]
    %v496 = vstv %s495
    %v497 = vmul.f32 %v496, %v114
    %v498 = vmul.f32 %v496, %v115
    %v499 = vadd.f32 %v493, %v497
    %v500 = vadd.f32 %v494, %v498
    %s501 = sld [smem:[#allocation8 + $0xb]]
    %v502 = vstv %s501
    %v503 = vmul.f32 %v502, %v215
    %v504 = vmul.f32 %v502, %v216
    %v505 = vadd.f32 %v499, %v503
    %v506 = vadd.f32 %v500, %v504
    %509 = vrot.lane.b32.xlu0 %v505, 1
    %v510 = vpop.permute.xlu0 %509
    %511 = vrot.lane.b32.xlu0 %v506, 1
    %v512 = vpop.permute.xlu0 %511
    %v515 = vsel %vm243, 0.0, %v510
    %v516 = vsel %vm243, 0.0, %v512
    %v517 = vsel %vm133, 0.0, %v515
    %v518 = vsel %vm133, 0.0, %v516
    %519 = vrot.lane.b32.xlu0 %v505, 127
    %v520 = vpop.permute.xlu0 %519
    %521 = vrot.lane.b32.xlu0 %v506, 127
    %v522 = vpop.permute.xlu0 %521
    %v525 = vsel %vm254, %v520, 0.0
    %v526 = vsel %vm254, %v522, 0.0
    %v527 = vsel %vm134, 0.0, %v525
    %v528 = vsel %vm134, 0.0, %v526
    %s529 = sld [smem:[#allocation9 + $0x1b]]
    %v530 = vstv %s529
    %v531 = vmul.f32 %v530, %v517
    %v532 = vmul.f32 %v530, %v518
    %s533 = sld [smem:[#allocation9 + $0x1c]]
    %v534 = vstv %s533
    %v535 = vmul.f32 %v534, %v505
    %v536 = vmul.f32 %v534, %v506
    %v537 = vadd.f32 %v531, %v535
    %v538 = vadd.f32 %v532, %v536
    %s539 = sld [smem:[#allocation9 + $0x1d]]
    %v540 = vstv %s539
    %v541 = vmul.f32 %v540, %v527
    %v542 = vmul.f32 %v540, %v528
    %v543 = vadd.f32 %v537, %v541
    %v544 = vadd.f32 %v538, %v542
    %s545 = sld [smem:[#allocation9 + $0x1e]]
    %v546 = vstv %s545
    %v547 = vmul.f32 %v546, %v517
    %v548 = vmul.f32 %v546, %v518
    %s549 = sld [smem:[#allocation9 + $0x1f]]
    %v550 = vstv %s549
    %v551 = vmul.f32 %v550, %v505
    %v552 = vmul.f32 %v550, %v506
    %v553 = vadd.f32 %v547, %v551
    %v554 = vadd.f32 %v548, %v552
    %s555 = sld [smem:[#allocation9 + $0x20]]
    %v556 = vstv %s555
    %v557 = vmul.f32 %v556, %v527
    %v558 = vmul.f32 %v556, %v528
    %v559 = vadd.f32 %v553, %v557
    %v560 = vadd.f32 %v554, %v558
    %s561 = sld [smem:[#allocation9 + $0x21]]
    %v562 = vstv %s561
    %v563 = vmul.f32 %v562, %v517
    %v564 = vmul.f32 %v562, %v518
    %s565 = sld [smem:[#allocation9 + $0x22]]
    %v566 = vstv %s565
    %v567 = vmul.f32 %v566, %v505
    %v568 = vmul.f32 %v566, %v506
    %v569 = vadd.f32 %v563, %v567
    %v570 = vadd.f32 %v564, %v568
    %s571 = sld [smem:[#allocation9 + $0x23]]
    %v572 = vstv %s571
    %v573 = vmul.f32 %v572, %v527
    %v574 = vmul.f32 %v572, %v528
    %v575 = vadd.f32 %v569, %v573
    %v576 = vadd.f32 %v570, %v574
    %v577 = vadd.f32 %v485, %v543
    %v578 = vadd.f32 %v486, %v544
    %v579 = vadd.f32 %v487, %v559
    %v580 = vadd.f32 %v488, %v560
    %v581 = vadd.f32 %v489, %v575
    %v582 = vadd.f32 %v490, %v576
    %s583 = sld [smem:[#allocation8 + $0xc]]
    %v584 = vstv %s583
    %v585 = vmul.f32 %v584, %v206
    %v586 = vmul.f32 %v584, %v207
    %s587 = sld [smem:[#allocation8 + $0xd]]
    %v588 = vstv %s587
    %v589 = vmul.f32 %v588, %v114
    %v590 = vmul.f32 %v588, %v115
    %v591 = vadd.f32 %v585, %v589
    %v592 = vadd.f32 %v586, %v590
    %s593 = sld [smem:[#allocation8 + $0xe]]
    %v594 = vstv %s593
    %v595 = vmul.f32 %v594, %v215
    %v596 = vmul.f32 %v594, %v216
    %v597 = vadd.f32 %v591, %v595
    %v598 = vadd.f32 %v592, %v596
    %601 = vrot.lane.b32.xlu0 %v597, 1
    %v602 = vpop.permute.xlu0 %601
    %603 = vrot.lane.b32.xlu0 %v598, 1
    %v604 = vpop.permute.xlu0 %603
    %v607 = vsel %vm243, 0.0, %v602
    %v608 = vsel %vm243, 0.0, %v604
    %v609 = vsel %vm133, 0.0, %v607
    %v610 = vsel %vm133, 0.0, %v608
    %611 = vrot.lane.b32.xlu0 %v597, 127
    %v612 = vpop.permute.xlu0 %611
    %613 = vrot.lane.b32.xlu0 %v598, 127
    %v614 = vpop.permute.xlu0 %613
    %v617 = vsel %vm254, %v612, 0.0
    %v618 = vsel %vm254, %v614, 0.0
    %v619 = vsel %vm134, 0.0, %v617
    %v620 = vsel %vm134, 0.0, %v618
    %s621 = sld [smem:[#allocation9 + $0x24]]
    %v622 = vstv %s621
    %v623 = vmul.f32 %v622, %v609
    %v624 = vmul.f32 %v622, %v610
    %s625 = sld [smem:[#allocation9 + $0x25]]
    %v626 = vstv %s625
    %v627 = vmul.f32 %v626, %v597
    %v628 = vmul.f32 %v626, %v598
    %v629 = vadd.f32 %v623, %v627
    %v630 = vadd.f32 %v624, %v628
    %s631 = sld [smem:[#allocation9 + $0x26]]
    %v632 = vstv %s631
    %v633 = vmul.f32 %v632, %v619
    %v634 = vmul.f32 %v632, %v620
    %v635 = vadd.f32 %v629, %v633
    %v636 = vadd.f32 %v630, %v634
    %s637 = sld [smem:[#allocation9 + $0x27]]
    %v638 = vstv %s637
    %v639 = vmul.f32 %v638, %v609
    %v640 = vmul.f32 %v638, %v610
    %s641 = sld [smem:[#allocation9 + $0x28]]
    %v642 = vstv %s641
    %v643 = vmul.f32 %v642, %v597
    %v644 = vmul.f32 %v642, %v598
    %v645 = vadd.f32 %v639, %v643
    %v646 = vadd.f32 %v640, %v644
    %s647 = sld [smem:[#allocation9 + $0x29]]
    %v648 = vstv %s647
    %v649 = vmul.f32 %v648, %v619
    %v650 = vmul.f32 %v648, %v620
    %v651 = vadd.f32 %v645, %v649
    %v652 = vadd.f32 %v646, %v650
    %s653 = sld [smem:[#allocation9 + $0x2a]]
    %v654 = vstv %s653
    %v655 = vmul.f32 %v654, %v609
    %v656 = vmul.f32 %v654, %v610
    %s657 = sld [smem:[#allocation9 + $0x2b]]
    %v658 = vstv %s657
    %v659 = vmul.f32 %v658, %v597
    %v660 = vmul.f32 %v658, %v598
    %v661 = vadd.f32 %v655, %v659
    %v662 = vadd.f32 %v656, %v660
    %s663 = sld [smem:[#allocation9 + $0x2c]]
    %v664 = vstv %s663
    %v665 = vmul.f32 %v664, %v619
    %v666 = vmul.f32 %v664, %v620
    %v667 = vadd.f32 %v661, %v665
    %v668 = vadd.f32 %v662, %v666
    %v669 = vadd.f32 %v577, %v635
    %v670 = vadd.f32 %v578, %v636
    %v671 = vadd.f32 %v579, %v651
    %v672 = vadd.f32 %v580, %v652
    %v673 = vadd.f32 %v581, %v667
    %v674 = vadd.f32 %v582, %v668
    %s675 = sld [smem:[#allocation8 + $0xf]]
    %v676 = vstv %s675
    %v677 = vmul.f32 %v676, %v206
    %v678 = vmul.f32 %v676, %v207
    %s679 = sld [smem:[#allocation8 + $0x10]]
    %v680 = vstv %s679
    %v681 = vmul.f32 %v680, %v114
    %v682 = vmul.f32 %v680, %v115
    %v683 = vadd.f32 %v677, %v681
    %v684 = vadd.f32 %v678, %v682
    %s685 = sld [smem:[#allocation8 + $0x11]]
    %v686 = vstv %s685
    %v687 = vmul.f32 %v686, %v215
    %v688 = vmul.f32 %v686, %v216
    %v689 = vadd.f32 %v683, %v687
    %v690 = vadd.f32 %v684, %v688
    %693 = vrot.lane.b32.xlu0 %v689, 1
    %v694 = vpop.permute.xlu0 %693
    %695 = vrot.lane.b32.xlu0 %v690, 1
    %v696 = vpop.permute.xlu0 %695
    %v699 = vsel %vm243, 0.0, %v694
    %v700 = vsel %vm243, 0.0, %v696
    %v701 = vsel %vm133, 0.0, %v699
    %v702 = vsel %vm133, 0.0, %v700
    %703 = vrot.lane.b32.xlu0 %v689, 127
    %v704 = vpop.permute.xlu0 %703
    %705 = vrot.lane.b32.xlu0 %v690, 127
    %v706 = vpop.permute.xlu0 %705
    %v709 = vsel %vm254, %v704, 0.0
    %v710 = vsel %vm254, %v706, 0.0
    %v711 = vsel %vm134, 0.0, %v709
    %v712 = vsel %vm134, 0.0, %v710
    %s713 = sld [smem:[#allocation9 + $0x2d]]
    %v714 = vstv %s713
    %v715 = vmul.f32 %v714, %v701
    %v716 = vmul.f32 %v714, %v702
    %s717 = sld [smem:[#allocation9 + $0x2e]]
    %v718 = vstv %s717
    %v719 = vmul.f32 %v718, %v689
    %v720 = vmul.f32 %v718, %v690
    %v721 = vadd.f32 %v715, %v719
    %v722 = vadd.f32 %v716, %v720
    %s723 = sld [smem:[#allocation9 + $0x2f]]
    %v724 = vstv %s723
    %v725 = vmul.f32 %v724, %v711
    %v726 = vmul.f32 %v724, %v712
    %v727 = vadd.f32 %v721, %v725
    %v728 = vadd.f32 %v722, %v726
    %s729 = sld [smem:[#allocation9 + $0x30]]
    %v730 = vstv %s729
    %v731 = vmul.f32 %v730, %v701
    %v732 = vmul.f32 %v730, %v702
    %s733 = sld [smem:[#allocation9 + $0x31]]
    %v734 = vstv %s733
    %v735 = vmul.f32 %v734, %v689
    %v736 = vmul.f32 %v734, %v690
    %v737 = vadd.f32 %v731, %v735
    %v738 = vadd.f32 %v732, %v736
    %s739 = sld [smem:[#allocation9 + $0x32]]
    %v740 = vstv %s739
    %v741 = vmul.f32 %v740, %v711
    %v742 = vmul.f32 %v740, %v712
    %v743 = vadd.f32 %v737, %v741
    %v744 = vadd.f32 %v738, %v742
    %s745 = sld [smem:[#allocation9 + $0x33]]
    %v746 = vstv %s745
    %v747 = vmul.f32 %v746, %v701
    %v748 = vmul.f32 %v746, %v702
    %s749 = sld [smem:[#allocation9 + $0x34]]
    %v750 = vstv %s749
    %v751 = vmul.f32 %v750, %v689
    %v752 = vmul.f32 %v750, %v690
    %v753 = vadd.f32 %v747, %v751
    %v754 = vadd.f32 %v748, %v752
    %s755 = sld [smem:[#allocation9 + $0x35]]
    %v756 = vstv %s755
    %v757 = vmul.f32 %v756, %v711
    %v758 = vmul.f32 %v756, %v712
    %v759 = vadd.f32 %v753, %v757
    %v760 = vadd.f32 %v754, %v758
    %v761 = vadd.f32 %v669, %v727
    %v762 = vadd.f32 %v670, %v728
    %v763 = vadd.f32 %v671, %v743
    %v764 = vadd.f32 %v672, %v744
    %v765 = vadd.f32 %v673, %v759
    %v766 = vadd.f32 %v674, %v760
    %s767 = sld [smem:[#allocation8 + $0x12]]
    %v768 = vstv %s767
    %v769 = vmul.f32 %v768, %v206
    %v770 = vmul.f32 %v768, %v207
    %s771 = sld [smem:[#allocation8 + $0x13]]
    %v772 = vstv %s771
    %v773 = vmul.f32 %v772, %v114
    %v774 = vmul.f32 %v772, %v115
    %v775 = vadd.f32 %v769, %v773
    %v776 = vadd.f32 %v770, %v774
    %s777 = sld [smem:[#allocation8 + $0x14]]
    %v778 = vstv %s777
    %v779 = vmul.f32 %v778, %v215
    %v780 = vmul.f32 %v778, %v216
    %v781 = vadd.f32 %v775, %v779
    %v782 = vadd.f32 %v776, %v780
    %785 = vrot.lane.b32.xlu0 %v781, 1
    %v786 = vpop.permute.xlu0 %785
    %787 = vrot.lane.b32.xlu0 %v782, 1
    %v788 = vpop.permute.xlu0 %787
    %v791 = vsel %vm243, 0.0, %v786
    %v792 = vsel %vm243, 0.0, %v788
    %v793 = vsel %vm133, 0.0, %v791
    %v794 = vsel %vm133, 0.0, %v792
    %795 = vrot.lane.b32.xlu0 %v781, 127
    %v796 = vpop.permute.xlu0 %795
    %797 = vrot.lane.b32.xlu0 %v782, 127
    %v798 = vpop.permute.xlu0 %797
    %v801 = vsel %vm254, %v796, 0.0
    %v802 = vsel %vm254, %v798, 0.0
    %v803 = vsel %vm134, 0.0, %v801
    %v804 = vsel %vm134, 0.0, %v802
    %s805 = sld [smem:[#allocation9 + $0x36]]
    %v806 = vstv %s805
    %v807 = vmul.f32 %v806, %v793
    %v808 = vmul.f32 %v806, %v794
    %s809 = sld [smem:[#allocation9 + $0x37]]
    %v810 = vstv %s809
    %v811 = vmul.f32 %v810, %v781
    %v812 = vmul.f32 %v810, %v782
    %v813 = vadd.f32 %v807, %v811
    %v814 = vadd.f32 %v808, %v812
    %s815 = sld [smem:[#allocation9 + $0x38]]
    %v816 = vstv %s815
    %v817 = vmul.f32 %v816, %v803
    %v818 = vmul.f32 %v816, %v804
    %v819 = vadd.f32 %v813, %v817
    %v820 = vadd.f32 %v814, %v818
    %s821 = sld [smem:[#allocation9 + $0x39]]
    %v822 = vstv %s821
    %v823 = vmul.f32 %v822, %v793
    %v824 = vmul.f32 %v822, %v794
    %s825 = sld [smem:[#allocation9 + $0x3a]]
    %v826 = vstv %s825
    %v827 = vmul.f32 %v826, %v781
    %v828 = vmul.f32 %v826, %v782
    %v829 = vadd.f32 %v823, %v827
    %v830 = vadd.f32 %v824, %v828
    %s831 = sld [smem:[#allocation9 + $0x3b]]
    %v832 = vstv %s831
    %v833 = vmul.f32 %v832, %v803
    %v834 = vmul.f32 %v832, %v804
    %v835 = vadd.f32 %v829, %v833
    %v836 = vadd.f32 %v830, %v834
    %s837 = sld [smem:[#allocation9 + $0x3c]]
    %v838 = vstv %s837
    %v839 = vmul.f32 %v838, %v793
    %v840 = vmul.f32 %v838, %v794
    %s841 = sld [smem:[#allocation9 + $0x3d]]
    %v842 = vstv %s841
    %v843 = vmul.f32 %v842, %v781
    %v844 = vmul.f32 %v842, %v782
    %v845 = vadd.f32 %v839, %v843
    %v846 = vadd.f32 %v840, %v844
    %s847 = sld [smem:[#allocation9 + $0x3e]]
    %v848 = vstv %s847
    %v849 = vmul.f32 %v848, %v803
    %v850 = vmul.f32 %v848, %v804
    %v851 = vadd.f32 %v845, %v849
    %v852 = vadd.f32 %v846, %v850
    %v853 = vadd.f32 %v761, %v819
    %v854 = vadd.f32 %v762, %v820
    %v855 = vadd.f32 %v763, %v835
    %v856 = vadd.f32 %v764, %v836
    %v857 = vadd.f32 %v765, %v851
    %v858 = vadd.f32 %v766, %v852
    %s859 = sld [smem:[#allocation8 + $0x15]]
    %v860 = vstv %s859
    %v861 = vmul.f32 %v860, %v206
    %v862 = vmul.f32 %v860, %v207
    %s863 = sld [smem:[#allocation8 + $0x16]]
    %v864 = vstv %s863
    %v865 = vmul.f32 %v864, %v114
    %v866 = vmul.f32 %v864, %v115
    %v867 = vadd.f32 %v861, %v865
    %v868 = vadd.f32 %v862, %v866
    %s869 = sld [smem:[#allocation8 + $0x17]]
    %v870 = vstv %s869
    %v871 = vmul.f32 %v870, %v215
    %v872 = vmul.f32 %v870, %v216
    %v873 = vadd.f32 %v867, %v871
    %v874 = vadd.f32 %v868, %v872
    %877 = vrot.lane.b32.xlu0 %v873, 1
    %v878 = vpop.permute.xlu0 %877
    %879 = vrot.lane.b32.xlu0 %v874, 1
    %v880 = vpop.permute.xlu0 %879
    %v883 = vsel %vm243, 0.0, %v878
    %v884 = vsel %vm243, 0.0, %v880
    %v885 = vsel %vm133, 0.0, %v883
    %v886 = vsel %vm133, 0.0, %v884
    %887 = vrot.lane.b32.xlu0 %v873, 127
    %v888 = vpop.permute.xlu0 %887
    %889 = vrot.lane.b32.xlu0 %v874, 127
    %v890 = vpop.permute.xlu0 %889
    %v893 = vsel %vm254, %v888, 0.0
    %v894 = vsel %vm254, %v890, 0.0
    %v895 = vsel %vm134, 0.0, %v893
    %v896 = vsel %vm134, 0.0, %v894
    %s897 = sld [smem:[#allocation9 + $0x3f]]
    %v898 = vstv %s897
    %v899 = vmul.f32 %v898, %v885
    %v900 = vmul.f32 %v898, %v886
    %s901 = sld [smem:[#allocation9 + $0x40]]
    %v902 = vstv %s901
    %v903 = vmul.f32 %v902, %v873
    %v904 = vmul.f32 %v902, %v874
    %v905 = vadd.f32 %v899, %v903
    %v906 = vadd.f32 %v900, %v904
    %s907 = sld [smem:[#allocation9 + $0x41]]
    %v908 = vstv %s907
    %v909 = vmul.f32 %v908, %v895
    %v910 = vmul.f32 %v908, %v896
    %v911 = vadd.f32 %v905, %v909
    %v912 = vadd.f32 %v906, %v910
    %s913 = sld [smem:[#allocation9 + $0x42]]
    %v914 = vstv %s913
    %v915 = vmul.f32 %v914, %v885
    %v916 = vmul.f32 %v914, %v886
    %s917 = sld [smem:[#allocation9 + $0x43]]
    %v918 = vstv %s917
    %v919 = vmul.f32 %v918, %v873
    %v920 = vmul.f32 %v918, %v874
    %v921 = vadd.f32 %v915, %v919
    %v922 = vadd.f32 %v916, %v920
    %s923 = sld [smem:[#allocation9 + $0x44]]
    %v924 = vstv %s923
    %v925 = vmul.f32 %v924, %v895
    %v926 = vmul.f32 %v924, %v896
    %v927 = vadd.f32 %v921, %v925
    %v928 = vadd.f32 %v922, %v926
    %s929 = sld [smem:[#allocation9 + $0x45]]
    %v930 = vstv %s929
    %v931 = vmul.f32 %v930, %v885
    %v932 = vmul.f32 %v930, %v886
    %s933 = sld [smem:[#allocation9 + $0x46]]
    %v934 = vstv %s933
    %v935 = vmul.f32 %v934, %v873
    %v936 = vmul.f32 %v934, %v874
    %v937 = vadd.f32 %v931, %v935
    %v938 = vadd.f32 %v932, %v936
    %s939 = sld [smem:[#allocation9 + $0x47]]
    %v940 = vstv %s939
    %v941 = vmul.f32 %v940, %v895
    %v942 = vmul.f32 %v940, %v896
    %v943 = vadd.f32 %v937, %v941
    %v944 = vadd.f32 %v938, %v942
    %v945 = vadd.f32 %v853, %v911
    %v946 = vadd.f32 %v854, %v912
    %v947 = vadd.f32 %v855, %v927
    %v948 = vadd.f32 %v856, %v928
    %v949 = vadd.f32 %v857, %v943
    %v950 = vadd.f32 %v858, %v944
    %953 = vrot.lane.b32.xlu0 %v945, 16
    %v954 = vpop.permute.xlu0 %953
    %955 = vrot.lane.b32.xlu0 %v946, 16
    %v956 = vpop.permute.xlu0 %955
    %vm959 = vcmask 130048
    %v960 = vsel %vm959, 0.0, %v954
    %v961 = vsel %vm959, 0.0, %v956
    %vm962 = vcmask 1040384
    %v963 = vrot.slane %v945, 7
    %v964 = vrot.slane %v946, 7
    %v965 = vsel %vm962, %v963, %v964
    %v967 = vsel %vm962, 0.0, %v963
    %969 = vrot.lane.b32.xlu0 %v967, 16
    %v970 = vpop.permute.xlu0 %969
    %971 = vrot.lane.b32.xlu0 %v965, 16
    %v972 = vpop.permute.xlu0 %971
    %v975 = vsel %vm959, %v970, 0.0
    %v976 = vsel %vm959, %v972, 0.0
    %v977 = vsel %vm162, 0.0, %v975
    %v978 = vsel %vm163, 0.0, %v976
    %v979 = vadd.f32 %v960, %v977
    %v980 = vadd.f32 %v961, %v978
    %v981 = vadd.f32 %v947, %v979
    %v982 = vadd.f32 %v948, %v980
    %985 = vrot.lane.b32.xlu0 %v949, 112
    %v986 = vpop.permute.xlu0 %985
    %987 = vrot.lane.b32.xlu0 %v950, 112
    %v988 = vpop.permute.xlu0 %987
    %vm991 = vcmask 916480
    %v992 = vsel %vm991, %v986, 0.0
    %v993 = vsel %vm991, %v988, 0.0
    %vm994 = vcmask 1046528
    %v995 = vrot.slane %v949, 1
    %v996 = vrot.slane %v950, 1
    %v997 = vsel %vm994, %v995, %v996
    %v999 = vsel %vm994, %v996, 0.0
    %1001 = vrot.lane.b32.xlu0 %v997, 112
    %v1002 = vpop.permute.xlu0 %1001
    %1003 = vrot.lane.b32.xlu0 %v999, 112
    %v1004 = vpop.permute.xlu0 %1003
    %v1007 = vsel %vm991, 0.0, %v1002
    %v1008 = vsel %vm991, 0.0, %v1004
    %v1009 = vsel %vm167, 0.0, %v1007
    %v1010 = vsel %vm168, 0.0, %v1008
    %v1011 = vadd.f32 %v992, %v1009
    %v1012 = vadd.f32 %v993, %v1010
    %v1013 = vadd.f32 %v981, %v1011
    %v1014 = vadd.f32 %v982, %v1012
    %v1015 = vadd.f32 %v1013, %v217
    %v1016 = vadd.f32 %v1014, %v218
    %v1017 = vmax.f32 %v1015, 0.0
    %v1018 = vmax.f32 %v1016, 0.0
    %v1021 = vrot.slane %v1017, 6
    %v1022 = vrot.slane %v1018, 6
    %v1023 = vsel %vm199, %v1021, %v1022
    %v1026 = vsel %vm199, 0.0, %v1021
    %v1027 = vsel %vm193, 0.0, %v1026
    %v1028 = vsel %vm194, 0.0, %v1023
    %v1029 = vrot.slane %v1017, 2
    %v1030 = vrot.slane %v1018, 2
    %v1031 = vsel %vm208, %v1029, %v1030
    %v1034 = vsel %vm208, %v1030, 0.0
    %v1035 = vsel %vm195, 0.0, %v1031
    %v1036 = vsel %vm196, 0.0, %v1034
    %s1037 = scalar_lea.vmem [#allocation6], 16
    %v1038 = vld [vmem:[%s1037] sm:$0xff]
    %v1039 = vld [vmem:[%s1037 + $0x8] sm:$0xff]
    %s1040 = sld [smem:[#allocation11]]
    %v1041 = vstv %s1040
    %v1042 = vmul.f32 %v1041, %v206
    %v1043 = vmul.f32 %v1041, %v207
    %s1044 = sld [smem:[#allocation11 + $0x1]]
    %v1045 = vstv %s1044
    %v1046 = vmul.f32 %v1045, %v114
    %v1047 = vmul.f32 %v1045, %v115
    %v1048 = vadd.f32 %v1042, %v1046
    %v1049 = vadd.f32 %v1043, %v1047
    %s1050 = sld [smem:[#allocation11 + $0x2]]
    %v1051 = vstv %s1050
    %v1052 = vmul.f32 %v1051, %v215
    %v1053 = vmul.f32 %v1051, %v216
    %v1054 = vadd.f32 %v1048, %v1052
    %v1055 = vadd.f32 %v1049, %v1053
    %s1056 = sld [smem:[#allocation11 + $0x3]]
    %v1057 = vstv %s1056
    %v1058 = vmul.f32 %v1057, %v1027
    %v1059 = vmul.f32 %v1057, %v1028
    %v1060 = vadd.f32 %v1054, %v1058
    %v1061 = vadd.f32 %v1055, %v1059
    %s1062 = sld [smem:[#allocation11 + $0x4]]
    %v1063 = vstv %s1062
    %v1064 = vmul.f32 %v1063, %v1017
    %v1065 = vmul.f32 %v1063, %v1018
    %v1066 = vadd.f32 %v1060, %v1064
    %v1067 = vadd.f32 %v1061, %v1065
    %s1068 = sld [smem:[#allocation11 + $0x5]]
    %v1069 = vstv %s1068
    %v1070 = vmul.f32 %v1069, %v1035
    %v1071 = vmul.f32 %v1069, %v1036
    %v1072 = vadd.f32 %v1066, %v1070
    %v1073 = vadd.f32 %v1067, %v1071
    %1076 = vrot.lane.b32.xlu0 %v1072, 1
    %v1077 = vpop.permute.xlu0 %1076
    %1078 = vrot.lane.b32.xlu0 %v1073, 1
    %v1079 = vpop.permute.xlu0 %1078
    %v1082 = vsel %vm243, 0.0, %v1077
    %v1083 = vsel %vm243, 0.0, %v1079
    %v1084 = vsel %vm133, 0.0, %v1082
    %v1085 = vsel %vm133, 0.0, %v1083
    %1086 = vrot.lane.b32.xlu0 %v1072, 127
    %v1087 = vpop.permute.xlu0 %1086
    %1088 = vrot.lane.b32.xlu0 %v1073, 127
    %v1089 = vpop.permute.xlu0 %1088
    %v1092 = vsel %vm254, %v1087, 0.0
    %v1093 = vsel %vm254, %v1089, 0.0
    %v1094 = vsel %vm134, 0.0, %v1092
    %v1095 = vsel %vm134, 0.0, %v1093
    %s1096 = sld [smem:[#allocation12]]
    %v1097 = vstv %s1096
    %v1098 = vmul.f32 %v1097, %v1084
    %v1099 = vmul.f32 %v1097, %v1085
    %s1100 = sld [smem:[#allocation12 + $0x1]]
    %v1101 = vstv %s1100
    %v1102 = vmul.f32 %v1101, %v1072
    %v1103 = vmul.f32 %v1101, %v1073
    %v1104 = vadd.f32 %v1098, %v1102
    %v1105 = vadd.f32 %v1099, %v1103
    %s1106 = sld [smem:[#allocation12 + $0x2]]
    %v1107 = vstv %s1106
    %v1108 = vmul.f32 %v1107, %v1094
    %v1109 = vmul.f32 %v1107, %v1095
    %v1110 = vadd.f32 %v1104, %v1108
    %v1111 = vadd.f32 %v1105, %v1109
    %s1112 = sld [smem:[#allocation12 + $0x3]]
    %v1113 = vstv %s1112
    %v1114 = vmul.f32 %v1113, %v1084
    %v1115 = vmul.f32 %v1113, %v1085
    %s1116 = sld [smem:[#allocation12 + $0x4]]
    %v1117 = vstv %s1116
    %v1118 = vmul.f32 %v1117, %v1072
    %v1119 = vmul.f32 %v1117, %v1073
    %v1120 = vadd.f32 %v1114, %v1118
    %v1121 = vadd.f32 %v1115, %v1119
    %s1122 = sld [smem:[#allocation12 + $0x5]]
    %v1123 = vstv %s1122
    %v1124 = vmul.f32 %v1123, %v1094
    %v1125 = vmul.f32 %v1123, %v1095
    %v1126 = vadd.f32 %v1120, %v1124
    %v1127 = vadd.f32 %v1121, %v1125
    %s1128 = sld [smem:[#allocation12 + $0x6]]
    %v1129 = vstv %s1128
    %v1130 = vmul.f32 %v1129, %v1084
    %v1131 = vmul.f32 %v1129, %v1085
    %s1132 = sld [smem:[#allocation12 + $0x7]]
    %v1133 = vstv %s1132
    %v1134 = vmul.f32 %v1133, %v1072
    %v1135 = vmul.f32 %v1133, %v1073
    %v1136 = vadd.f32 %v1130, %v1134
    %v1137 = vadd.f32 %v1131, %v1135
    %s1138 = sld [smem:[#allocation12 + $0x8]]
    %v1139 = vstv %s1138
    %v1140 = vmul.f32 %v1139, %v1094
    %v1141 = vmul.f32 %v1139, %v1095
    %v1142 = vadd.f32 %v1136, %v1140
    %v1143 = vadd.f32 %v1137, %v1141
    %s1144 = sld [smem:[#allocation11 + $0x6]]
    %v1145 = vstv %s1144
    %v1146 = vmul.f32 %v1145, %v206
    %v1147 = vmul.f32 %v1145, %v207
    %s1148 = sld [smem:[#allocation11 + $0x7]]
    %v1149 = vstv %s1148
    %v1150 = vmul.f32 %v1149, %v114
    %v1151 = vmul.f32 %v1149, %v115
    %v1152 = vadd.f32 %v1146, %v1150
    %v1153 = vadd.f32 %v1147, %v1151
    %s1154 = sld [smem:[#allocation11 + $0x8]]
    %v1155 = vstv %s1154
    %v1156 = vmul.f32 %v1155, %v215
    %v1157 = vmul.f32 %v1155, %v216
    %v1158 = vadd.f32 %v1152, %v1156
    %v1159 = vadd.f32 %v1153, %v1157
    %s1160 = sld [smem:[#allocation11 + $0x9]]
    %v1161 = vstv %s1160
    %v1162 = vmul.f32 %v1161, %v1027
    %v1163 = vmul.f32 %v1161, %v1028
    %v1164 = vadd.f32 %v1158, %v1162
    %v1165 = vadd.f32 %v1159, %v1163
    %s1166 = sld [smem:[#allocation11 + $0xa]]
    %v1167 = vstv %s1166
    %v1168 = vmul.f32 %v1167, %v1017
    %v1169 = vmul.f32 %v1167, %v1018
    %v1170 = vadd.f32 %v1164, %v1168
    %v1171 = vadd.f32 %v1165, %v1169
    %s1172 = sld [smem:[#allocation11 + $0xb]]
    %v1173 = vstv %s1172
    %v1174 = vmul.f32 %v1173, %v1035
    %v1175 = vmul.f32 %v1173, %v1036
    %v1176 = vadd.f32 %v1170, %v1174
    %v1177 = vadd.f32 %v1171, %v1175
    %1180 = vrot.lane.b32.xlu0 %v1176, 1
    %v1181 = vpop.permute.xlu0 %1180
    %1182 = vrot.lane.b32.xlu0 %v1177, 1
    %v1183 = vpop.permute.xlu0 %1182
    %v1186 = vsel %vm243, 0.0, %v1181
    %v1187 = vsel %vm243, 0.0, %v1183
    %v1188 = vsel %vm133, 0.0, %v1186
    %v1189 = vsel %vm133, 0.0, %v1187
    %1190 = vrot.lane.b32.xlu0 %v1176, 127
    %v1191 = vpop.permute.xlu0 %1190
    %1192 = vrot.lane.b32.xlu0 %v1177, 127
    %v1193 = vpop.permute.xlu0 %1192
    %v1196 = vsel %vm254, %v1191, 0.0
    %v1197 = vsel %vm254, %v1193, 0.0
    %v1198 = vsel %vm134, 0.0, %v1196
    %v1199 = vsel %vm134, 0.0, %v1197
    %s1200 = sld [smem:[#allocation12 + $0x9]]
    %v1201 = vstv %s1200
    %v1202 = vmul.f32 %v1201, %v1188
    %v1203 = vmul.f32 %v1201, %v1189
    %s1204 = sld [smem:[#allocation12 + $0xa]]
    %v1205 = vstv %s1204
    %v1206 = vmul.f32 %v1205, %v1176
    %v1207 = vmul.f32 %v1205, %v1177
    %v1208 = vadd.f32 %v1202, %v1206
    %v1209 = vadd.f32 %v1203, %v1207
    %s1210 = sld [smem:[#allocation12 + $0xb]]
    %v1211 = vstv %s1210
    %v1212 = vmul.f32 %v1211, %v1198
    %v1213 = vmul.f32 %v1211, %v1199
    %v1214 = vadd.f32 %v1208, %v1212
    %v1215 = vadd.f32 %v1209, %v1213
    %s1216 = sld [smem:[#allocation12 + $0xc]]
    %v1217 = vstv %s1216
    %v1218 = vmul.f32 %v1217, %v1188
    %v1219 = vmul.f32 %v1217, %v1189
    %s1220 = sld [smem:[#allocation12 + $0xd]]
    %v1221 = vstv %s1220
    %v1222 = vmul.f32 %v1221, %v1176
    %v1223 = vmul.f32 %v1221, %v1177
    %v1224 = vadd.f32 %v1218, %v1222
    %v1225 = vadd.f32 %v1219, %v1223
    %s1226 = sld [smem:[#allocation12 + $0xe]]
    %v1227 = vstv %s1226
    %v1228 = vmul.f32 %v1227, %v1198
    %v1229 = vmul.f32 %v1227, %v1199
    %v1230 = vadd.f32 %v1224, %v1228
    %v1231 = vadd.f32 %v1225, %v1229
    %s1232 = sld [smem:[#allocation12 + $0xf]]
    %v1233 = vstv %s1232
    %v1234 = vmul.f32 %v1233, %v1188
    %v1235 = vmul.f32 %v1233, %v1189
    %s1236 = sld [smem:[#allocation12 + $0x10]]
    %v1237 = vstv %s1236
    %v1238 = vmul.f32 %v1237, %v1176
    %v1239 = vmul.f32 %v1237, %v1177
    %v1240 = vadd.f32 %v1234, %v1238
    %v1241 = vadd.f32 %v1235, %v1239
    %s1242 = sld [smem:[#allocation12 + $0x11]]
    %v1243 = vstv %s1242
    %v1244 = vmul.f32 %v1243, %v1198
    %v1245 = vmul.f32 %v1243, %v1199
    %v1246 = vadd.f32 %v1240, %v1244
    %v1247 = vadd.f32 %v1241, %v1245
    %v1248 = vadd.f32 %v1110, %v1214
    %v1249 = vadd.f32 %v1111, %v1215
    %v1250 = vadd.f32 %v1126, %v1230
    %v1251 = vadd.f32 %v1127, %v1231
    %v1252 = vadd.f32 %v1142, %v1246
    %v1253 = vadd.f32 %v1143, %v1247
    %s1254 = sld [smem:[#allocation11 + $0xc]]
    %v1255 = vstv %s1254
    %v1256 = vmul.f32 %v1255, %v206
    %v1257 = vmul.f32 %v1255, %v207
    %s1258 = sld [smem:[#allocation11 + $0xd]]
    %v1259 = vstv %s1258
    %v1260 = vmul.f32 %v1259, %v114
    %v1261 = vmul.f32 %v1259, %v115
    %v1262 = vadd.f32 %v1256, %v1260
    %v1263 = vadd.f32 %v1257, %v1261
    %s1264 = sld [smem:[#allocation11 + $0xe]]
    %v1265 = vstv %s1264
    %v1266 = vmul.f32 %v1265, %v215
    %v1267 = vmul.f32 %v1265, %v216
    %v1268 = vadd.f32 %v1262, %v1266
    %v1269 = vadd.f32 %v1263, %v1267
    %s1270 = sld [smem:[#allocation11 + $0xf]]
    %v1271 = vstv %s1270
    %v1272 = vmul.f32 %v1271, %v1027
    %v1273 = vmul.f32 %v1271, %v1028
    %v1274 = vadd.f32 %v1268, %v1272
    %v1275 = vadd.f32 %v1269, %v1273
    %s1276 = sld [smem:[#allocation11 + $0x10]]
    %v1277 = vstv %s1276
    %v1278 = vmul.f32 %v1277, %v1017
    %v1279 = vmul.f32 %v1277, %v1018
    %v1280 = vadd.f32 %v1274, %v1278
    %v1281 = vadd.f32 %v1275, %v1279
    %s1282 = sld [smem:[#allocation11 + $0x11]]
    %v1283 = vstv %s1282
    %v1284 = vmul.f32 %v1283, %v1035
    %v1285 = vmul.f32 %v1283, %v1036
    %v1286 = vadd.f32 %v1280, %v1284
    %v1287 = vadd.f32 %v1281, %v1285
    %1290 = vrot.lane.b32.xlu0 %v1286, 1
    %v1291 = vpop.permute.xlu0 %1290
    %1292 = vrot.lane.b32.xlu0 %v1287, 1
    %v1293 = vpop.permute.xlu0 %1292
    %v1296 = vsel %vm243, 0.0, %v1291
    %v1297 = vsel %vm243, 0.0, %v1293
    %v1298 = vsel %vm133, 0.0, %v1296
    %v1299 = vsel %vm133, 0.0, %v1297
    %1300 = vrot.lane.b32.xlu0 %v1286, 127
    %v1301 = vpop.permute.xlu0 %1300
    %1302 = vrot.lane.b32.xlu0 %v1287, 127
    %v1303 = vpop.permute.xlu0 %1302
    %v1306 = vsel %vm254, %v1301, 0.0
    %v1307 = vsel %vm254, %v1303, 0.0
    %v1308 = vsel %vm134, 0.0, %v1306
    %v1309 = vsel %vm134, 0.0, %v1307
    %s1310 = sld [smem:[#allocation12 + $0x12]]
    %v1311 = vstv %s1310
    %v1312 = vmul.f32 %v1311, %v1298
    %v1313 = vmul.f32 %v1311, %v1299
    %s1314 = sld [smem:[#allocation12 + $0x13]]
    %v1315 = vstv %s1314
    %v1316 = vmul.f32 %v1315, %v1286
    %v1317 = vmul.f32 %v1315, %v1287
    %v1318 = vadd.f32 %v1312, %v1316
    %v1319 = vadd.f32 %v1313, %v1317
    %s1320 = sld [smem:[#allocation12 + $0x14]]
    %v1321 = vstv %s1320
    %v1322 = vmul.f32 %v1321, %v1308
    %v1323 = vmul.f32 %v1321, %v1309
    %v1324 = vadd.f32 %v1318, %v1322
    %v1325 = vadd.f32 %v1319, %v1323
    %s1326 = sld [smem:[#allocation12 + $0x15]]
    %v1327 = vstv %s1326
    %v1328 = vmul.f32 %v1327, %v1298
    %v1329 = vmul.f32 %v1327, %v1299
    %s1330 = sld [smem:[#allocation12 + $0x16]]
    %v1331 = vstv %s1330
    %v1332 = vmul.f32 %v1331, %v1286
    %v1333 = vmul.f32 %v1331, %v1287
    %v1334 = vadd.f32 %v1328, %v1332
    %v1335 = vadd.f32 %v1329, %v1333
    %s1336 = sld [smem:[#allocation12 + $0x17]]
    %v1337 = vstv %s1336
    %v1338 = vmul.f32 %v1337, %v1308
    %v1339 = vmul.f32 %v1337, %v1309
    %v1340 = vadd.f32 %v1334, %v1338
    %v1341 = vadd.f32 %v1335, %v1339
    %s1342 = sld [smem:[#allocation12 + $0x18]]
    %v1343 = vstv %s1342
    %v1344 = vmul.f32 %v1343, %v1298
    %v1345 = vmul.f32 %v1343, %v1299
    %s1346 = sld [smem:[#allocation12 + $0x19]]
    %v1347 = vstv %s1346
    %v1348 = vmul.f32 %v1347, %v1286
    %v1349 = vmul.f32 %v1347, %v1287
    %v1350 = vadd.f32 %v1344, %v1348
    %v1351 = vadd.f32 %v1345, %v1349
    %s1352 = sld [smem:[#allocation12 + $0x1a]]
    %v1353 = vstv %s1352
    %v1354 = vmul.f32 %v1353, %v1308
    %v1355 = vmul.f32 %v1353, %v1309
    %v1356 = vadd.f32 %v1350, %v1354
    %v1357 = vadd.f32 %v1351, %v1355
    %v1358 = vadd.f32 %v1248, %v1324
    %v1359 = vadd.f32 %v1249, %v1325
    %v1360 = vadd.f32 %v1250, %v1340
    %v1361 = vadd.f32 %v1251, %v1341
    %v1362 = vadd.f32 %v1252, %v1356
    %v1363 = vadd.f32 %v1253, %v1357
    %s1364 = sld [smem:[#allocation11 + $0x12]]
    %v1365 = vstv %s1364
    %v1366 = vmul.f32 %v1365, %v206
    %v1367 = vmul.f32 %v1365, %v207
    %s1368 = sld [smem:[#allocation11 + $0x13]]
    %v1369 = vstv %s1368
    %v1370 = vmul.f32 %v1369, %v114
    %v1371 = vmul.f32 %v1369, %v115
    %v1372 = vadd.f32 %v1366, %v1370
    %v1373 = vadd.f32 %v1367, %v1371
    %s1374 = sld [smem:[#allocation11 + $0x14]]
    %v1375 = vstv %s1374
    %v1376 = vmul.f32 %v1375, %v215
    %v1377 = vmul.f32 %v1375, %v216
    %v1378 = vadd.f32 %v1372, %v1376
    %v1379 = vadd.f32 %v1373, %v1377
    %s1380 = sld [smem:[#allocation11 + $0x15]]
    %v1381 = vstv %s1380
    %v1382 = vmul.f32 %v1381, %v1027
    %v1383 = vmul.f32 %v1381, %v1028
    %v1384 = vadd.f32 %v1378, %v1382
    %v1385 = vadd.f32 %v1379, %v1383
    %s1386 = sld [smem:[#allocation11 + $0x16]]
    %v1387 = vstv %s1386
    %v1388 = vmul.f32 %v1387, %v1017
    %v1389 = vmul.f32 %v1387, %v1018
    %v1390 = vadd.f32 %v1384, %v1388
    %v1391 = vadd.f32 %v1385, %v1389
    %s1392 = sld [smem:[#allocation11 + $0x17]]
    %v1393 = vstv %s1392
    %v1394 = vmul.f32 %v1393, %v1035
    %v1395 = vmul.f32 %v1393, %v1036
    %v1396 = vadd.f32 %v1390, %v1394
    %v1397 = vadd.f32 %v1391, %v1395
    %1400 = vrot.lane.b32.xlu0 %v1396, 1
    %v1401 = vpop.permute.xlu0 %1400
    %1402 = vrot.lane.b32.xlu0 %v1397, 1
    %v1403 = vpop.permute.xlu0 %1402
    %v1406 = vsel %vm243, 0.0, %v1401
    %v1407 = vsel %vm243, 0.0, %v1403
    %v1408 = vsel %vm133, 0.0, %v1406
    %v1409 = vsel %vm133, 0.0, %v1407
    %1410 = vrot.lane.b32.xlu0 %v1396, 127
    %v1411 = vpop.permute.xlu0 %1410
    %1412 = vrot.lane.b32.xlu0 %v1397, 127
    %v1413 = vpop.permute.xlu0 %1412
    %v1416 = vsel %vm254, %v1411, 0.0
    %v1417 = vsel %vm254, %v1413, 0.0
    %v1418 = vsel %vm134, 0.0, %v1416
    %v1419 = vsel %vm134, 0.0, %v1417
    %s1420 = sld [smem:[#allocation12 + $0x1b]]
    %v1421 = vstv %s1420
    %v1422 = vmul.f32 %v1421, %v1408
    %v1423 = vmul.f32 %v1421, %v1409
    %s1424 = sld [smem:[#allocation12 + $0x1c]]
    %v1425 = vstv %s1424
    %v1426 = vmul.f32 %v1425, %v1396
    %v1427 = vmul.f32 %v1425, %v1397
    %v1428 = vadd.f32 %v1422, %v1426
    %v1429 = vadd.f32 %v1423, %v1427
    %s1430 = sld [smem:[#allocation12 + $0x1d]]
    %v1431 = vstv %s1430
    %v1432 = vmul.f32 %v1431, %v1418
    %v1433 = vmul.f32 %v1431, %v1419
    %v1434 = vadd.f32 %v1428, %v1432
    %v1435 = vadd.f32 %v1429, %v1433
    %s1436 = sld [smem:[#allocation12 + $0x1e]]
    %v1437 = vstv %s1436
    %v1438 = vmul.f32 %v1437, %v1408
    %v1439 = vmul.f32 %v1437, %v1409
    %s1440 = sld [smem:[#allocation12 + $0x1f]]
    %v1441 = vstv %s1440
    %v1442 = vmul.f32 %v1441, %v1396
    %v1443 = vmul.f32 %v1441, %v1397
    %v1444 = vadd.f32 %v1438, %v1442
    %v1445 = vadd.f32 %v1439, %v1443
    %s1446 = sld [smem:[#allocation12 + $0x20]]
    %v1447 = vstv %s1446
    %v1448 = vmul.f32 %v1447, %v1418
    %v1449 = vmul.f32 %v1447, %v1419
    %v1450 = vadd.f32 %v1444, %v1448
    %v1451 = vadd.f32 %v1445, %v1449
    %s1452 = sld [smem:[#allocation12 + $0x21]]
    %v1453 = vstv %s1452
    %v1454 = vmul.f32 %v1453, %v1408
    %v1455 = vmul.f32 %v1453, %v1409
    %s1456 = sld [smem:[#allocation12 + $0x22]]
    %v1457 = vstv %s1456
    %v1458 = vmul.f32 %v1457, %v1396
    %v1459 = vmul.f32 %v1457, %v1397
    %v1460 = vadd.f32 %v1454, %v1458
    %v1461 = vadd.f32 %v1455, %v1459
    %s1462 = sld [smem:[#allocation12 + $0x23]]
    %v1463 = vstv %s1462
    %v1464 = vmul.f32 %v1463, %v1418
    %v1465 = vmul.f32 %v1463, %v1419
    %v1466 = vadd.f32 %v1460, %v1464
    %v1467 = vadd.f32 %v1461, %v1465
    %v1468 = vadd.f32 %v1358, %v1434
    %v1469 = vadd.f32 %v1359, %v1435
    %v1470 = vadd.f32 %v1360, %v1450
    %v1471 = vadd.f32 %v1361, %v1451
    %v1472 = vadd.f32 %v1362, %v1466
    %v1473 = vadd.f32 %v1363, %v1467
    %s1474 = sld [smem:[#allocation11 + $0x18]]
    %v1475 = vstv %s1474
    %v1476 = vmul.f32 %v1475, %v206
    %v1477 = vmul.f32 %v1475, %v207
    %s1478 = sld [smem:[#allocation11 + $0x19]]
    %v1479 = vstv %s1478
    %v1480 = vmul.f32 %v1479, %v114
    %v1481 = vmul.f32 %v1479, %v115
    %v1482 = vadd.f32 %v1476, %v1480
    %v1483 = vadd.f32 %v1477, %v1481
    %s1484 = sld [smem:[#allocation11 + $0x1a]]
    %v1485 = vstv %s1484
    %v1486 = vmul.f32 %v1485, %v215
    %v1487 = vmul.f32 %v1485, %v216
    %v1488 = vadd.f32 %v1482, %v1486
    %v1489 = vadd.f32 %v1483, %v1487
    %s1490 = sld [smem:[#allocation11 + $0x1b]]
    %v1491 = vstv %s1490
    %v1492 = vmul.f32 %v1491, %v1027
    %v1493 = vmul.f32 %v1491, %v1028
    %v1494 = vadd.f32 %v1488, %v1492
    %v1495 = vadd.f32 %v1489, %v1493
    %s1496 = sld [smem:[#allocation11 + $0x1c]]
    %v1497 = vstv %s1496
    %v1498 = vmul.f32 %v1497, %v1017
    %v1499 = vmul.f32 %v1497, %v1018
    %v1500 = vadd.f32 %v1494, %v1498
    %v1501 = vadd.f32 %v1495, %v1499
    %s1502 = sld [smem:[#allocation11 + $0x1d]]
    %v1503 = vstv %s1502
    %v1504 = vmul.f32 %v1503, %v1035
    %v1505 = vmul.f32 %v1503, %v1036
    %v1506 = vadd.f32 %v1500, %v1504
    %v1507 = vadd.f32 %v1501, %v1505
    %1510 = vrot.lane.b32.xlu0 %v1506, 1
    %v1511 = vpop.permute.xlu0 %1510
    %1512 = vrot.lane.b32.xlu0 %v1507, 1
    %v1513 = vpop.permute.xlu0 %1512
    %v1516 = vsel %vm243, 0.0, %v1511
    %v1517 = vsel %vm243, 0.0, %v1513
    %v1518 = vsel %vm133, 0.0, %v1516
    %v1519 = vsel %vm133, 0.0, %v1517
    %1520 = vrot.lane.b32.xlu0 %v1506, 127
    %v1521 = vpop.permute.xlu0 %1520
    %1522 = vrot.lane.b32.xlu0 %v1507, 127
    %v1523 = vpop.permute.xlu0 %1522
    %v1526 = vsel %vm254, %v1521, 0.0
    %v1527 = vsel %vm254, %v1523, 0.0
    %v1528 = vsel %vm134, 0.0, %v1526
    %v1529 = vsel %vm134, 0.0, %v1527
    %s1530 = sld [smem:[#allocation12 + $0x24]]
    %v1531 = vstv %s1530
    %v1532 = vmul.f32 %v1531, %v1518
    %v1533 = vmul.f32 %v1531, %v1519
    %s1534 = sld [smem:[#allocation12 + $0x25]]
    %v1535 = vstv %s1534
    %v1536 = vmul.f32 %v1535, %v1506
    %v1537 = vmul.f32 %v1535, %v1507
    %v1538 = vadd.f32 %v1532, %v1536
    %v1539 = vadd.f32 %v1533, %v1537
    %s1540 = sld [smem:[#allocation12 + $0x26]]
    %v1541 = vstv %s1540
    %v1542 = vmul.f32 %v1541, %v1528
    %v1543 = vmul.f32 %v1541, %v1529
    %v1544 = vadd.f32 %v1538, %v1542
    %v1545 = vadd.f32 %v1539, %v1543
    %s1546 = sld [smem:[#allocation12 + $0x27]]
    %v1547 = vstv %s1546
    %v1548 = vmul.f32 %v1547, %v1518
    %v1549 = vmul.f32 %v1547, %v1519
    %s1550 = sld [smem:[#allocation12 + $0x28]]
    %v1551 = vstv %s1550
    %v1552 = vmul.f32 %v1551, %v1506
    %v1553 = vmul.f32 %v1551, %v1507
    %v1554 = vadd.f32 %v1548, %v1552
    %v1555 = vadd.f32 %v1549, %v1553
    %s1556 = sld [smem:[#allocation12 + $0x29]]
    %v1557 = vstv %s1556
    %v1558 = vmul.f32 %v1557, %v1528
    %v1559 = vmul.f32 %v1557, %v1529
    %v1560 = vadd.f32 %v1554, %v1558
    %v1561 = vadd.f32 %v1555, %v1559
    %s1562 = sld [smem:[#allocation12 + $0x2a]]
    %v1563 = vstv %s1562
    %v1564 = vmul.f32 %v1563, %v1518
    %v1565 = vmul.f32 %v1563, %v1519
    %s1566 = sld [smem:[#allocation12 + $0x2b]]
    %v1567 = vstv %s1566
    %v1568 = vmul.f32 %v1567, %v1506
    %v1569 = vmul.f32 %v1567, %v1507
    %v1570 = vadd.f32 %v1564, %v1568
    %v1571 = vadd.f32 %v1565, %v1569
    %s1572 = sld [smem:[#allocation12 + $0x2c]]
    %v1573 = vstv %s1572
    %v1574 = vmul.f32 %v1573, %v1528
    %v1575 = vmul.f32 %v1573, %v1529
    %v1576 = vadd.f32 %v1570, %v1574
    %v1577 = vadd.f32 %v1571, %v1575
    %v1578 = vadd.f32 %v1468, %v1544
    %v1579 = vadd.f32 %v1469, %v1545
    %v1580 = vadd.f32 %v1470, %v1560
    %v1581 = vadd.f32 %v1471, %v1561
    %v1582 = vadd.f32 %v1472, %v1576
    %v1583 = vadd.f32 %v1473, %v1577
    %s1584 = sld [smem:[#allocation11 + $0x1e]]
    %v1585 = vstv %s1584
    %v1586 = vmul.f32 %v1585, %v206
    %v1587 = vmul.f32 %v1585, %v207
    %s1588 = sld [smem:[#allocation11 + $0x1f]]
    %v1589 = vstv %s1588
    %v1590 = vmul.f32 %v1589, %v114
    %v1591 = vmul.f32 %v1589, %v115
    %v1592 = vadd.f32 %v1586, %v1590
    %v1593 = vadd.f32 %v1587, %v1591
    %s1594 = sld [smem:[#allocation11 + $0x20]]
    %v1595 = vstv %s1594
    %v1596 = vmul.f32 %v1595, %v215
    %v1597 = vmul.f32 %v1595, %v216
    %v1598 = vadd.f32 %v1592, %v1596
    %v1599 = vadd.f32 %v1593, %v1597
    %s1600 = sld [smem:[#allocation11 + $0x21]]
    %v1601 = vstv %s1600
    %v1602 = vmul.f32 %v1601, %v1027
    %v1603 = vmul.f32 %v1601, %v1028
    %v1604 = vadd.f32 %v1598, %v1602
    %v1605 = vadd.f32 %v1599, %v1603
    %s1606 = sld [smem:[#allocation11 + $0x22]]
    %v1607 = vstv %s1606
    %v1608 = vmul.f32 %v1607, %v1017
    %v1609 = vmul.f32 %v1607, %v1018
    %v1610 = vadd.f32 %v1604, %v1608
    %v1611 = vadd.f32 %v1605, %v1609
    %s1612 = sld [smem:[#allocation11 + $0x23]]
    %v1613 = vstv %s1612
    %v1614 = vmul.f32 %v1613, %v1035
    %v1615 = vmul.f32 %v1613, %v1036
    %v1616 = vadd.f32 %v1610, %v1614
    %v1617 = vadd.f32 %v1611, %v1615
    %1620 = vrot.lane.b32.xlu0 %v1616, 1
    %v1621 = vpop.permute.xlu0 %1620
    %1622 = vrot.lane.b32.xlu0 %v1617, 1
    %v1623 = vpop.permute.xlu0 %1622
    %v1626 = vsel %vm243, 0.0, %v1621
    %v1627 = vsel %vm243, 0.0, %v1623
    %v1628 = vsel %vm133, 0.0, %v1626
    %v1629 = vsel %vm133, 0.0, %v1627
    %1630 = vrot.lane.b32.xlu0 %v1616, 127
    %v1631 = vpop.permute.xlu0 %1630
    %1632 = vrot.lane.b32.xlu0 %v1617, 127
    %v1633 = vpop.permute.xlu0 %1632
    %v1636 = vsel %vm254, %v1631, 0.0
    %v1637 = vsel %vm254, %v1633, 0.0
    %v1638 = vsel %vm134, 0.0, %v1636
    %v1639 = vsel %vm134, 0.0, %v1637
    %s1640 = sld [smem:[#allocation12 + $0x2d]]
    %v1641 = vstv %s1640
    %v1642 = vmul.f32 %v1641, %v1628
    %v1643 = vmul.f32 %v1641, %v1629
    %s1644 = sld [smem:[#allocation12 + $0x2e]]
    %v1645 = vstv %s1644
    %v1646 = vmul.f32 %v1645, %v1616
    %v1647 = vmul.f32 %v1645, %v1617
    %v1648 = vadd.f32 %v1642, %v1646
    %v1649 = vadd.f32 %v1643, %v1647
    %s1650 = sld [smem:[#allocation12 + $0x2f]]
    %v1651 = vstv %s1650
    %v1652 = vmul.f32 %v1651, %v1638
    %v1653 = vmul.f32 %v1651, %v1639
    %v1654 = vadd.f32 %v1648, %v1652
    %v1655 = vadd.f32 %v1649, %v1653
    %s1656 = sld [smem:[#allocation12 + $0x30]]
    %v1657 = vstv %s1656
    %v1658 = vmul.f32 %v1657, %v1628
    %v1659 = vmul.f32 %v1657, %v1629
    %s1660 = sld [smem:[#allocation12 + $0x31]]
    %v1661 = vstv %s1660
    %v1662 = vmul.f32 %v1661, %v1616
    %v1663 = vmul.f32 %v1661, %v1617
    %v1664 = vadd.f32 %v1658, %v1662
    %v1665 = vadd.f32 %v1659, %v1663
    %s1666 = sld [smem:[#allocation12 + $0x32]]
    %v1667 = vstv %s1666
    %v1668 = vmul.f32 %v1667, %v1638
    %v1669 = vmul.f32 %v1667, %v1639
    %v1670 = vadd.f32 %v1664, %v1668
    %v1671 = vadd.f32 %v1665, %v1669
    %s1672 = sld [smem:[#allocation12 + $0x33]]
    %v1673 = vstv %s1672
    %v1674 = vmul.f32 %v1673, %v1628
    %v1675 = vmul.f32 %v1673, %v1629
    %s1676 = sld [smem:[#allocation12 + $0x34]]
    %v1677 = vstv %s1676
    %v1678 = vmul.f32 %v1677, %v1616
    %v1679 = vmul.f32 %v1677, %v1617
    %v1680 = vadd.f32 %v1674, %v1678
    %v1681 = vadd.f32 %v1675, %v1679
    %s1682 = sld [smem:[#allocation12 + $0x35]]
    %v1683 = vstv %s1682
    %v1684 = vmul.f32 %v1683, %v1638
    %v1685 = vmul.f32 %v1683, %v1639
    %v1686 = vadd.f32 %v1680, %v1684
    %v1687 = vadd.f32 %v1681, %v1685
    %v1688 = vadd.f32 %v1578, %v1654
    %v1689 = vadd.f32 %v1579, %v1655
    %v1690 = vadd.f32 %v1580, %v1670
    %v1691 = vadd.f32 %v1581, %v1671
    %v1692 = vadd.f32 %v1582, %v1686
    %v1693 = vadd.f32 %v1583, %v1687
    %s1694 = sld [smem:[#allocation11 + $0x24]]
    %v1695 = vstv %s1694
    %v1696 = vmul.f32 %v1695, %v206
    %v1697 = vmul.f32 %v1695, %v207
    %s1698 = sld [smem:[#allocation11 + $0x25]]
    %v1699 = vstv %s1698
    %v1700 = vmul.f32 %v1699, %v114
    %v1701 = vmul.f32 %v1699, %v115
    %v1702 = vadd.f32 %v1696, %v1700
    %v1703 = vadd.f32 %v1697, %v1701
    %s1704 = sld [smem:[#allocation11 + $0x26]]
    %v1705 = vstv %s1704
    %v1706 = vmul.f32 %v1705, %v215
    %v1707 = vmul.f32 %v1705, %v216
    %v1708 = vadd.f32 %v1702, %v1706
    %v1709 = vadd.f32 %v1703, %v1707
    %s1710 = sld [smem:[#allocation11 + $0x27]]
    %v1711 = vstv %s1710
    %v1712 = vmul.f32 %v1711, %v1027
    %v1713 = vmul.f32 %v1711, %v1028
    %v1714 = vadd.f32 %v1708, %v1712
    %v1715 = vadd.f32 %v1709, %v1713
    %s1716 = sld [smem:[#allocation11 + $0x28]]
    %v1717 = vstv %s1716
    %v1718 = vmul.f32 %v1717, %v1017
    %v1719 = vmul.f32 %v1717, %v1018
    %v1720 = vadd.f32 %v1714, %v1718
    %v1721 = vadd.f32 %v1715, %v1719
    %s1722 = sld [smem:[#allocation11 + $0x29]]
    %v1723 = vstv %s1722
    %v1724 = vmul.f32 %v1723, %v1035
    %v1725 = vmul.f32 %v1723, %v1036
    %v1726 = vadd.f32 %v1720, %v1724
    %v1727 = vadd.f32 %v1721, %v1725
    %1730 = vrot.lane.b32.xlu0 %v1726, 1
    %v1731 = vpop.permute.xlu0 %1730
    %1732 = vrot.lane.b32.xlu0 %v1727, 1
    %v1733 = vpop.permute.xlu0 %1732
    %v1736 = vsel %vm243, 0.0, %v1731
    %v1737 = vsel %vm243, 0.0, %v1733
    %v1738 = vsel %vm133, 0.0, %v1736
    %v1739 = vsel %vm133, 0.0, %v1737
    %1740 = vrot.lane.b32.xlu0 %v1726, 127
    %v1741 = vpop.permute.xlu0 %1740
    %1742 = vrot.lane.b32.xlu0 %v1727, 127
    %v1743 = vpop.permute.xlu0 %1742
    %v1746 = vsel %vm254, %v1741, 0.0
    %v1747 = vsel %vm254, %v1743, 0.0
    %v1748 = vsel %vm134, 0.0, %v1746
    %v1749 = vsel %vm134, 0.0, %v1747
    %s1750 = sld [smem:[#allocation12 + $0x36]]
    %v1751 = vstv %s1750
    %v1752 = vmul.f32 %v1751, %v1738
    %v1753 = vmul.f32 %v1751, %v1739
    %s1754 = sld [smem:[#allocation12 + $0x37]]
    %v1755 = vstv %s1754
    %v1756 = vmul.f32 %v1755, %v1726
    %v1757 = vmul.f32 %v1755, %v1727
    %v1758 = vadd.f32 %v1752, %v1756
    %v1759 = vadd.f32 %v1753, %v1757
    %s1760 = sld [smem:[#allocation12 + $0x38]]
    %v1761 = vstv %s1760
    %v1762 = vmul.f32 %v1761, %v1748
    %v1763 = vmul.f32 %v1761, %v1749
    %v1764 = vadd.f32 %v1758, %v1762
    %v1765 = vadd.f32 %v1759, %v1763
    %s1766 = sld [smem:[#allocation12 + $0x39]]
    %v1767 = vstv %s1766
    %v1768 = vmul.f32 %v1767, %v1738
    %v1769 = vmul.f32 %v1767, %v1739
    %s1770 = sld [smem:[#allocation12 + $0x3a]]
    %v1771 = vstv %s1770
    %v1772 = vmul.f32 %v1771, %v1726
    %v1773 = vmul.f32 %v1771, %v1727
    %v1774 = vadd.f32 %v1768, %v1772
    %v1775 = vadd.f32 %v1769, %v1773
    %s1776 = sld [smem:[#allocation12 + $0x3b]]
    %v1777 = vstv %s1776
    %v1778 = vmul.f32 %v1777, %v1748
    %v1779 = vmul.f32 %v1777, %v1749
    %v1780 = vadd.f32 %v1774, %v1778
    %v1781 = vadd.f32 %v1775, %v1779
    %s1782 = sld [smem:[#allocation12 + $0x3c]]
    %v1783 = vstv %s1782
    %v1784 = vmul.f32 %v1783, %v1738
    %v1785 = vmul.f32 %v1783, %v1739
    %s1786 = sld [smem:[#allocation12 + $0x3d]]
    %v1787 = vstv %s1786
    %v1788 = vmul.f32 %v1787, %v1726
    %v1789 = vmul.f32 %v1787, %v1727
    %v1790 = vadd.f32 %v1784, %v1788
    %v1791 = vadd.f32 %v1785, %v1789
    %s1792 = sld [smem:[#allocation12 + $0x3e]]
    %v1793 = vstv %s1792
    %v1794 = vmul.f32 %v1793, %v1748
    %v1795 = vmul.f32 %v1793, %v1749
    %v1796 = vadd.f32 %v1790, %v1794
    %v1797 = vadd.f32 %v1791, %v1795
    %v1798 = vadd.f32 %v1688, %v1764
    %v1799 = vadd.f32 %v1689, %v1765
    %v1800 = vadd.f32 %v1690, %v1780
    %v1801 = vadd.f32 %v1691, %v1781
    %v1802 = vadd.f32 %v1692, %v1796
    %v1803 = vadd.f32 %v1693, %v1797
    %s1804 = sld [smem:[#allocation11 + $0x2a]]
    %v1805 = vstv %s1804
    %v1806 = vmul.f32 %v1805, %v206
    %v1807 = vmul.f32 %v1805, %v207
    %s1808 = sld [smem:[#allocation11 + $0x2b]]
    %v1809 = vstv %s1808
    %v1810 = vmul.f32 %v1809, %v114
    %v1811 = vmul.f32 %v1809, %v115
    %v1812 = vadd.f32 %v1806, %v1810
    %v1813 = vadd.f32 %v1807, %v1811
    %s1814 = sld [smem:[#allocation11 + $0x2c]]
    %v1815 = vstv %s1814
    %v1816 = vmul.f32 %v1815, %v215
    %v1817 = vmul.f32 %v1815, %v216
    %v1818 = vadd.f32 %v1812, %v1816
    %v1819 = vadd.f32 %v1813, %v1817
    %s1820 = sld [smem:[#allocation11 + $0x2d]]
    %v1821 = vstv %s1820
    %v1822 = vmul.f32 %v1821, %v1027
    %v1823 = vmul.f32 %v1821, %v1028
    %v1824 = vadd.f32 %v1818, %v1822
    %v1825 = vadd.f32 %v1819, %v1823
    %s1826 = sld [smem:[#allocation11 + $0x2e]]
    %v1827 = vstv %s1826
    %v1828 = vmul.f32 %v1827, %v1017
    %v1829 = vmul.f32 %v1827, %v1018
    %v1830 = vadd.f32 %v1824, %v1828
    %v1831 = vadd.f32 %v1825, %v1829
    %s1832 = sld [smem:[#allocation11 + $0x2f]]
    %v1833 = vstv %s1832
    %v1834 = vmul.f32 %v1833, %v1035
    %v1835 = vmul.f32 %v1833, %v1036
    %v1836 = vadd.f32 %v1830, %v1834
    %v1837 = vadd.f32 %v1831, %v1835
    %1840 = vrot.lane.b32.xlu0 %v1836, 1
    %v1841 = vpop.permute.xlu0 %1840
    %1842 = vrot.lane.b32.xlu0 %v1837, 1
    %v1843 = vpop.permute.xlu0 %1842
    %v1846 = vsel %vm243, 0.0, %v1841
    %v1847 = vsel %vm243, 0.0, %v1843
    %v1848 = vsel %vm133, 0.0, %v1846
    %v1849 = vsel %vm133, 0.0, %v1847
    %1850 = vrot.lane.b32.xlu0 %v1836, 127
    %v1851 = vpop.permute.xlu0 %1850
    %1852 = vrot.lane.b32.xlu0 %v1837, 127
    %v1853 = vpop.permute.xlu0 %1852
    %v1856 = vsel %vm254, %v1851, 0.0
    %v1857 = vsel %vm254, %v1853, 0.0
    %v1858 = vsel %vm134, 0.0, %v1856
    %v1859 = vsel %vm134, 0.0, %v1857
    %s1860 = sld [smem:[#allocation12 + $0x3f]]
    %v1861 = vstv %s1860
    %v1862 = vmul.f32 %v1861, %v1848
    %v1863 = vmul.f32 %v1861, %v1849
    %s1864 = sld [smem:[#allocation12 + $0x40]]
    %v1865 = vstv %s1864
    %v1866 = vmul.f32 %v1865, %v1836
    %v1867 = vmul.f32 %v1865, %v1837
    %v1868 = vadd.f32 %v1862, %v1866
    %v1869 = vadd.f32 %v1863, %v1867
    %s1870 = sld [smem:[#allocation12 + $0x41]]
    %v1871 = vstv %s1870
    %v1872 = vmul.f32 %v1871, %v1858
    %v1873 = vmul.f32 %v1871, %v1859
    %v1874 = vadd.f32 %v1868, %v1872
    %v1875 = vadd.f32 %v1869, %v1873
    %s1876 = sld [smem:[#allocation12 + $0x42]]
    %v1877 = vstv %s1876
    %v1878 = vmul.f32 %v1877, %v1848
    %v1879 = vmul.f32 %v1877, %v1849
    %s1880 = sld [smem:[#allocation12 + $0x43]]
    %v1881 = vstv %s1880
    %v1882 = vmul.f32 %v1881, %v1836
    %v1883 = vmul.f32 %v1881, %v1837
    %v1884 = vadd.f32 %v1878, %v1882
    %v1885 = vadd.f32 %v1879, %v1883
    %s1886 = sld [smem:[#allocation12 + $0x44]]
    %v1887 = vstv %s1886
    %v1888 = vmul.f32 %v1887, %v1858
    %v1889 = vmul.f32 %v1887, %v1859
    %v1890 = vadd.f32 %v1884, %v1888
    %v1891 = vadd.f32 %v1885, %v1889
    %s1892 = sld [smem:[#allocation12 + $0x45]]
    %v1893 = vstv %s1892
    %v1894 = vmul.f32 %v1893, %v1848
    %v1895 = vmul.f32 %v1893, %v1849
    %s1896 = sld [smem:[#allocation12 + $0x46]]
    %v1897 = vstv %s1896
    %v1898 = vmul.f32 %v1897, %v1836
    %v1899 = vmul.f32 %v1897, %v1837
    %v1900 = vadd.f32 %v1894, %v1898
    %v1901 = vadd.f32 %v1895, %v1899
    %s1902 = sld [smem:[#allocation12 + $0x47]]
    %v1903 = vstv %s1902
    %v1904 = vmul.f32 %v1903, %v1858
    %v1905 = vmul.f32 %v1903, %v1859
    %v1906 = vadd.f32 %v1900, %v1904
    %v1907 = vadd.f32 %v1901, %v1905
    %v1908 = vadd.f32 %v1798, %v1874
    %v1909 = vadd.f32 %v1799, %v1875
    %v1910 = vadd.f32 %v1800, %v1890
    %v1911 = vadd.f32 %v1801, %v1891
    %v1912 = vadd.f32 %v1802, %v1906
    %v1913 = vadd.f32 %v1803, %v1907
    %1916 = vrot.lane.b32.xlu0 %v1908, 16
    %v1917 = vpop.permute.xlu0 %1916
    %1918 = vrot.lane.b32.xlu0 %v1909, 16
    %v1919 = vpop.permute.xlu0 %1918
    %v1922 = vsel %vm959, 0.0, %v1917
    %v1923 = vsel %vm959, 0.0, %v1919
    %v1924 = vrot.slane %v1908, 7
    %v1925 = vrot.slane %v1909, 7
    %v1926 = vsel %vm962, %v1924, %v1925
    %v1928 = vsel %vm962, 0.0, %v1924
    %1930 = vrot.lane.b32.xlu0 %v1928, 16
    %v1931 = vpop.permute.xlu0 %1930
    %1932 = vrot.lane.b32.xlu0 %v1926, 16
    %v1933 = vpop.permute.xlu0 %1932
    %v1936 = vsel %vm959, %v1931, 0.0
    %v1937 = vsel %vm959, %v1933, 0.0
    %v1938 = vsel %vm162, 0.0, %v1936
    %v1939 = vsel %vm163, 0.0, %v1937
    %v1940 = vadd.f32 %v1922, %v1938
    %v1941 = vadd.f32 %v1923, %v1939
    %v1942 = vadd.f32 %v1910, %v1940
    %v1943 = vadd.f32 %v1911, %v1941
    %1946 = vrot.lane.b32.xlu0 %v1912, 112
    %v1947 = vpop.permute.xlu0 %1946
    %1948 = vrot.lane.b32.xlu0 %v1913, 112
    %v1949 = vpop.permute.xlu0 %1948
    %v1952 = vsel %vm991, %v1947, 0.0
    %v1953 = vsel %vm991, %v1949, 0.0
    %v1954 = vrot.slane %v1912, 1
    %v1955 = vrot.slane %v1913, 1
    %v1956 = vsel %vm994, %v1954, %v1955
    %v1958 = vsel %vm994, %v1955, 0.0
    %1960 = vrot.lane.b32.xlu0 %v1956, 112
    %v1961 = vpop.permute.xlu0 %1960
    %1962 = vrot.lane.b32.xlu0 %v1958, 112
    %v1963 = vpop.permute.xlu0 %1962
    %v1966 = vsel %vm991, 0.0, %v1961
    %v1967 = vsel %vm991, 0.0, %v1963
    %v1968 = vsel %vm167, 0.0, %v1966
    %v1969 = vsel %vm168, 0.0, %v1967
    %v1970 = vadd.f32 %v1952, %v1968
    %v1971 = vadd.f32 %v1953, %v1969
    %v1972 = vadd.f32 %v1942, %v1970
    %v1973 = vadd.f32 %v1943, %v1971
    %v1974 = vadd.f32 %v1972, %v1038
    %v1975 = vadd.f32 %v1973, %v1039
    %v1976 = vmax.f32 %v1974, 0.0
    %v1977 = vmax.f32 %v1975, 0.0
    %s1978 = sld [smem:[#allocation14]]
    %v1979 = vstv %s1978
    %v1980 = vmul.f32 %v1979, %v114
    %v1981 = vmul.f32 %v1979, %v115
    %s1982 = sld [smem:[#allocation14 + $0x1]]
    %v1983 = vstv %s1982
    %v1984 = vmul.f32 %v1983, %v1017
    %v1985 = vmul.f32 %v1983, %v1018
    %v1986 = vadd.f32 %v1980, %v1984
    %v1987 = vadd.f32 %v1981, %v1985
    %s1988 = sld [smem:[#allocation14 + $0x2]]
    %v1989 = vstv %s1988
    %v1990 = vmul.f32 %v1989, %v1976
    %v1991 = vmul.f32 %v1989, %v1977
    %v1992 = vadd.f32 %v1986, %v1990
    %v1993 = vadd.f32 %v1987, %v1991
    %s1994 = sld [smem:[#allocation14 + $0x3]]
    %v1995 = vstv %s1994
    %v1996 = vadd.f32 %v1992, %v1995
    %v1997 = vadd.f32 %v1993, %v1995
    %1998 = vst [vmem:[#allocation15] sm:$0xff] %v1996
    %1999 = vst [vmem:[#allocation15 + $0x8] sm:$0xff] %v1997
    // Predicated region
    $region58: #{tpu_custom_call.1} parent=1 // pred_check
      _
    $region59: #{tpu_custom_call.1} parent=1 // pred_check_branch
      %2001 = sbr.rel (0) target = $region61
    $region60: #{tpu_custom_call.1} parent=1 // pred_region
      %s2003 = ssub.s32 256, 256
      %2004 = vsyncadd [#allocation4], %s2003
      %s2005 = sshll.u32 [#allocation15], 4
      %s2006 = int_to_ptr.vmem [resolvable:$true] %s2005
      %2011 = dma.vmem_to_hbm [thread:$0]  %s2006, 256, %s7, [#allocation4], 128, 128, 8
    $region61: #{tpu_custom_call.1} parent=1 // pred_fallthru
      _
    // Predicated region
    $region62: #{tpu_custom_call.1} parent=1 // pred_check
      _
    $region63: #{tpu_custom_call.1} parent=1 // pred_check_branch
      %2013 = sbr.rel (0) target = $region65
    $region64: #{tpu_custom_call.1} parent=1 // pred_region
      %2014 = dma.done [#allocation4], 256
    $region65: #{tpu_custom_call.1} parent=1 // pred_fallthru
      _
    %2015 = vsyncpa [#allocation3], 1
    %2016 = vsyncpa [#allocation7], 1
    %2017 = vsyncpa [#allocation4], 1
    %2018 = vsyncpa [#allocation5], 1
    %2019 = vsyncpa [#allocation10], 1
    %2020 = vsyncpa [#allocation13], 1

</llo_original>
